<compile_context>
chip_gen: v7x
topology: tpu7x:2x2x1
jax: 0.10.0
libtpu: 0.0.40
codegen_flags: <defaults>
</compile_context>

<pallas_src>
import functools
import math

import jax
import jax.numpy as jnp
from jax import lax
from jax.experimental import pallas as pl
from jax.experimental.pallas import tpu as pltpu


# ---------------------------------------------------------------------------
# Pallas kernel: one (batch element, query tile) of the ReverseTransformerBlock.
# ---------------------------------------------------------------------------
def _block_kernel(n_heads,
                  x_ref, kv_ref, m_ref,
                  wq_ref, bq_ref, wkv_ref, bkv_ref,
                  wo_ref, bo_ref, g_ref, b_ref,
                  y_ref, attn_ref):
    x = x_ref[0]                      # (tq, D)  f32  (query + residual path)
    kv = kv_ref[0]                    # (Sk, D)  bf16 (keys / values)
    m = m_ref[0]                      # (1, Sk)  f32  key mask
    tq, D = x.shape
    Sk = kv.shape[0]
    dh = D // n_heads
    scale = 1.0 / math.sqrt(dh)

    dn_ab = (((1,), (0,)), ((), ()))    # A @ B      (contract dim1 x dim0)
    dn_abt = (((1,), (1,)), ((), ()))   # A @ B^T    (contract dim1 x dim1; (out,in) weights)

    xb = x.astype(jnp.bfloat16)

    # Fused K/V projection: one (2D, D) x (Sk, D)^T matmul (M = 2D = 256 weight rows).
    # The transposed result is head-major along sublanes, so per-head access below is a
    # free leading-axis index (no 32-lane extracts).
    kvT = lax.dot_general(wkv_ref[...], kv, dn_abt,
                          preferred_element_type=jnp.float32)            # (2D, Sk) f32
    kvT = kvT + bkv_ref[...]                                             # + [bk ; bv]
    kv_hm = kvT.reshape(2, n_heads, dh, Sk).astype(jnp.bfloat16)         # [k|v, head, dh, Sk]

    # Additive key-mask bias, built and broadcast ONCE (not per head; JAX does not CSE
    # broadcast_in_dim).  -1e30 underflows to exactly 0 through exp whenever >=1 key is valid.
    bias = jnp.where(m == 0.0, jnp.float32(-1e30), jnp.float32(0.0))     # (1, Sk)
    bias_b = jnp.broadcast_to(bias, (tq, Sk))                            # (tq, Sk)

    # Per-head loop (H is small; static unroll keeps LLO scheduling visible).
    # TODO(synk): if n_heads / tile sizes grow, move heads onto a grid axis with a pl.when
    #             init/finalize accumulator or use lax.fori_loop(..., unroll=True).
    o_acc = jnp.zeros((tq, D), jnp.float32)
    for h in range(n_heads):
        # Head-h Q projection: full-D (128) contraction, head-major weight (free ref index).
        qh = lax.dot_general(xb, wq_ref[h], dn_abt,
                             preferred_element_type=jnp.float32)          # (tq, dh)
        qh = ((qh + bq_ref[h]) * scale).astype(jnp.bfloat16)

        khT = kv_hm[0, h]                                                 # (dh, Sk)
        vhT = kv_hm[1, h]                                                 # (dh, Sk)

        s = lax.dot_general(qh, khT, dn_ab,
                            preferred_element_type=jnp.float32)           # (tq, Sk)
        s = s + bias_b
        s = s - jnp.max(s, axis=-1, keepdims=True)
        e = jnp.exp(s)
        # approx reciprocal on the EUP: rows sum to 1 +- ~1e-3 (fine for returned weights).
        p = e * pl.reciprocal(jnp.sum(e, axis=-1, keepdims=True), approx=True)
        # TODO(synk): attention dropout (p=0.2) is identity in eval mode.
        attn_ref[0, h] = p

        ho = lax.dot_general(p.astype(jnp.bfloat16), vhT, dn_abt,
                             preferred_element_type=jnp.float32)          # (tq, dh)
        # Output projection fused into the head loop (no lane concat of head outputs).
        o_acc = o_acc + lax.dot_general(ho.astype(jnp.bfloat16), wo_ref[h], dn_ab,
                                        preferred_element_type=jnp.float32)   # (tq, D)

    # Output-projection bias, residual with the f32 query, LayerNorm — all in f32.
    r = o_acc + bo_ref[...] + x
    mu = jnp.mean(r, axis=-1, keepdims=True)
    var = jnp.mean((r - mu) ** 2, axis=-1, keepdims=True)
    y_ref[0] = (r - mu) * lax.rsqrt(var + 1e-5) * g_ref[...] + b_ref[...]


# ---------------------------------------------------------------------------
# Wrapper
# ---------------------------------------------------------------------------
def _vmem_limit_bytes():
    """Generation-aware VMEM limit: 3/4 of physical, capped at 96 MiB (48 MiB on v7x)."""
    try:
        cap = int(getattr(pltpu.get_tpu_info(), "vmem_capacity_bytes", 0))
    except Exception:
        cap = 0
    if cap <= 0:
        return 64 * 1024 * 1024        # conservative known-good fallback
    return min((cap * 3) // 4, 96 * 1024 * 1024)


def _prep_params(params, n_heads):
    """Cast / reorganize weights once in the wrapper: bf16 MXU operands, head-major Wq/Wo,
    fused Wk;Wv, f32 biases shaped for the transposed / head-major kernel layouts."""
    D = params["wq"].shape[0]
    dh = D // n_heads
    bf, f32 = jnp.bfloat16, jnp.float32
    wq_hm = params["wq"].reshape(n_heads, dh, D).astype(bf)               # rows grouped by head
    bq_hm = params["bq"].reshape(n_heads, 1, dh).astype(f32)
    wkv = jnp.concatenate([params["wk"], params["wv"]], axis=0).astype(bf)        # (2D, D)
    bkv = jnp.concatenate([params["bk"].reshape(-1),
                           params["bv"].reshape(-1)]).reshape(2 * D, 1).astype(f32)
    wo_hm = params["wo"].T.reshape(n_heads, dh, D).astype(bf)             # Wo[:, h*dh:(h+1)*dh]^T
    bo = params["bo"].reshape(1, D).astype(f32)
    gamma = params["gamma"].reshape(1, D).astype(f32)
    beta = params["beta"].reshape(1, D).astype(f32)
    return wq_hm, bq_hm, wkv, bkv, wo_hm, bo, gamma, beta


def reverse_transformer_block(contexts, _input, mask, params, n_heads):
    """contexts: (B, Sq, D) f32 queries; _input: (B, Sk, D) keys/values; mask: (B, Sk)."""
    B, Sq, D = contexts.shape
    Sk = _input.shape[1]
    assert D % n_heads == 0
    dh = D // n_heads

    tq = Sq if Sq <= 256 else 256          # query tile (demo Sq=8 -> a single tile)
    nq = pl.cdiv(Sq, tq)

    mask3 = mask.reshape(B, 1, Sk).astype(jnp.float32)
    wq_hm, bq_hm, wkv, bkv, wo_hm, bo, gamma, beta = _prep_params(params, n_heads)
    args = (contexts, _input.astype(jnp.bfloat16), mask3,
            wq_hm, bq_hm, wkv, bkv, wo_hm, bo, gamma, beta)

    kern = functools.partial(_block_kernel, n_heads)
    out_shape = (jax.ShapeDtypeStruct((B, Sq, D), jnp.float32),
                 jax.ShapeDtypeStruct((B, n_heads, Sq, Sk), jnp.float32))
    out_specs = (pl.BlockSpec((1, tq, D), lambda b, qi: (b, qi, 0)),
                 pl.BlockSpec((1, n_heads, tq, Sk), lambda b, qi: (b, 0, qi, 0)))
    cparams = pltpu.CompilerParams(
        dimension_semantics=("parallel", "parallel"),   # batch / q-tile independent
        vmem_limit_bytes=_vmem_limit_bytes())

    def build(single_buffer_consts):
        def const_spec(shape):
            n = len(shape)
            idx = lambda b, qi, _n=n: (0,) * _n
            if single_buffer_consts:
                # constants never change across the grid -> single buffer halves their VMEM
                return pl.BlockSpec(shape, idx, pipeline_mode=pl.Buffered(1))
            return pl.BlockSpec(shape, idx)

        in_specs = [
            pl.BlockSpec((1, tq, D), lambda b, qi: (b, qi, 0)),     # contexts (f32, residual)
            pl.BlockSpec((1, Sk, D), lambda b, qi: (b, 0, 0)),      # _input (bf16, K/V source)
            pl.BlockSpec((1, 1, Sk), lambda b, qi: (b, 0, 0)),      # key mask
            const_spec((n_heads, dh, D)), const_spec((n_heads, 1, dh)),   # Wq, bq (head-major)
            const_spec((2 * D, D)), const_spec((2 * D, 1)),               # fused [Wk;Wv], [bk;bv]
            const_spec((n_heads, dh, D)), const_spec((1, D)),             # Wo (head-major), bo
            const_spec((1, D)), const_spec((1, D)),                       # LayerNorm gamma, beta
        ]
        return pl.pallas_call(kern, out_shape=out_shape, grid=(B, nq),
                              in_specs=in_specs, out_specs=out_specs,
                              compiler_params=cparams)

    try:
        return build(True)(*args)          # single-buffered constant operands
    except Exception:
        # TODO(synk): pl.Buffered(1) unsupported on this JAX version -> constants double-buffer.
        return build(False)(*args)


# ---------------------------------------------------------------------------
# Pure-JAX reference (f32) for correctness checking.
# ---------------------------------------------------------------------------
def reference_block(contexts, _input, mask, params, n_heads):
    B, Sq, D = contexts.shape
    Sk = _input.shape[1]
    dh = D // n_heads
    q = contexts @ params["wq"].T + params["bq"]
    k = _input @ params["wk"].T + params["bk"]
    v = _input @ params["wv"].T + params["bv"]
    q = q.reshape(B, Sq, n_heads, dh).transpose(0, 2, 1, 3) / math.sqrt(dh)
    k = k.reshape(B, Sk, n_heads, dh).transpose(0, 2, 1, 3)
    v = v.reshape(B, Sk, n_heads, dh).transpose(0, 2, 1, 3)
    s = jnp.einsum("bhqd,bhkd->bhqk", q, k)
    s = jnp.where(mask[:, None, None, :] == 0.0, -jnp.inf, s)
    p = jax.nn.softmax(s, axis=-1)
    out = jnp.einsum("bhqk,bhkd->bhqd", p, v).transpose(0, 2, 1, 3).reshape(B, Sq, D)
    o = out @ params["wo"].T + params["bo"]
    r = o + contexts
    mu = r.mean(-1, keepdims=True)
    var = ((r - mu) ** 2).mean(-1, keepdims=True)
    y = (r - mu) / jnp.sqrt(var + 1e-5) * params["gamma"] + params["beta"]
    return y, p


def init_params(key, D):
    # Torch init would be eye (spectral_norm of eye is 1) with zero bias; use small random
    # weights instead as a stand-in for trained weights so the matmul paths are exercised.
    ks = jax.random.split(key, 4)
    s = 1.0 / math.sqrt(D)
    zeros = jnp.zeros((1, D), jnp.float32)
    return dict(
        wq=jax.random.normal(ks[0], (D, D), jnp.float32) * s, bq=zeros,
        wk=jax.random.normal(ks[1], (D, D), jnp.float32) * s, bk=zeros,
        wv=jax.random.normal(ks[2], (D, D), jnp.float32) * s, bv=zeros,
        wo=jax.random.normal(ks[3], (D, D), jnp.float32) * s, bo=zeros,
        gamma=jnp.ones((1, D), jnp.float32), beta=zeros)


# ---------------------------------------------------------------------------
if __name__ == "__main__":
    B, Sq, Sk, D, H = 2, 8, 16, 128, 4

    key = jax.random.PRNGKey(0)
    kx, kk, kw = jax.random.split(key, 3)
    contexts = jax.random.normal(kx, (B, Sq, D), dtype=jnp.float32)
    inputs = jax.random.normal(kk, (B, Sk, D), dtype=jnp.float32)

    # mask over keys: first example fully valid, second has the last 5 keys padded out
    lengths = jnp.array([Sk, Sk - 5])
    mask = (jnp.arange(Sk)[None, :] < lengths[:, None]).astype(jnp.float32)   # (B, Sk)

    params = init_params(kw, D)

    y, attn = reverse_transformer_block(contexts, inputs, mask, params, H)
    jax.block_until_ready((y, attn))

    with jax.default_matmul_precision("highest"):
        y_ref, attn_ref = reference_block(contexts, inputs, mask, params, H)

    assert y.shape == (B, Sq, D) and attn.shape == (B, H, Sq, Sk)
    err_y = float(jnp.max(jnp.abs(y - y_ref)))
    err_a = float(jnp.max(jnp.abs(attn - attn_ref)))
    assert err_y < 5e-2, f"output mismatch: {err_y}"
    assert err_a < 5e-2, f"attention-weight mismatch: {err_a}"
    print("KERNEL_OK")
</pallas_src>

<mosaic_0001>
module attributes {stable_mosaic.version = 11 : i64} {
  func.func @_block_kernel(%arg0: i32, %arg1: i32, %arg2: memref<1x8x128xf32, #tpu.memory_space<vmem>>, %arg3: memref<1x16x128xbf16, #tpu.memory_space<vmem>>, %arg4: memref<1x1x16xf32, #tpu.memory_space<vmem>>, %arg5: memref<4x32x128xbf16, #tpu.memory_space<vmem>>, %arg6: memref<4x1x32xf32, #tpu.memory_space<vmem>>, %arg7: memref<256x128xbf16, #tpu.memory_space<vmem>>, %arg8: memref<256x1xf32, #tpu.memory_space<vmem>>, %arg9: memref<4x32x128xbf16, #tpu.memory_space<vmem>>, %arg10: memref<1x128xf32, #tpu.memory_space<vmem>>, %arg11: memref<1x128xf32, #tpu.memory_space<vmem>>, %arg12: memref<1x128xf32, #tpu.memory_space<vmem>>, %arg13: memref<1x8x128xf32, #tpu.memory_space<vmem>>, %arg14: memref<1x4x8x16xf32, #tpu.memory_space<vmem>>) attributes {dimension_semantics = [#tpu.dimension_semantics<parallel>, #tpu.dimension_semantics<parallel>], iteration_bounds = array<i64: 2, 1>, scalar_prefetch = 0 : i64, scratch_operands = 0 : i64, tpu.core_type = #tpu.core_type<tc>, window_params = [{transform_indices = @transform_0, window_bounds = array<i64: 1, 8, 128>}, {transform_indices = @transform_1, window_bounds = array<i64: 1, 16, 128>}, {transform_indices = @transform_2, window_bounds = array<i64: 1, 1, 16>}, {pipeline_mode = #tpu.pipeline_mode<synchronous>, transform_indices = @transform_3, window_bounds = array<i64: 4, 32, 128>}, {pipeline_mode = #tpu.pipeline_mode<synchronous>, transform_indices = @transform_4, window_bounds = array<i64: 4, 1, 32>}, {pipeline_mode = #tpu.pipeline_mode<synchronous>, transform_indices = @transform_5, window_bounds = array<i64: 256, 128>}, {pipeline_mode = #tpu.pipeline_mode<synchronous>, transform_indices = @transform_6, window_bounds = array<i64: 256, 1>}, {pipeline_mode = #tpu.pipeline_mode<synchronous>, transform_indices = @transform_7, window_bounds = array<i64: 4, 32, 128>}, {pipeline_mode = #tpu.pipeline_mode<synchronous>, transform_indices = @transform_8, window_bounds = array<i64: 1, 128>}, {pipeline_mode = #tpu.pipeline_mode<synchronous>, transform_indices = @transform_9, window_bounds = array<i64: 1, 128>}, {pipeline_mode = #tpu.pipeline_mode<synchronous>, transform_indices = @transform_10, window_bounds = array<i64: 1, 128>}, {transform_indices = @transform_11, window_bounds = array<i64: 1, 8, 128>}, {transform_indices = @transform_12, window_bounds = array<i64: 1, 4, 8, 16>}]} {
    %c0 = arith.constant 0 : index
    %c0_0 = arith.constant 0 : index
    %c0_1 = arith.constant 0 : index
    %0 = vector.load %arg2[%c0, %c0_0, %c0_1] : memref<1x8x128xf32, #tpu.memory_space<vmem>>, vector<1x8x128xf32>
    %1 = vector.shape_cast %0 : vector<1x8x128xf32> to vector<8x128xf32>
    %c0_2 = arith.constant 0 : index
    %c0_3 = arith.constant 0 : index
    %c0_4 = arith.constant 0 : index
    %2 = vector.load %arg3[%c0_2, %c0_3, %c0_4] : memref<1x16x128xbf16, #tpu.memory_space<vmem>>, vector<1x16x128xbf16>
    %3 = vector.shape_cast %2 : vector<1x16x128xbf16> to vector<16x128xbf16>
    %c0_5 = arith.constant 0 : index
    %c0_6 = arith.constant 0 : index
    %c0_7 = arith.constant 0 : index
    %4 = vector.load %arg4[%c0_5, %c0_6, %c0_7] : memref<1x1x16xf32, #tpu.memory_space<vmem>>, vector<1x1x16xf32>
    %5 = vector.shape_cast %4 : vector<1x1x16xf32> to vector<1x16xf32>
    %6 = arith.truncf %1 : vector<8x128xf32> to vector<8x128xbf16>
    %c0_8 = arith.constant 0 : index
    %c0_9 = arith.constant 0 : index
    %7 = vector.load %arg7[%c0_8, %c0_9] : memref<256x128xbf16, #tpu.memory_space<vmem>>, vector<256x128xbf16>
    %cst = arith.constant dense<0.000000e+00> : vector<256x16xf32>
    %8 = tpu.matmul %7, %3, %cst {dimension_numbers = #tpu.dot_dimension_numbers<[1], [1], [0], [0], [0, 0, 1, 0], [], []>} : vector<256x128xbf16>, vector<16x128xbf16>, vector<256x16xf32> -> vector<256x16xf32>
    %c0_10 = arith.constant 0 : index
    %c0_11 = arith.constant 0 : index
    %9 = vector.load %arg8[%c0_10, %c0_11] : memref<256x1xf32, #tpu.memory_space<vmem>>, vector<256x1xf32>
    %10 = vector.broadcast %9 : vector<256x1xf32> to vector<256x16xf32>
    %11 = arith.addf %8, %10 : vector<256x16xf32>
    %12 = vector.shape_cast %11 : vector<256x16xf32> to vector<2x4x32x16xf32>
    %13 = arith.truncf %12 : vector<2x4x32x16xf32> to vector<2x4x32x16xbf16>
    %cst_12 = arith.constant 0.000000e+00 : f32
    %14 = vector.broadcast %cst_12 : f32 to vector<1x16xf32>
    %15 = arith.cmpf oeq, %5, %14 : vector<1x16xf32>
    %cst_13 = arith.constant -1.000000e+30 : f32
    %cst_14 = arith.constant 0.000000e+00 : f32
    %16 = vector.broadcast %cst_13 : f32 to vector<1x16xf32>
    %17 = vector.broadcast %cst_14 : f32 to vector<1x16xf32>
    %18 = arith.select %15, %16, %17 : vector<1x16xi1>, vector<1x16xf32>
    %19 = vector.shape_cast %18 : vector<1x16xf32> to vector<1x16xf32>
    %20 = vector.broadcast %19 : vector<1x16xf32> to vector<8x16xf32>
    %cst_15 = arith.constant 0.000000e+00 : f32
    %21 = vector.broadcast %cst_15 : f32 to vector<8x128xf32>
    %c0_16 = arith.constant 0 : index
    %c0_17 = arith.constant 0 : index
    %c0_18 = arith.constant 0 : index
    %22 = vector.load %arg5[%c0_16, %c0_17, %c0_18] : memref<4x32x128xbf16, #tpu.memory_space<vmem>>, vector<1x32x128xbf16>
    %23 = vector.shape_cast %22 : vector<1x32x128xbf16> to vector<32x128xbf16>
    %cst_19 = arith.constant dense<0.000000e+00> : vector<8x32xf32>
    %24 = tpu.matmul %6, %23, %cst_19 {dimension_numbers = #tpu.dot_dimension_numbers<[1], [1], [0], [0], [0, 0, 1, 0], [], []>} : vector<8x128xbf16>, vector<32x128xbf16>, vector<8x32xf32> -> vector<8x32xf32>
    %c0_20 = arith.constant 0 : index
    %c0_21 = arith.constant 0 : index
    %c0_22 = arith.constant 0 : index
    %25 = vector.load %arg6[%c0_20, %c0_21, %c0_22] : memref<4x1x32xf32, #tpu.memory_space<vmem>>, vector<1x1x32xf32>
    %26 = vector.shape_cast %25 : vector<1x1x32xf32> to vector<1x32xf32>
    %27 = vector.broadcast %26 : vector<1x32xf32> to vector<8x32xf32>
    %28 = arith.addf %24, %27 : vector<8x32xf32>
    %cst_23 = arith.constant 0.176776692 : f32
    %29 = vector.broadcast %cst_23 : f32 to vector<8x32xf32>
    %30 = arith.mulf %28, %29 : vector<8x32xf32>
    %31 = arith.truncf %30 : vector<8x32xf32> to vector<8x32xbf16>
    %32 = vector.extract_strided_slice %13 {offsets = [0, 0, 0, 0], sizes = [1, 1, 32, 16], strides = [1, 1, 1, 1]} : vector<2x4x32x16xbf16> to vector<1x1x32x16xbf16>
    %33 = vector.shape_cast %32 : vector<1x1x32x16xbf16> to vector<32x16xbf16>
    %34 = vector.extract_strided_slice %13 {offsets = [1, 0, 0, 0], sizes = [1, 1, 32, 16], strides = [1, 1, 1, 1]} : vector<2x4x32x16xbf16> to vector<1x1x32x16xbf16>
    %35 = vector.shape_cast %34 : vector<1x1x32x16xbf16> to vector<32x16xbf16>
    %cst_24 = arith.constant dense<0.000000e+00> : vector<8x16xf32>
    %36 = tpu.matmul %31, %33, %cst_24 {dimension_numbers = #tpu.dot_dimension_numbers<[1], [0], [0], [1], [0, 0, 1, 1], [], []>} : vector<8x32xbf16>, vector<32x16xbf16>, vector<8x16xf32> -> vector<8x16xf32>
    %37 = arith.addf %36, %20 : vector<8x16xf32>
    %cst_25 = arith.constant dense<0xFF800000> : vector<8xf32>
    %38 = vector.multi_reduction <maximumf>, %37, %cst_25 [1] : vector<8x16xf32> to vector<8xf32>
    %39 = vector.shape_cast %38 : vector<8xf32> to vector<8x1xf32>
    %40 = vector.broadcast %39 : vector<8x1xf32> to vector<8x16xf32>
    %41 = arith.subf %37, %40 : vector<8x16xf32>
    %42 = math.exp %41 : vector<8x16xf32>
    %cst_26 = arith.constant dense<0.000000e+00> : vector<8xf32>
    %43 = vector.multi_reduction <add>, %42, %cst_26 [1] : vector<8x16xf32> to vector<8xf32>
    %44 = vector.shape_cast %43 : vector<8xf32> to vector<8x1xf32>
    %45 = tpu.reciprocal %44 {approx = true} : vector<8x1xf32> -> vector<8x1xf32>
    %46 = vector.broadcast %45 : vector<8x1xf32> to vector<8x16xf32>
    %47 = arith.mulf %42, %46 : vector<8x16xf32>
    %c0_27 = arith.constant 0 : index
    %c0_28 = arith.constant 0 : index
    %c0_29 = arith.constant 0 : index
    %c0_30 = arith.constant 0 : index
    %48 = vector.load %arg14[%c0_27, %c0_28, %c0_29, %c0_30] : memref<1x4x8x16xf32, #tpu.memory_space<vmem>>, vector<1x1x8x16xf32>
    %49 = vector.shape_cast %48 : vector<1x1x8x16xf32> to vector<8x16xf32>
    %50 = vector.shape_cast %47 : vector<8x16xf32> to vector<1x1x8x16xf32>
    tpu.vector_store %arg14[%c0_27, %c0_28, %c0_29, %c0_30], %50 {strides = array<i32>} : memref<1x4x8x16xf32, #tpu.memory_space<vmem>>, vector<1x1x8x16xf32>,
    %51 = arith.truncf %47 : vector<8x16xf32> to vector<8x16xbf16>
    %cst_31 = arith.constant dense<0.000000e+00> : vector<8x32xf32>
    %52 = tpu.matmul %51, %35, %cst_31 {dimension_numbers = #tpu.dot_dimension_numbers<[1], [1], [0], [0], [0, 0, 1, 0], [], []>} : vector<8x16xbf16>, vector<32x16xbf16>, vector<8x32xf32> -> vector<8x32xf32>
    %53 = arith.truncf %52 : vector<8x32xf32> to vector<8x32xbf16>
    %c0_32 = arith.constant 0 : index
    %c0_33 = arith.constant 0 : index
    %c0_34 = arith.constant 0 : index
    %54 = vector.load %arg9[%c0_32, %c0_33, %c0_34] : memref<4x32x128xbf16, #tpu.memory_space<vmem>>, vector<1x32x128xbf16>
    %55 = vector.shape_cast %54 : vector<1x32x128xbf16> to vector<32x128xbf16>
    %cst_35 = arith.constant dense<0.000000e+00> : vector<8x128xf32>
    %56 = tpu.matmul %53, %55, %cst_35 {dimension_numbers = #tpu.dot_dimension_numbers<[1], [0], [0], [1], [0, 0, 1, 1], [], []>} : vector<8x32xbf16>, vector<32x128xbf16>, vector<8x128xf32> -> vector<8x128xf32>
    %57 = arith.addf %21, %56 : vector<8x128xf32>
    %c1 = arith.constant 1 : index
    %c0_36 = arith.constant 0 : index
    %c0_37 = arith.constant 0 : index
    %58 = vector.load %arg5[%c1, %c0_36, %c0_37] : memref<4x32x128xbf16, #tpu.memory_space<vmem>>, vector<1x32x128xbf16>
    %59 = vector.shape_cast %58 : vector<1x32x128xbf16> to vector<32x128xbf16>
    %cst_38 = arith.constant dense<0.000000e+00> : vector<8x32xf32>
    %60 = tpu.matmul %6, %59, %cst_38 {dimension_numbers = #tpu.dot_dimension_numbers<[1], [1], [0], [0], [0, 0, 1, 0], [], []>} : vector<8x128xbf16>, vector<32x128xbf16>, vector<8x32xf32> -> vector<8x32xf32>
    %c1_39 = arith.constant 1 : index
    %c0_40 = arith.constant 0 : index
    %c0_41 = arith.constant 0 : index
    %61 = vector.load %arg6[%c1_39, %c0_40, %c0_41] : memref<4x1x32xf32, #tpu.memory_space<vmem>>, vector<1x1x32xf32>
    %62 = vector.shape_cast %61 : vector<1x1x32xf32> to vector<1x32xf32>
    %63 = vector.broadcast %62 : vector<1x32xf32> to vector<8x32xf32>
    %64 = arith.addf %60, %63 : vector<8x32xf32>
    %cst_42 = arith.constant 0.176776692 : f32
    %65 = vector.broadcast %cst_42 : f32 to vector<8x32xf32>
    %66 = arith.mulf %64, %65 : vector<8x32xf32>
    %67 = arith.truncf %66 : vector<8x32xf32> to vector<8x32xbf16>
    %68 = vector.extract_strided_slice %13 {offsets = [0, 1, 0, 0], sizes = [1, 1, 32, 16], strides = [1, 1, 1, 1]} : vector<2x4x32x16xbf16> to vector<1x1x32x16xbf16>
    %69 = vector.shape_cast %68 : vector<1x1x32x16xbf16> to vector<32x16xbf16>
    %70 = vector.extract_strided_slice %13 {offsets = [1, 1, 0, 0], sizes = [1, 1, 32, 16], strides = [1, 1, 1, 1]} : vector<2x4x32x16xbf16> to vector<1x1x32x16xbf16>
    %71 = vector.shape_cast %70 : vector<1x1x32x16xbf16> to vector<32x16xbf16>
    %cst_43 = arith.constant dense<0.000000e+00> : vector<8x16xf32>
    %72 = tpu.matmul %67, %69, %cst_43 {dimension_numbers = #tpu.dot_dimension_numbers<[1], [0], [0], [1], [0, 0, 1, 1], [], []>} : vector<8x32xbf16>, vector<32x16xbf16>, vector<8x16xf32> -> vector<8x16xf32>
    %73 = arith.addf %72, %20 : vector<8x16xf32>
    %cst_44 = arith.constant dense<0xFF800000> : vector<8xf32>
    %74 = vector.multi_reduction <maximumf>, %73, %cst_44 [1] : vector<8x16xf32> to vector<8xf32>
    %75 = vector.shape_cast %74 : vector<8xf32> to vector<8x1xf32>
    %76 = vector.broadcast %75 : vector<8x1xf32> to vector<8x16xf32>
    %77 = arith.subf %73, %76 : vector<8x16xf32>
    %78 = math.exp %77 : vector<8x16xf32>
    %cst_45 = arith.constant dense<0.000000e+00> : vector<8xf32>
    %79 = vector.multi_reduction <add>, %78, %cst_45 [1] : vector<8x16xf32> to vector<8xf32>
    %80 = vector.shape_cast %79 : vector<8xf32> to vector<8x1xf32>
    %81 = tpu.reciprocal %80 {approx = true} : vector<8x1xf32> -> vector<8x1xf32>
    %82 = vector.broadcast %81 : vector<8x1xf32> to vector<8x16xf32>
    %83 = arith.mulf %78, %82 : vector<8x16xf32>
    %c0_46 = arith.constant 0 : index
    %c1_47 = arith.constant 1 : index
    %c0_48 = arith.constant 0 : index
    %c0_49 = arith.constant 0 : index
    %84 = vector.load %arg14[%c0_46, %c1_47, %c0_48, %c0_49] : memref<1x4x8x16xf32, #tpu.memory_space<vmem>>, vector<1x1x8x16xf32>
    %85 = vector.shape_cast %84 : vector<1x1x8x16xf32> to vector<8x16xf32>
    %86 = vector.shape_cast %83 : vector<8x16xf32> to vector<1x1x8x16xf32>
    tpu.vector_store %arg14[%c0_46, %c1_47, %c0_48, %c0_49], %86 {strides = array<i32>} : memref<1x4x8x16xf32, #tpu.memory_space<vmem>>, vector<1x1x8x16xf32>,
    %87 = arith.truncf %83 : vector<8x16xf32> to vector<8x16xbf16>
    %cst_50 = arith.constant dense<0.000000e+00> : vector<8x32xf32>
    %88 = tpu.matmul %87, %71, %cst_50 {dimension_numbers = #tpu.dot_dimension_numbers<[1], [1], [0], [0], [0, 0, 1, 0], [], []>} : vector<8x16xbf16>, vector<32x16xbf16>, vector<8x32xf32> -> vector<8x32xf32>
    %89 = arith.truncf %88 : vector<8x32xf32> to vector<8x32xbf16>
    %c1_51 = arith.constant 1 : index
    %c0_52 = arith.constant 0 : index
    %c0_53 = arith.constant 0 : index
    %90 = vector.load %arg9[%c1_51, %c0_52, %c0_53] : memref<4x32x128xbf16, #tpu.memory_space<vmem>>, vector<1x32x128xbf16>
    %91 = vector.shape_cast %90 : vector<1x32x128xbf16> to vector<32x128xbf16>
    %cst_54 = arith.constant dense<0.000000e+00> : vector<8x128xf32>
    %92 = tpu.matmul %89, %91, %cst_54 {dimension_numbers = #tpu.dot_dimension_numbers<[1], [0], [0], [1], [0, 0, 1, 1], [], []>} : vector<8x32xbf16>, vector<32x128xbf16>, vector<8x128xf32> -> vector<8x128xf32>
    %93 = arith.addf %57, %92 : vector<8x128xf32>
    %c2 = arith.constant 2 : index
    %c0_55 = arith.constant 0 : index
    %c0_56 = arith.constant 0 : index
    %94 = vector.load %arg5[%c2, %c0_55, %c0_56] : memref<4x32x128xbf16, #tpu.memory_space<vmem>>, vector<1x32x128xbf16>
    %95 = vector.shape_cast %94 : vector<1x32x128xbf16> to vector<32x128xbf16>
    %cst_57 = arith.constant dense<0.000000e+00> : vector<8x32xf32>
    %96 = tpu.matmul %6, %95, %cst_57 {dimension_numbers = #tpu.dot_dimension_numbers<[1], [1], [0], [0], [0, 0, 1, 0], [], []>} : vector<8x128xbf16>, vector<32x128xbf16>, vector<8x32xf32> -> vector<8x32xf32>
    %c2_58 = arith.constant 2 : index
    %c0_59 = arith.constant 0 : index
    %c0_60 = arith.constant 0 : index
    %97 = vector.load %arg6[%c2_58, %c0_59, %c0_60] : memref<4x1x32xf32, #tpu.memory_space<vmem>>, vector<1x1x32xf32>
    %98 = vector.shape_cast %97 : vector<1x1x32xf32> to vector<1x32xf32>
    %99 = vector.broadcast %98 : vector<1x32xf32> to vector<8x32xf32>
    %100 = arith.addf %96, %99 : vector<8x32xf32>
    %cst_61 = arith.constant 0.176776692 : f32
    %101 = vector.broadcast %cst_61 : f32 to vector<8x32xf32>
    %102 = arith.mulf %100, %101 : vector<8x32xf32>
    %103 = arith.truncf %102 : vector<8x32xf32> to vector<8x32xbf16>
    %104 = vector.extract_strided_slice %13 {offsets = [0, 2, 0, 0], sizes = [1, 1, 32, 16], strides = [1, 1, 1, 1]} : vector<2x4x32x16xbf16> to vector<1x1x32x16xbf16>
    %105 = vector.shape_cast %104 : vector<1x1x32x16xbf16> to vector<32x16xbf16>
    %106 = vector.extract_strided_slice %13 {offsets = [1, 2, 0, 0], sizes = [1, 1, 32, 16], strides = [1, 1, 1, 1]} : vector<2x4x32x16xbf16> to vector<1x1x32x16xbf16>
    %107 = vector.shape_cast %106 : vector<1x1x32x16xbf16> to vector<32x16xbf16>
    %cst_62 = arith.constant dense<0.000000e+00> : vector<8x16xf32>
    %108 = tpu.matmul %103, %105, %cst_62 {dimension_numbers = #tpu.dot_dimension_numbers<[1], [0], [0], [1], [0, 0, 1, 1], [], []>} : vector<8x32xbf16>, vector<32x16xbf16>, vector<8x16xf32> -> vector<8x16xf32>
    %109 = arith.addf %108, %20 : vector<8x16xf32>
    %cst_63 = arith.constant dense<0xFF800000> : vector<8xf32>
    %110 = vector.multi_reduction <maximumf>, %109, %cst_63 [1] : vector<8x16xf32> to vector<8xf32>
    %111 = vector.shape_cast %110 : vector<8xf32> to vector<8x1xf32>
    %112 = vector.broadcast %111 : vector<8x1xf32> to vector<8x16xf32>
    %113 = arith.subf %109, %112 : vector<8x16xf32>
    %114 = math.exp %113 : vector<8x16xf32>
    %cst_64 = arith.constant dense<0.000000e+00> : vector<8xf32>
    %115 = vector.multi_reduction <add>, %114, %cst_64 [1] : vector<8x16xf32> to vector<8xf32>
    %116 = vector.shape_cast %115 : vector<8xf32> to vector<8x1xf32>
    %117 = tpu.reciprocal %116 {approx = true} : vector<8x1xf32> -> vector<8x1xf32>
    %118 = vector.broadcast %117 : vector<8x1xf32> to vector<8x16xf32>
    %119 = arith.mulf %114, %118 : vector<8x16xf32>
    %c0_65 = arith.constant 0 : index
    %c2_66 = arith.constant 2 : index
    %c0_67 = arith.constant 0 : index
    %c0_68 = arith.constant 0 : index
    %120 = vector.load %arg14[%c0_65, %c2_66, %c0_67, %c0_68] : memref<1x4x8x16xf32, #tpu.memory_space<vmem>>, vector<1x1x8x16xf32>
    %121 = vector.shape_cast %120 : vector<1x1x8x16xf32> to vector<8x16xf32>
    %122 = vector.shape_cast %119 : vector<8x16xf32> to vector<1x1x8x16xf32>
    tpu.vector_store %arg14[%c0_65, %c2_66, %c0_67, %c0_68], %122 {strides = array<i32>} : memref<1x4x8x16xf32, #tpu.memory_space<vmem>>, vector<1x1x8x16xf32>,
    %123 = arith.truncf %119 : vector<8x16xf32> to vector<8x16xbf16>
    %cst_69 = arith.constant dense<0.000000e+00> : vector<8x32xf32>
    %124 = tpu.matmul %123, %107, %cst_69 {dimension_numbers = #tpu.dot_dimension_numbers<[1], [1], [0], [0], [0, 0, 1, 0], [], []>} : vector<8x16xbf16>, vector<32x16xbf16>, vector<8x32xf32> -> vector<8x32xf32>
    %125 = arith.truncf %124 : vector<8x32xf32> to vector<8x32xbf16>
    %c2_70 = arith.constant 2 : index
    %c0_71 = arith.constant 0 : index
    %c0_72 = arith.constant 0 : index
    %126 = vector.load %arg9[%c2_70, %c0_71, %c0_72] : memref<4x32x128xbf16, #tpu.memory_space<vmem>>, vector<1x32x128xbf16>
    %127 = vector.shape_cast %126 : vector<1x32x128xbf16> to vector<32x128xbf16>
    %cst_73 = arith.constant dense<0.000000e+00> : vector<8x128xf32>
    %128 = tpu.matmul %125, %127, %cst_73 {dimension_numbers = #tpu.dot_dimension_numbers<[1], [0], [0], [1], [0, 0, 1, 1], [], []>} : vector<8x32xbf16>, vector<32x128xbf16>, vector<8x128xf32> -> vector<8x128xf32>
    %129 = arith.addf %93, %128 : vector<8x128xf32>
    %c3 = arith.constant 3 : index
    %c0_74 = arith.constant 0 : index
    %c0_75 = arith.constant 0 : index
    %130 = vector.load %arg5[%c3, %c0_74, %c0_75] : memref<4x32x128xbf16, #tpu.memory_space<vmem>>, vector<1x32x128xbf16>
    %131 = vector.shape_cast %130 : vector<1x32x128xbf16> to vector<32x128xbf16>
    %cst_76 = arith.constant dense<0.000000e+00> : vector<8x32xf32>
    %132 = tpu.matmul %6, %131, %cst_76 {dimension_numbers = #tpu.dot_dimension_numbers<[1], [1], [0], [0], [0, 0, 1, 0], [], []>} : vector<8x128xbf16>, vector<32x128xbf16>, vector<8x32xf32> -> vector<8x32xf32>
    %c3_77 = arith.constant 3 : index
    %c0_78 = arith.constant 0 : index
    %c0_79 = arith.constant 0 : index
    %133 = vector.load %arg6[%c3_77, %c0_78, %c0_79] : memref<4x1x32xf32, #tpu.memory_space<vmem>>, vector<1x1x32xf32>
    %134 = vector.shape_cast %133 : vector<1x1x32xf32> to vector<1x32xf32>
    %135 = vector.broadcast %134 : vector<1x32xf32> to vector<8x32xf32>
    %136 = arith.addf %132, %135 : vector<8x32xf32>
    %cst_80 = arith.constant 0.176776692 : f32
    %137 = vector.broadcast %cst_80 : f32 to vector<8x32xf32>
    %138 = arith.mulf %136, %137 : vector<8x32xf32>
    %139 = arith.truncf %138 : vector<8x32xf32> to vector<8x32xbf16>
    %140 = vector.extract_strided_slice %13 {offsets = [0, 3, 0, 0], sizes = [1, 1, 32, 16], strides = [1, 1, 1, 1]} : vector<2x4x32x16xbf16> to vector<1x1x32x16xbf16>
    %141 = vector.shape_cast %140 : vector<1x1x32x16xbf16> to vector<32x16xbf16>
    %142 = vector.extract_strided_slice %13 {offsets = [1, 3, 0, 0], sizes = [1, 1, 32, 16], strides = [1, 1, 1, 1]} : vector<2x4x32x16xbf16> to vector<1x1x32x16xbf16>
    %143 = vector.shape_cast %142 : vector<1x1x32x16xbf16> to vector<32x16xbf16>
    %cst_81 = arith.constant dense<0.000000e+00> : vector<8x16xf32>
    %144 = tpu.matmul %139, %141, %cst_81 {dimension_numbers = #tpu.dot_dimension_numbers<[1], [0], [0], [1], [0, 0, 1, 1], [], []>} : vector<8x32xbf16>, vector<32x16xbf16>, vector<8x16xf32> -> vector<8x16xf32>
    %145 = arith.addf %144, %20 : vector<8x16xf32>
    %cst_82 = arith.constant dense<0xFF800000> : vector<8xf32>
    %146 = vector.multi_reduction <maximumf>, %145, %cst_82 [1] : vector<8x16xf32> to vector<8xf32>
    %147 = vector.shape_cast %146 : vector<8xf32> to vector<8x1xf32>
    %148 = vector.broadcast %147 : vector<8x1xf32> to vector<8x16xf32>
    %149 = arith.subf %145, %148 : vector<8x16xf32>
    %150 = math.exp %149 : vector<8x16xf32>
    %cst_83 = arith.constant dense<0.000000e+00> : vector<8xf32>
    %151 = vector.multi_reduction <add>, %150, %cst_83 [1] : vector<8x16xf32> to vector<8xf32>
    %152 = vector.shape_cast %151 : vector<8xf32> to vector<8x1xf32>
    %153 = tpu.reciprocal %152 {approx = true} : vector<8x1xf32> -> vector<8x1xf32>
    %154 = vector.broadcast %153 : vector<8x1xf32> to vector<8x16xf32>
    %155 = arith.mulf %150, %154 : vector<8x16xf32>
    %c0_84 = arith.constant 0 : index
    %c3_85 = arith.constant 3 : index
    %c0_86 = arith.constant 0 : index
    %c0_87 = arith.constant 0 : index
    %156 = vector.load %arg14[%c0_84, %c3_85, %c0_86, %c0_87] : memref<1x4x8x16xf32, #tpu.memory_space<vmem>>, vector<1x1x8x16xf32>
    %157 = vector.shape_cast %156 : vector<1x1x8x16xf32> to vector<8x16xf32>
    %158 = vector.shape_cast %155 : vector<8x16xf32> to vector<1x1x8x16xf32>
    tpu.vector_store %arg14[%c0_84, %c3_85, %c0_86, %c0_87], %158 {strides = array<i32>} : memref<1x4x8x16xf32, #tpu.memory_space<vmem>>, vector<1x1x8x16xf32>,
    %159 = arith.truncf %155 : vector<8x16xf32> to vector<8x16xbf16>
    %cst_88 = arith.constant dense<0.000000e+00> : vector<8x32xf32>
    %160 = tpu.matmul %159, %143, %cst_88 {dimension_numbers = #tpu.dot_dimension_numbers<[1], [1], [0], [0], [0, 0, 1, 0], [], []>} : vector<8x16xbf16>, vector<32x16xbf16>, vector<8x32xf32> -> vector<8x32xf32>
    %161 = arith.truncf %160 : vector<8x32xf32> to vector<8x32xbf16>
    %c3_89 = arith.constant 3 : index
    %c0_90 = arith.constant 0 : index
    %c0_91 = arith.constant 0 : index
    %162 = vector.load %arg9[%c3_89, %c0_90, %c0_91] : memref<4x32x128xbf16, #tpu.memory_space<vmem>>, vector<1x32x128xbf16>
    %163 = vector.shape_cast %162 : vector<1x32x128xbf16> to vector<32x128xbf16>
    %cst_92 = arith.constant dense<0.000000e+00> : vector<8x128xf32>
    %164 = tpu.matmul %161, %163, %cst_92 {dimension_numbers = #tpu.dot_dimension_numbers<[1], [0], [0], [1], [0, 0, 1, 1], [], []>} : vector<8x32xbf16>, vector<32x128xbf16>, vector<8x128xf32> -> vector<8x128xf32>
    %165 = arith.addf %129, %164 : vector<8x128xf32>
    %c0_93 = arith.constant 0 : index
    %c0_94 = arith.constant 0 : index
    %166 = vector.load %arg10[%c0_93, %c0_94] : memref<1x128xf32, #tpu.memory_space<vmem>>, vector<1x128xf32>
    %167 = vector.broadcast %166 : vector<1x128xf32> to vector<8x128xf32>
    %168 = arith.addf %165, %167 : vector<8x128xf32>
    %169 = arith.addf %168, %1 : vector<8x128xf32>
    %cst_95 = arith.constant dense<0.000000e+00> : vector<8xf32>
    %170 = vector.multi_reduction <add>, %169, %cst_95 [1] : vector<8x128xf32> to vector<8xf32>
    %171 = vector.shape_cast %170 : vector<8xf32> to vector<8x1xf32>
    %cst_96 = arith.constant 1.280000e+02 : f32
    %172 = vector.broadcast %cst_96 : f32 to vector<8x1xf32>
    %173 = arith.divf %171, %172 : vector<8x1xf32>
    %174 = vector.broadcast %173 : vector<8x1xf32> to vector<8x128xf32>
    %175 = arith.subf %169, %174 : vector<8x128xf32>
    %176 = arith.mulf %175, %175 : vector<8x128xf32>
    %cst_97 = arith.constant dense<0.000000e+00> : vector<8xf32>
    %177 = vector.multi_reduction <add>, %176, %cst_97 [1] : vector<8x128xf32> to vector<8xf32>
    %178 = vector.shape_cast %177 : vector<8xf32> to vector<8x1xf32>
    %cst_98 = arith.constant 1.280000e+02 : f32
    %179 = vector.broadcast %cst_98 : f32 to vector<8x1xf32>
    %180 = arith.divf %178, %179 : vector<8x1xf32>
    %181 = vector.broadcast %173 : vector<8x1xf32> to vector<8x128xf32>
    %182 = arith.subf %169, %181 : vector<8x128xf32>
    %cst_99 = arith.constant 9.99999974E-6 : f32
    %183 = vector.broadcast %cst_99 : f32 to vector<8x1xf32>
    %184 = arith.addf %180, %183 : vector<8x1xf32>
    %185 = math.rsqrt %184 : vector<8x1xf32>
    %186 = vector.broadcast %185 : vector<8x1xf32> to vector<8x128xf32>
    %187 = arith.mulf %182, %186 : vector<8x128xf32>
    %c0_100 = arith.constant 0 : index
    %c0_101 = arith.constant 0 : index
    %188 = vector.load %arg11[%c0_100, %c0_101] : memref<1x128xf32, #tpu.memory_space<vmem>>, vector<1x128xf32>
    %189 = vector.broadcast %188 : vector<1x128xf32> to vector<8x128xf32>
    %190 = arith.mulf %187, %189 : vector<8x128xf32>
    %c0_102 = arith.constant 0 : index
    %c0_103 = arith.constant 0 : index
    %191 = vector.load %arg12[%c0_102, %c0_103] : memref<1x128xf32, #tpu.memory_space<vmem>>, vector<1x128xf32>
    %192 = vector.broadcast %191 : vector<1x128xf32> to vector<8x128xf32>
    %193 = arith.addf %190, %192 : vector<8x128xf32>
    %c0_104 = arith.constant 0 : index
    %c0_105 = arith.constant 0 : index
    %c0_106 = arith.constant 0 : index
    %194 = vector.load %arg13[%c0_104, %c0_105, %c0_106] : memref<1x8x128xf32, #tpu.memory_space<vmem>>, vector<1x8x128xf32>
    %195 = vector.shape_cast %194 : vector<1x8x128xf32> to vector<8x128xf32>
    %196 = vector.shape_cast %193 : vector<8x128xf32> to vector<1x8x128xf32>
    tpu.vector_store %arg13[%c0_104, %c0_105, %c0_106], %196 {strides = array<i32>} : memref<1x8x128xf32, #tpu.memory_space<vmem>>, vector<1x8x128xf32>,
    return
  }
  func.func @transform_0(%arg0: i32, %arg1: i32) -> (i32, i32, i32) {
    %c0_i32 = arith.constant 0 : i32
    %c0_i32_0 = arith.constant 0 : i32
    return %arg0, %arg1, %c0_i32 : i32, i32, i32
  }
  func.func @transform_1(%arg0: i32, %arg1: i32) -> (i32, i32, i32) {
    %c0_i32 = arith.constant 0 : i32
    %c0_i32_0 = arith.constant 0 : i32
    %c0_i32_1 = arith.constant 0 : i32
    return %arg0, %c0_i32, %c0_i32_0 : i32, i32, i32
  }
  func.func @transform_2(%arg0: i32, %arg1: i32) -> (i32, i32, i32) {
    %c0_i32 = arith.constant 0 : i32
    %c0_i32_0 = arith.constant 0 : i32
    %c0_i32_1 = arith.constant 0 : i32
    return %arg0, %c0_i32, %c0_i32_0 : i32, i32, i32
  }
  func.func @transform_3(%arg0: i32, %arg1: i32) -> (i32, i32, i32) {
    %c0_i32 = arith.constant 0 : i32
    %c0_i32_0 = arith.constant 0 : i32
    %c0_i32_1 = arith.constant 0 : i32
    %c0_i32_2 = arith.constant 0 : i32
    return %c0_i32, %c0_i32_0, %c0_i32_1 : i32, i32, i32
  }
  func.func @transform_4(%arg0: i32, %arg1: i32) -> (i32, i32, i32) {
    %c0_i32 = arith.constant 0 : i32
    %c0_i32_0 = arith.constant 0 : i32
    %c0_i32_1 = arith.constant 0 : i32
    %c0_i32_2 = arith.constant 0 : i32
    return %c0_i32, %c0_i32_0, %c0_i32_1 : i32, i32, i32
  }
  func.func @transform_5(%arg0: i32, %arg1: i32) -> (i32, i32) {
    %c0_i32 = arith.constant 0 : i32
    %c0_i32_0 = arith.constant 0 : i32
    %c0_i32_1 = arith.constant 0 : i32
    return %c0_i32, %c0_i32_0 : i32, i32
  }
  func.func @transform_6(%arg0: i32, %arg1: i32) -> (i32, i32) {
    %c0_i32 = arith.constant 0 : i32
    %c0_i32_0 = arith.constant 0 : i32
    %c0_i32_1 = arith.constant 0 : i32
    return %c0_i32, %c0_i32_0 : i32, i32
  }
  func.func @transform_7(%arg0: i32, %arg1: i32) -> (i32, i32, i32) {
    %c0_i32 = arith.constant 0 : i32
    %c0_i32_0 = arith.constant 0 : i32
    %c0_i32_1 = arith.constant 0 : i32
    %c0_i32_2 = arith.constant 0 : i32
    return %c0_i32, %c0_i32_0, %c0_i32_1 : i32, i32, i32
  }
  func.func @transform_8(%arg0: i32, %arg1: i32) -> (i32, i32) {
    %c0_i32 = arith.constant 0 : i32
    %c0_i32_0 = arith.constant 0 : i32
    %c0_i32_1 = arith.constant 0 : i32
    return %c0_i32, %c0_i32_0 : i32, i32
  }
  func.func @transform_9(%arg0: i32, %arg1: i32) -> (i32, i32) {
    %c0_i32 = arith.constant 0 : i32
    %c0_i32_0 = arith.constant 0 : i32
    %c0_i32_1 = arith.constant 0 : i32
    return %c0_i32, %c0_i32_0 : i32, i32
  }
  func.func @transform_10(%arg0: i32, %arg1: i32) -> (i32, i32) {
    %c0_i32 = arith.constant 0 : i32
    %c0_i32_0 = arith.constant 0 : i32
    %c0_i32_1 = arith.constant 0 : i32
    return %c0_i32, %c0_i32_0 : i32, i32
  }
  func.func @transform_11(%arg0: i32, %arg1: i32) -> (i32, i32, i32) {
    %c0_i32 = arith.constant 0 : i32
    %c0_i32_0 = arith.constant 0 : i32
    return %arg0, %arg1, %c0_i32 : i32, i32, i32
  }
  func.func @transform_12(%arg0: i32, %arg1: i32) -> (i32, i32, i32, i32) {
    %c0_i32 = arith.constant 0 : i32
    %c0_i32_0 = arith.constant 0 : i32
    %c0_i32_1 = arith.constant 0 : i32
    return %arg0, %c0_i32, %arg1, %c0_i32_0 : i32, i32, i32, i32
  }
}

module attributes {stable_mosaic.version = 11 : i64} {
  func.func @_block_kernel(%arg0: i32, %arg1: i32, %arg2: memref<1x8x128xf32, #tpu.memory_space<vmem>>, %arg3: memref<1x16x128xbf16, #tpu.memory_space<vmem>>, %arg4: memref<1x1x16xf32, #tpu.memory_space<vmem>>, %arg5: memref<4x32x128xbf16, #tpu.memory_space<vmem>>, %arg6: memref<4x1x32xf32, #tpu.memory_space<vmem>>, %arg7: memref<256x128xbf16, #tpu.memory_space<vmem>>, %arg8: memref<256x1xf32, #tpu.memory_space<vmem>>, %arg9: memref<4x32x128xbf16, #tpu.memory_space<vmem>>, %arg10: memref<1x128xf32, #tpu.memory_space<vmem>>, %arg11: memref<1x128xf32, #tpu.memory_space<vmem>>, %arg12: memref<1x128xf32, #tpu.memory_space<vmem>>, %arg13: memref<1x8x128xf32, #tpu.memory_space<vmem>>, %arg14: memref<1x4x8x16xf32, #tpu.memory_space<vmem>>) attributes {dimension_semantics = [#tpu.dimension_semantics<parallel>, #tpu.dimension_semantics<parallel>], iteration_bounds = array<i64: 2, 1>, scalar_prefetch = 0 : i64, scratch_operands = 0 : i64, tpu.core_type = #tpu.core_type<tc>, window_params = [{transform_indices = @transform_0, window_bounds = array<i64: 1, 8, 128>}, {transform_indices = @transform_1, window_bounds = array<i64: 1, 16, 128>}, {transform_indices = @transform_2, window_bounds = array<i64: 1, 1, 16>}, {pipeline_mode = #tpu.pipeline_mode<synchronous>, transform_indices = @transform_3, window_bounds = array<i64: 4, 32, 128>}, {pipeline_mode = #tpu.pipeline_mode<synchronous>, transform_indices = @transform_4, window_bounds = array<i64: 4, 1, 32>}, {pipeline_mode = #tpu.pipeline_mode<synchronous>, transform_indices = @transform_5, window_bounds = array<i64: 256, 128>}, {pipeline_mode = #tpu.pipeline_mode<synchronous>, transform_indices = @transform_6, window_bounds = array<i64: 256, 1>}, {pipeline_mode = #tpu.pipeline_mode<synchronous>, transform_indices = @transform_7, window_bounds = array<i64: 4, 32, 128>}, {pipeline_mode = #tpu.pipeline_mode<synchronous>, transform_indices = @transform_8, window_bounds = array<i64: 1, 128>}, {pipeline_mode = #tpu.pipeline_mode<synchronous>, transform_indices = @transform_9, window_bounds = array<i64: 1, 128>}, {pipeline_mode = #tpu.pipeline_mode<synchronous>, transform_indices = @transform_10, window_bounds = array<i64: 1, 128>}, {transform_indices = @transform_11, window_bounds = array<i64: 1, 8, 128>}, {transform_indices = @transform_12, window_bounds = array<i64: 1, 4, 8, 16>}]} {
    %c0 = arith.constant 0 : index
    %c0_0 = arith.constant 0 : index
    %c0_1 = arith.constant 0 : index
    %0 = vector.load %arg2[%c0, %c0_0, %c0_1] : memref<1x8x128xf32, #tpu.memory_space<vmem>>, vector<1x8x128xf32>
    %1 = vector.shape_cast %0 : vector<1x8x128xf32> to vector<8x128xf32>
    %c0_2 = arith.constant 0 : index
    %c0_3 = arith.constant 0 : index
    %c0_4 = arith.constant 0 : index
    %2 = vector.load %arg3[%c0_2, %c0_3, %c0_4] : memref<1x16x128xbf16, #tpu.memory_space<vmem>>, vector<1x16x128xbf16>
    %3 = vector.shape_cast %2 : vector<1x16x128xbf16> to vector<16x128xbf16>
    %c0_5 = arith.constant 0 : index
    %c0_6 = arith.constant 0 : index
    %c0_7 = arith.constant 0 : index
    %4 = vector.load %arg4[%c0_5, %c0_6, %c0_7] : memref<1x1x16xf32, #tpu.memory_space<vmem>>, vector<1x1x16xf32>
    %5 = vector.shape_cast %4 : vector<1x1x16xf32> to vector<1x16xf32>
    %6 = arith.truncf %1 : vector<8x128xf32> to vector<8x128xbf16>
    %c0_8 = arith.constant 0 : index
    %c0_9 = arith.constant 0 : index
    %7 = vector.load %arg7[%c0_8, %c0_9] : memref<256x128xbf16, #tpu.memory_space<vmem>>, vector<256x128xbf16>
    %cst = arith.constant dense<0.000000e+00> : vector<256x16xf32>
    %8 = tpu.matmul %7, %3, %cst {dimension_numbers = #tpu.dot_dimension_numbers<[1], [1], [0], [0], [0, 0, 1, 0], [], []>} : vector<256x128xbf16>, vector<16x128xbf16>, vector<256x16xf32> -> vector<256x16xf32>
    %c0_10 = arith.constant 0 : index
    %c0_11 = arith.constant 0 : index
    %9 = vector.load %arg8[%c0_10, %c0_11] : memref<256x1xf32, #tpu.memory_space<vmem>>, vector<256x1xf32>
    %10 = vector.broadcast %9 : vector<256x1xf32> to vector<256x16xf32>
    %11 = arith.addf %8, %10 : vector<256x16xf32>
    %12 = vector.shape_cast %11 : vector<256x16xf32> to vector<2x4x32x16xf32>
    %13 = arith.truncf %12 : vector<2x4x32x16xf32> to vector<2x4x32x16xbf16>
    %cst_12 = arith.constant 0.000000e+00 : f32
    %14 = vector.broadcast %cst_12 : f32 to vector<1x16xf32>
    %15 = arith.cmpf oeq, %5, %14 : vector<1x16xf32>
    %cst_13 = arith.constant -1.000000e+30 : f32
    %cst_14 = arith.constant 0.000000e+00 : f32
    %16 = vector.broadcast %cst_13 : f32 to vector<1x16xf32>
    %17 = vector.broadcast %cst_14 : f32 to vector<1x16xf32>
    %18 = arith.select %15, %16, %17 : vector<1x16xi1>, vector<1x16xf32>
    %19 = vector.shape_cast %18 : vector<1x16xf32> to vector<1x16xf32>
    %20 = vector.broadcast %19 : vector<1x16xf32> to vector<8x16xf32>
    %cst_15 = arith.constant 0.000000e+00 : f32
    %21 = vector.broadcast %cst_15 : f32 to vector<8x128xf32>
    %c0_16 = arith.constant 0 : index
    %c0_17 = arith.constant 0 : index
    %c0_18 = arith.constant 0 : index
    %22 = vector.load %arg5[%c0_16, %c0_17, %c0_18] : memref<4x32x128xbf16, #tpu.memory_space<vmem>>, vector<1x32x128xbf16>
    %23 = vector.shape_cast %22 : vector<1x32x128xbf16> to vector<32x128xbf16>
    %cst_19 = arith.constant dense<0.000000e+00> : vector<8x32xf32>
    %24 = tpu.matmul %6, %23, %cst_19 {dimension_numbers = #tpu.dot_dimension_numbers<[1], [1], [0], [0], [0, 0, 1, 0], [], []>} : vector<8x128xbf16>, vector<32x128xbf16>, vector<8x32xf32> -> vector<8x32xf32>
    %c0_20 = arith.constant 0 : index
    %c0_21 = arith.constant 0 : index
    %c0_22 = arith.constant 0 : index
    %25 = vector.load %arg6[%c0_20, %c0_21, %c0_22] : memref<4x1x32xf32, #tpu.memory_space<vmem>>, vector<1x1x32xf32>
    %26 = vector.shape_cast %25 : vector<1x1x32xf32> to vector<1x32xf32>
    %27 = vector.broadcast %26 : vector<1x32xf32> to vector<8x32xf32>
    %28 = arith.addf %24, %27 : vector<8x32xf32>
    %cst_23 = arith.constant 0.176776692 : f32
    %29 = vector.broadcast %cst_23 : f32 to vector<8x32xf32>
    %30 = arith.mulf %28, %29 : vector<8x32xf32>
    %31 = arith.truncf %30 : vector<8x32xf32> to vector<8x32xbf16>
    %32 = vector.extract_strided_slice %13 {offsets = [0, 0, 0, 0], sizes = [1, 1, 32, 16], strides = [1, 1, 1, 1]} : vector<2x4x32x16xbf16> to vector<1x1x32x16xbf16>
    %33 = vector.shape_cast %32 : vector<1x1x32x16xbf16> to vector<32x16xbf16>
    %34 = vector.extract_strided_slice %13 {offsets = [1, 0, 0, 0], sizes = [1, 1, 32, 16], strides = [1, 1, 1, 1]} : vector<2x4x32x16xbf16> to vector<1x1x32x16xbf16>
    %35 = vector.shape_cast %34 : vector<1x1x32x16xbf16> to vector<32x16xbf16>
    %cst_24 = arith.constant dense<0.000000e+00> : vector<8x16xf32>
    %36 = tpu.matmul %31, %33, %cst_24 {dimension_numbers = #tpu.dot_dimension_numbers<[1], [0], [0], [1], [0, 0, 1, 1], [], []>} : vector<8x32xbf16>, vector<32x16xbf16>, vector<8x16xf32> -> vector<8x16xf32>
    %37 = arith.addf %36, %20 : vector<8x16xf32>
    %cst_25 = arith.constant dense<0xFF800000> : vector<8xf32>
    %38 = vector.multi_reduction <maximumf>, %37, %cst_25 [1] : vector<8x16xf32> to vector<8xf32>
    %39 = vector.shape_cast %38 : vector<8xf32> to vector<8x1xf32>
    %40 = vector.broadcast %39 : vector<8x1xf32> to vector<8x16xf32>
    %41 = arith.subf %37, %40 : vector<8x16xf32>
    %42 = math.exp %41 : vector<8x16xf32>
    %cst_26 = arith.constant dense<0.000000e+00> : vector<8xf32>
    %43 = vector.multi_reduction <add>, %42, %cst_26 [1] : vector<8x16xf32> to vector<8xf32>
    %44 = vector.shape_cast %43 : vector<8xf32> to vector<8x1xf32>
    %45 = tpu.reciprocal %44 {approx = true} : vector<8x1xf32> -> vector<8x1xf32>
    %46 = vector.broadcast %45 : vector<8x1xf32> to vector<8x16xf32>
    %47 = arith.mulf %42, %46 : vector<8x16xf32>
    %c0_27 = arith.constant 0 : index
    %c0_28 = arith.constant 0 : index
    %c0_29 = arith.constant 0 : index
    %c0_30 = arith.constant 0 : index
    %48 = vector.load %arg14[%c0_27, %c0_28, %c0_29, %c0_30] : memref<1x4x8x16xf32, #tpu.memory_space<vmem>>, vector<1x1x8x16xf32>
    %49 = vector.shape_cast %48 : vector<1x1x8x16xf32> to vector<8x16xf32>
    %50 = vector.shape_cast %47 : vector<8x16xf32> to vector<1x1x8x16xf32>
    tpu.vector_store %arg14[%c0_27, %c0_28, %c0_29, %c0_30], %50 {strides = array<i32>} : memref<1x4x8x16xf32, #tpu.memory_space<vmem>>, vector<1x1x8x16xf32>,
    %51 = arith.truncf %47 : vector<8x16xf32> to vector<8x16xbf16>
    %cst_31 = arith.constant dense<0.000000e+00> : vector<8x32xf32>
    %52 = tpu.matmul %51, %35, %cst_31 {dimension_numbers = #tpu.dot_dimension_numbers<[1], [1], [0], [0], [0, 0, 1, 0], [], []>} : vector<8x16xbf16>, vector<32x16xbf16>, vector<8x32xf32> -> vector<8x32xf32>
    %53 = arith.truncf %52 : vector<8x32xf32> to vector<8x32xbf16>
    %c0_32 = arith.constant 0 : index
    %c0_33 = arith.constant 0 : index
    %c0_34 = arith.constant 0 : index
    %54 = vector.load %arg9[%c0_32, %c0_33, %c0_34] : memref<4x32x128xbf16, #tpu.memory_space<vmem>>, vector<1x32x128xbf16>
    %55 = vector.shape_cast %54 : vector<1x32x128xbf16> to vector<32x128xbf16>
    %cst_35 = arith.constant dense<0.000000e+00> : vector<8x128xf32>
    %56 = tpu.matmul %53, %55, %cst_35 {dimension_numbers = #tpu.dot_dimension_numbers<[1], [0], [0], [1], [0, 0, 1, 1], [], []>} : vector<8x32xbf16>, vector<32x128xbf16>, vector<8x128xf32> -> vector<8x128xf32>
    %57 = arith.addf %21, %56 : vector<8x128xf32>
    %c1 = arith.constant 1 : index
    %c0_36 = arith.constant 0 : index
    %c0_37 = arith.constant 0 : index
    %58 = vector.load %arg5[%c1, %c0_36, %c0_37] : memref<4x32x128xbf16, #tpu.memory_space<vmem>>, vector<1x32x128xbf16>
    %59 = vector.shape_cast %58 : vector<1x32x128xbf16> to vector<32x128xbf16>
    %cst_38 = arith.constant dense<0.000000e+00> : vector<8x32xf32>
    %60 = tpu.matmul %6, %59, %cst_38 {dimension_numbers = #tpu.dot_dimension_numbers<[1], [1], [0], [0], [0, 0, 1, 0], [], []>} : vector<8x128xbf16>, vector<32x128xbf16>, vector<8x32xf32> -> vector<8x32xf32>
    %c1_39 = arith.constant 1 : index
    %c0_40 = arith.constant 0 : index
    %c0_41 = arith.constant 0 : index
    %61 = vector.load %arg6[%c1_39, %c0_40, %c0_41] : memref<4x1x32xf32, #tpu.memory_space<vmem>>, vector<1x1x32xf32>
    %62 = vector.shape_cast %61 : vector<1x1x32xf32> to vector<1x32xf32>
    %63 = vector.broadcast %62 : vector<1x32xf32> to vector<8x32xf32>
    %64 = arith.addf %60, %63 : vector<8x32xf32>
    %cst_42 = arith.constant 0.176776692 : f32
    %65 = vector.broadcast %cst_42 : f32 to vector<8x32xf32>
    %66 = arith.mulf %64, %65 : vector<8x32xf32>
    %67 = arith.truncf %66 : vector<8x32xf32> to vector<8x32xbf16>
    %68 = vector.extract_strided_slice %13 {offsets = [0, 1, 0, 0], sizes = [1, 1, 32, 16], strides = [1, 1, 1, 1]} : vector<2x4x32x16xbf16> to vector<1x1x32x16xbf16>
    %69 = vector.shape_cast %68 : vector<1x1x32x16xbf16> to vector<32x16xbf16>
    %70 = vector.extract_strided_slice %13 {offsets = [1, 1, 0, 0], sizes = [1, 1, 32, 16], strides = [1, 1, 1, 1]} : vector<2x4x32x16xbf16> to vector<1x1x32x16xbf16>
    %71 = vector.shape_cast %70 : vector<1x1x32x16xbf16> to vector<32x16xbf16>
    %cst_43 = arith.constant dense<0.000000e+00> : vector<8x16xf32>
    %72 = tpu.matmul %67, %69, %cst_43 {dimension_numbers = #tpu.dot_dimension_numbers<[1], [0], [0], [1], [0, 0, 1, 1], [], []>} : vector<8x32xbf16>, vector<32x16xbf16>, vector<8x16xf32> -> vector<8x16xf32>
    %73 = arith.addf %72, %20 : vector<8x16xf32>
    %cst_44 = arith.constant dense<0xFF800000> : vector<8xf32>
    %74 = vector.multi_reduction <maximumf>, %73, %cst_44 [1] : vector<8x16xf32> to vector<8xf32>
    %75 = vector.shape_cast %74 : vector<8xf32> to vector<8x1xf32>
    %76 = vector.broadcast %75 : vector<8x1xf32> to vector<8x16xf32>
    %77 = arith.subf %73, %76 : vector<8x16xf32>
    %78 = math.exp %77 : vector<8x16xf32>
    %cst_45 = arith.constant dense<0.000000e+00> : vector<8xf32>
    %79 = vector.multi_reduction <add>, %78, %cst_45 [1] : vector<8x16xf32> to vector<8xf32>
    %80 = vector.shape_cast %79 : vector<8xf32> to vector<8x1xf32>
    %81 = tpu.reciprocal %80 {approx = true} : vector<8x1xf32> -> vector<8x1xf32>
    %82 = vector.broadcast %81 : vector<8x1xf32> to vector<8x16xf32>
    %83 = arith.mulf %78, %82 : vector<8x16xf32>
    %c0_46 = arith.constant 0 : index
    %c1_47 = arith.constant 1 : index
    %c0_48 = arith.constant 0 : index
    %c0_49 = arith.constant 0 : index
    %84 = vector.load %arg14[%c0_46, %c1_47, %c0_48, %c0_49] : memref<1x4x8x16xf32, #tpu.memory_space<vmem>>, vector<1x1x8x16xf32>
    %85 = vector.shape_cast %84 : vector<1x1x8x16xf32> to vector<8x16xf32>
    %86 = vector.shape_cast %83 : vector<8x16xf32> to vector<1x1x8x16xf32>
    tpu.vector_store %arg14[%c0_46, %c1_47, %c0_48, %c0_49], %86 {strides = array<i32>} : memref<1x4x8x16xf32, #tpu.memory_space<vmem>>, vector<1x1x8x16xf32>,
    %87 = arith.truncf %83 : vector<8x16xf32> to vector<8x16xbf16>
    %cst_50 = arith.constant dense<0.000000e+00> : vector<8x32xf32>
    %88 = tpu.matmul %87, %71, %cst_50 {dimension_numbers = #tpu.dot_dimension_numbers<[1], [1], [0], [0], [0, 0, 1, 0], [], []>} : vector<8x16xbf16>, vector<32x16xbf16>, vector<8x32xf32> -> vector<8x32xf32>
    %89 = arith.truncf %88 : vector<8x32xf32> to vector<8x32xbf16>
    %c1_51 = arith.constant 1 : index
    %c0_52 = arith.constant 0 : index
    %c0_53 = arith.constant 0 : index
    %90 = vector.load %arg9[%c1_51, %c0_52, %c0_53] : memref<4x32x128xbf16, #tpu.memory_space<vmem>>, vector<1x32x128xbf16>
    %91 = vector.shape_cast %90 : vector<1x32x128xbf16> to vector<32x128xbf16>
    %cst_54 = arith.constant dense<0.000000e+00> : vector<8x128xf32>
    %92 = tpu.matmul %89, %91, %cst_54 {dimension_numbers = #tpu.dot_dimension_numbers<[1], [0], [0], [1], [0, 0, 1, 1], [], []>} : vector<8x32xbf16>, vector<32x128xbf16>, vector<8x128xf32> -> vector<8x128xf32>
    %93 = arith.addf %57, %92 : vector<8x128xf32>
    %c2 = arith.constant 2 : index
    %c0_55 = arith.constant 0 : index
    %c0_56 = arith.constant 0 : index
    %94 = vector.load %arg5[%c2, %c0_55, %c0_56] : memref<4x32x128xbf16, #tpu.memory_space<vmem>>, vector<1x32x128xbf16>
    %95 = vector.shape_cast %94 : vector<1x32x128xbf16> to vector<32x128xbf16>
    %cst_57 = arith.constant dense<0.000000e+00> : vector<8x32xf32>
    %96 = tpu.matmul %6, %95, %cst_57 {dimension_numbers = #tpu.dot_dimension_numbers<[1], [1], [0], [0], [0, 0, 1, 0], [], []>} : vector<8x128xbf16>, vector<32x128xbf16>, vector<8x32xf32> -> vector<8x32xf32>
    %c2_58 = arith.constant 2 : index
    %c0_59 = arith.constant 0 : index
    %c0_60 = arith.constant 0 : index
    %97 = vector.load %arg6[%c2_58, %c0_59, %c0_60] : memref<4x1x32xf32, #tpu.memory_space<vmem>>, vector<1x1x32xf32>
    %98 = vector.shape_cast %97 : vector<1x1x32xf32> to vector<1x32xf32>
    %99 = vector.broadcast %98 : vector<1x32xf32> to vector<8x32xf32>
    %100 = arith.addf %96, %99 : vector<8x32xf32>
    %cst_61 = arith.constant 0.176776692 : f32
    %101 = vector.broadcast %cst_61 : f32 to vector<8x32xf32>
    %102 = arith.mulf %100, %101 : vector<8x32xf32>
    %103 = arith.truncf %102 : vector<8x32xf32> to vector<8x32xbf16>
    %104 = vector.extract_strided_slice %13 {offsets = [0, 2, 0, 0], sizes = [1, 1, 32, 16], strides = [1, 1, 1, 1]} : vector<2x4x32x16xbf16> to vector<1x1x32x16xbf16>
    %105 = vector.shape_cast %104 : vector<1x1x32x16xbf16> to vector<32x16xbf16>
    %106 = vector.extract_strided_slice %13 {offsets = [1, 2, 0, 0], sizes = [1, 1, 32, 16], strides = [1, 1, 1, 1]} : vector<2x4x32x16xbf16> to vector<1x1x32x16xbf16>
    %107 = vector.shape_cast %106 : vector<1x1x32x16xbf16> to vector<32x16xbf16>
    %cst_62 = arith.constant dense<0.000000e+00> : vector<8x16xf32>
    %108 = tpu.matmul %103, %105, %cst_62 {dimension_numbers = #tpu.dot_dimension_numbers<[1], [0], [0], [1], [0, 0, 1, 1], [], []>} : vector<8x32xbf16>, vector<32x16xbf16>, vector<8x16xf32> -> vector<8x16xf32>
    %109 = arith.addf %108, %20 : vector<8x16xf32>
    %cst_63 = arith.constant dense<0xFF800000> : vector<8xf32>
    %110 = vector.multi_reduction <maximumf>, %109, %cst_63 [1] : vector<8x16xf32> to vector<8xf32>
    %111 = vector.shape_cast %110 : vector<8xf32> to vector<8x1xf32>
    %112 = vector.broadcast %111 : vector<8x1xf32> to vector<8x16xf32>
    %113 = arith.subf %109, %112 : vector<8x16xf32>
    %114 = math.exp %113 : vector<8x16xf32>
    %cst_64 = arith.constant dense<0.000000e+00> : vector<8xf32>
    %115 = vector.multi_reduction <add>, %114, %cst_64 [1] : vector<8x16xf32> to vector<8xf32>
    %116 = vector.shape_cast %115 : vector<8xf32> to vector<8x1xf32>
    %117 = tpu.reciprocal %116 {approx = true} : vector<8x1xf32> -> vector<8x1xf32>
    %118 = vector.broadcast %117 : vector<8x1xf32> to vector<8x16xf32>
    %119 = arith.mulf %114, %118 : vector<8x16xf32>
    %c0_65 = arith.constant 0 : index
    %c2_66 = arith.constant 2 : index
    %c0_67 = arith.constant 0 : index
    %c0_68 = arith.constant 0 : index
    %120 = vector.load %arg14[%c0_65, %c2_66, %c0_67, %c0_68] : memref<1x4x8x16xf32, #tpu.memory_space<vmem>>, vector<1x1x8x16xf32>
    %121 = vector.shape_cast %120 : vector<1x1x8x16xf32> to vector<8x16xf32>
    %122 = vector.shape_cast %119 : vector<8x16xf32> to vector<1x1x8x16xf32>
    tpu.vector_store %arg14[%c0_65, %c2_66, %c0_67, %c0_68], %122 {strides = array<i32>} : memref<1x4x8x16xf32, #tpu.memory_space<vmem>>, vector<1x1x8x16xf32>,
    %123 = arith.truncf %119 : vector<8x16xf32> to vector<8x16xbf16>
    %cst_69 = arith.constant dense<0.000000e+00> : vector<8x32xf32>
    %124 = tpu.matmul %123, %107, %cst_69 {dimension_numbers = #tpu.dot_dimension_numbers<[1], [1], [0], [0], [0, 0, 1, 0], [], []>} : vector<8x16xbf16>, vector<32x16xbf16>, vector<8x32xf32> -> vector<8x32xf32>
    %125 = arith.truncf %124 : vector<8x32xf32> to vector<8x32xbf16>
    %c2_70 = arith.constant 2 : index
    %c0_71 = arith.constant 0 : index
    %c0_72 = arith.constant 0 : index
    %126 = vector.load %arg9[%c2_70, %c0_71, %c0_72] : memref<4x32x128xbf16, #tpu.memory_space<vmem>>, vector<1x32x128xbf16>
    %127 = vector.shape_cast %126 : vector<1x32x128xbf16> to vector<32x128xbf16>
    %cst_73 = arith.constant dense<0.000000e+00> : vector<8x128xf32>
    %128 = tpu.matmul %125, %127, %cst_73 {dimension_numbers = #tpu.dot_dimension_numbers<[1], [0], [0], [1], [0, 0, 1, 1], [], []>} : vector<8x32xbf16>, vector<32x128xbf16>, vector<8x128xf32> -> vector<8x128xf32>
    %129 = arith.addf %93, %128 : vector<8x128xf32>
    %c3 = arith.constant 3 : index
    %c0_74 = arith.constant 0 : index
    %c0_75 = arith.constant 0 : index
    %130 = vector.load %arg5[%c3, %c0_74, %c0_75] : memref<4x32x128xbf16, #tpu.memory_space<vmem>>, vector<1x32x128xbf16>
    %131 = vector.shape_cast %130 : vector<1x32x128xbf16> to vector<32x128xbf16>
    %cst_76 = arith.constant dense<0.000000e+00> : vector<8x32xf32>
    %132 = tpu.matmul %6, %131, %cst_76 {dimension_numbers = #tpu.dot_dimension_numbers<[1], [1], [0], [0], [0, 0, 1, 0], [], []>} : vector<8x128xbf16>, vector<32x128xbf16>, vector<8x32xf32> -> vector<8x32xf32>
    %c3_77 = arith.constant 3 : index
    %c0_78 = arith.constant 0 : index
    %c0_79 = arith.constant 0 : index
    %133 = vector.load %arg6[%c3_77, %c0_78, %c0_79] : memref<4x1x32xf32, #tpu.memory_space<vmem>>, vector<1x1x32xf32>
    %134 = vector.shape_cast %133 : vector<1x1x32xf32> to vector<1x32xf32>
    %135 = vector.broadcast %134 : vector<1x32xf32> to vector<8x32xf32>
    %136 = arith.addf %132, %135 : vector<8x32xf32>
    %cst_80 = arith.constant 0.176776692 : f32
    %137 = vector.broadcast %cst_80 : f32 to vector<8x32xf32>
    %138 = arith.mulf %136, %137 : vector<8x32xf32>
    %139 = arith.truncf %138 : vector<8x32xf32> to vector<8x32xbf16>
    %140 = vector.extract_strided_slice %13 {offsets = [0, 3, 0, 0], sizes = [1, 1, 32, 16], strides = [1, 1, 1, 1]} : vector<2x4x32x16xbf16> to vector<1x1x32x16xbf16>
    %141 = vector.shape_cast %140 : vector<1x1x32x16xbf16> to vector<32x16xbf16>
    %142 = vector.extract_strided_slice %13 {offsets = [1, 3, 0, 0], sizes = [1, 1, 32, 16], strides = [1, 1, 1, 1]} : vector<2x4x32x16xbf16> to vector<1x1x32x16xbf16>
    %143 = vector.shape_cast %142 : vector<1x1x32x16xbf16> to vector<32x16xbf16>
    %cst_81 = arith.constant dense<0.000000e+00> : vector<8x16xf32>
    %144 = tpu.matmul %139, %141, %cst_81 {dimension_numbers = #tpu.dot_dimension_numbers<[1], [0], [0], [1], [0, 0, 1, 1], [], []>} : vector<8x32xbf16>, vector<32x16xbf16>, vector<8x16xf32> -> vector<8x16xf32>
    %145 = arith.addf %144, %20 : vector<8x16xf32>
    %cst_82 = arith.constant dense<0xFF800000> : vector<8xf32>
    %146 = vector.multi_reduction <maximumf>, %145, %cst_82 [1] : vector<8x16xf32> to vector<8xf32>
    %147 = vector.shape_cast %146 : vector<8xf32> to vector<8x1xf32>
    %148 = vector.broadcast %147 : vector<8x1xf32> to vector<8x16xf32>
    %149 = arith.subf %145, %148 : vector<8x16xf32>
    %150 = math.exp %149 : vector<8x16xf32>
    %cst_83 = arith.constant dense<0.000000e+00> : vector<8xf32>
    %151 = vector.multi_reduction <add>, %150, %cst_83 [1] : vector<8x16xf32> to vector<8xf32>
    %152 = vector.shape_cast %151 : vector<8xf32> to vector<8x1xf32>
    %153 = tpu.reciprocal %152 {approx = true} : vector<8x1xf32> -> vector<8x1xf32>
    %154 = vector.broadcast %153 : vector<8x1xf32> to vector<8x16xf32>
    %155 = arith.mulf %150, %154 : vector<8x16xf32>
    %c0_84 = arith.constant 0 : index
    %c3_85 = arith.constant 3 : index
    %c0_86 = arith.constant 0 : index
    %c0_87 = arith.constant 0 : index
    %156 = vector.load %arg14[%c0_84, %c3_85, %c0_86, %c0_87] : memref<1x4x8x16xf32, #tpu.memory_space<vmem>>, vector<1x1x8x16xf32>
    %157 = vector.shape_cast %156 : vector<1x1x8x16xf32> to vector<8x16xf32>
    %158 = vector.shape_cast %155 : vector<8x16xf32> to vector<1x1x8x16xf32>
    tpu.vector_store %arg14[%c0_84, %c3_85, %c0_86, %c0_87], %158 {strides = array<i32>} : memref<1x4x8x16xf32, #tpu.memory_space<vmem>>, vector<1x1x8x16xf32>,
    %159 = arith.truncf %155 : vector<8x16xf32> to vector<8x16xbf16>
    %cst_88 = arith.constant dense<0.000000e+00> : vector<8x32xf32>
    %160 = tpu.matmul %159, %143, %cst_88 {dimension_numbers = #tpu.dot_dimension_numbers<[1], [1], [0], [0], [0, 0, 1, 0], [], []>} : vector<8x16xbf16>, vector<32x16xbf16>, vector<8x32xf32> -> vector<8x32xf32>
    %161 = arith.truncf %160 : vector<8x32xf32> to vector<8x32xbf16>
    %c3_89 = arith.constant 3 : index
    %c0_90 = arith.constant 0 : index
    %c0_91 = arith.constant 0 : index
    %162 = vector.load %arg9[%c3_89, %c0_90, %c0_91] : memref<4x32x128xbf16, #tpu.memory_space<vmem>>, vector<1x32x128xbf16>
    %163 = vector.shape_cast %162 : vector<1x32x128xbf16> to vector<32x128xbf16>
    %cst_92 = arith.constant dense<0.000000e+00> : vector<8x128xf32>
    %164 = tpu.matmul %161, %163, %cst_92 {dimension_numbers = #tpu.dot_dimension_numbers<[1], [0], [0], [1], [0, 0, 1, 1], [], []>} : vector<8x32xbf16>, vector<32x128xbf16>, vector<8x128xf32> -> vector<8x128xf32>
    %165 = arith.addf %129, %164 : vector<8x128xf32>
    %c0_93 = arith.constant 0 : index
    %c0_94 = arith.constant 0 : index
    %166 = vector.load %arg10[%c0_93, %c0_94] : memref<1x128xf32, #tpu.memory_space<vmem>>, vector<1x128xf32>
    %167 = vector.broadcast %166 : vector<1x128xf32> to vector<8x128xf32>
    %168 = arith.addf %165, %167 : vector<8x128xf32>
    %169 = arith.addf %168, %1 : vector<8x128xf32>
    %cst_95 = arith.constant dense<0.000000e+00> : vector<8xf32>
    %170 = vector.multi_reduction <add>, %169, %cst_95 [1] : vector<8x128xf32> to vector<8xf32>
    %171 = vector.shape_cast %170 : vector<8xf32> to vector<8x1xf32>
    %cst_96 = arith.constant 1.280000e+02 : f32
    %172 = vector.broadcast %cst_96 : f32 to vector<8x1xf32>
    %173 = arith.divf %171, %172 : vector<8x1xf32>
    %174 = vector.broadcast %173 : vector<8x1xf32> to vector<8x128xf32>
    %175 = arith.subf %169, %174 : vector<8x128xf32>
    %176 = arith.mulf %175, %175 : vector<8x128xf32>
    %cst_97 = arith.constant dense<0.000000e+00> : vector<8xf32>
    %177 = vector.multi_reduction <add>, %176, %cst_97 [1] : vector<8x128xf32> to vector<8xf32>
    %178 = vector.shape_cast %177 : vector<8xf32> to vector<8x1xf32>
    %cst_98 = arith.constant 1.280000e+02 : f32
    %179 = vector.broadcast %cst_98 : f32 to vector<8x1xf32>
    %180 = arith.divf %178, %179 : vector<8x1xf32>
    %181 = vector.broadcast %173 : vector<8x1xf32> to vector<8x128xf32>
    %182 = arith.subf %169, %181 : vector<8x128xf32>
    %cst_99 = arith.constant 9.99999974E-6 : f32
    %183 = vector.broadcast %cst_99 : f32 to vector<8x1xf32>
    %184 = arith.addf %180, %183 : vector<8x1xf32>
    %185 = math.rsqrt %184 : vector<8x1xf32>
    %186 = vector.broadcast %185 : vector<8x1xf32> to vector<8x128xf32>
    %187 = arith.mulf %182, %186 : vector<8x128xf32>
    %c0_100 = arith.constant 0 : index
    %c0_101 = arith.constant 0 : index
    %188 = vector.load %arg11[%c0_100, %c0_101] : memref<1x128xf32, #tpu.memory_space<vmem>>, vector<1x128xf32>
    %189 = vector.broadcast %188 : vector<1x128xf32> to vector<8x128xf32>
    %190 = arith.mulf %187, %189 : vector<8x128xf32>
    %c0_102 = arith.constant 0 : index
    %c0_103 = arith.constant 0 : index
    %191 = vector.load %arg12[%c0_102, %c0_103] : memref<1x128xf32, #tpu.memory_space<vmem>>, vector<1x128xf32>
    %192 = vector.broadcast %191 : vector<1x128xf32> to vector<8x128xf32>
    %193 = arith.addf %190, %192 : vector<8x128xf32>
    %c0_104 = arith.constant 0 : index
    %c0_105 = arith.constant 0 : index
    %c0_106 = arith.constant 0 : index
    %194 = vector.load %arg13[%c0_104, %c0_105, %c0_106] : memref<1x8x128xf32, #tpu.memory_space<vmem>>, vector<1x8x128xf32>
    %195 = vector.shape_cast %194 : vector<1x8x128xf32> to vector<8x128xf32>
    %196 = vector.shape_cast %193 : vector<8x128xf32> to vector<1x8x128xf32>
    tpu.vector_store %arg13[%c0_104, %c0_105, %c0_106], %196 {strides = array<i32>} : memref<1x8x128xf32, #tpu.memory_space<vmem>>, vector<1x8x128xf32>,
    return
  }
  func.func @transform_0(%arg0: i32, %arg1: i32) -> (i32, i32, i32) {
    %c0_i32 = arith.constant 0 : i32
    %c0_i32_0 = arith.constant 0 : i32
    return %arg0, %arg1, %c0_i32 : i32, i32, i32
  }
  func.func @transform_1(%arg0: i32, %arg1: i32) -> (i32, i32, i32) {
    %c0_i32 = arith.constant 0 : i32
    %c0_i32_0 = arith.constant 0 : i32
    %c0_i32_1 = arith.constant 0 : i32
    return %arg0, %c0_i32, %c0_i32_0 : i32, i32, i32
  }
  func.func @transform_2(%arg0: i32, %arg1: i32) -> (i32, i32, i32) {
    %c0_i32 = arith.constant 0 : i32
    %c0_i32_0 = arith.constant 0 : i32
    %c0_i32_1 = arith.constant 0 : i32
    return %arg0, %c0_i32, %c0_i32_0 : i32, i32, i32
  }
  func.func @transform_3(%arg0: i32, %arg1: i32) -> (i32, i32, i32) {
    %c0_i32 = arith.constant 0 : i32
    %c0_i32_0 = arith.constant 0 : i32
    %c0_i32_1 = arith.constant 0 : i32
    %c0_i32_2 = arith.constant 0 : i32
    return %c0_i32, %c0_i32_0, %c0_i32_1 : i32, i32, i32
  }
  func.func @transform_4(%arg0: i32, %arg1: i32) -> (i32, i32, i32) {
    %c0_i32 = arith.constant 0 : i32
    %c0_i32_0 = arith.constant 0 : i32
    %c0_i32_1 = arith.constant 0 : i32
    %c0_i32_2 = arith.constant 0 : i32
    return %c0_i32, %c0_i32_0, %c0_i32_1 : i32, i32, i32
  }
  func.func @transform_5(%arg0: i32, %arg1: i32) -> (i32, i32) {
    %c0_i32 = arith.constant 0 : i32
    %c0_i32_0 = arith.constant 0 : i32
    %c0_i32_1 = arith.constant 0 : i32
    return %c0_i32, %c0_i32_0 : i32, i32
  }
  func.func @transform_6(%arg0: i32, %arg1: i32) -> (i32, i32) {
    %c0_i32 = arith.constant 0 : i32
    %c0_i32_0 = arith.constant 0 : i32
    %c0_i32_1 = arith.constant 0 : i32
    return %c0_i32, %c0_i32_0 : i32, i32
  }
  func.func @transform_7(%arg0: i32, %arg1: i32) -> (i32, i32, i32) {
    %c0_i32 = arith.constant 0 : i32
    %c0_i32_0 = arith.constant 0 : i32
    %c0_i32_1 = arith.constant 0 : i32
    %c0_i32_2 = arith.constant 0 : i32
    return %c0_i32, %c0_i32_0, %c0_i32_1 : i32, i32, i32
  }
  func.func @transform_8(%arg0: i32, %arg1: i32) -> (i32, i32) {
    %c0_i32 = arith.constant 0 : i32
    %c0_i32_0 = arith.constant 0 : i32
    %c0_i32_1 = arith.constant 0 : i32
    return %c0_i32, %c0_i32_0 : i32, i32
  }
  func.func @transform_9(%arg0: i32, %arg1: i32) -> (i32, i32) {
    %c0_i32 = arith.constant 0 : i32
    %c0_i32_0 = arith.constant 0 : i32
    %c0_i32_1 = arith.constant 0 : i32
    return %c0_i32, %c0_i32_0 : i32, i32
  }
  func.func @transform_10(%arg0: i32, %arg1: i32) -> (i32, i32) {
    %c0_i32 = arith.constant 0 : i32
    %c0_i32_0 = arith.constant 0 : i32
    %c0_i32_1 = arith.constant 0 : i32
    return %c0_i32, %c0_i32_0 : i32, i32
  }
  func.func @transform_11(%arg0: i32, %arg1: i32) -> (i32, i32, i32) {
    %c0_i32 = arith.constant 0 : i32
    %c0_i32_0 = arith.constant 0 : i32
    return %arg0, %arg1, %c0_i32 : i32, i32, i32
  }
  func.func @transform_12(%arg0: i32, %arg1: i32) -> (i32, i32, i32, i32) {
    %c0_i32 = arith.constant 0 : i32
    %c0_i32_0 = arith.constant 0 : i32
    %c0_i32_1 = arith.constant 0 : i32
    return %arg0, %c0_i32, %arg1, %c0_i32_0 : i32, i32, i32, i32
  }
}

</mosaic_0001>

<llo_original>
// kernel: tpu_custom_call.1
$region0: #{tpu_custom_call.1}
  #allocation0 [shape = 'u32[]', space=smem, size = 0x4, offset = 0x4, fixed_abs, tag = 'smem constant byte address 0x4 - core index']
  #allocation1 [shape = 'u32[144,128]{1,0:T(1,128)}', space=vmem, size = 0x12000, scoped, tag = 'internal scratch']
  %s0 = inlined_call_operand.hbm [shape: f32[2,8,128], index: 0, kind: input, shape index: {}]
  %s1 = inlined_call_operand.hbm [shape: bf16[2,16,128], index: 1, kind: input, shape index: {}]
  %s2 = inlined_call_operand.hbm [shape: f32[2,1,16], index: 2, kind: input, shape index: {}]
  %s3 = inlined_call_operand.hbm [shape: bf16[4,32,128], index: 3, kind: input, shape index: {}]
  %s4 = inlined_call_operand.hbm [shape: f32[4,1,32], index: 4, kind: input, shape index: {}]
  %s5 = inlined_call_operand.hbm [shape: bf16[256,128], index: 5, kind: input, shape index: {}]
  %s6 = inlined_call_operand.hbm [shape: f32[256,1], index: 6, kind: input, shape index: {}]
  %s7 = inlined_call_operand.hbm [shape: bf16[4,32,128], index: 7, kind: input, shape index: {}]
  %s8 = inlined_call_operand.hbm [shape: f32[1,128], index: 8, kind: input, shape index: {}]
  %s9 = inlined_call_operand.hbm [shape: f32[1,128], index: 9, kind: input, shape index: {}]
  %s10 = inlined_call_operand.hbm [shape: f32[1,128], index: 10, kind: input, shape index: {}]
  %s11 = inlined_call_operand.hbm [shape: f32[2,8,128], index: 11, kind: output, shape index: {0}]
  %s12 = inlined_call_operand.hbm [shape: f32[2,4,8,16], index: 12, kind: output, shape index: {1}]
  %13 = xla_tuple %s11, %s12
  %s14 = sld [smem:[#allocation0]]
  $region129: #{tpu_custom_call.1} parent=0
    _
  %s16 = ssub.s32 1, %s14
  %s17 = scalar_select 0, %s16, %s14
  $region1: #{tpu_custom_call.1} parent=0
    #allocation2 [shape = 'u8[8192]{0}', space=vmem, size = 0x2000, scoped, tag = 'input window, operand 0']
    #allocation3 [shape = 's32[2]{0}', space=sflag, size = 0x8, scoped, tag = 'scoped memory for tpu_custom_call.1']
    #allocation4 [shape = 's32[2]{0}', space=sflag, size = 0x8, scoped, tag = 'scoped memory for tpu_custom_call.1']
    #allocation5 [shape = 'u8[8192]{0}', space=vmem, size = 0x2000, scoped, tag = 'input window, operand 1']
    #allocation6 [shape = 's32[2]{0}', space=sflag, size = 0x8, scoped, tag = 'scoped memory for tpu_custom_call.1']
    #allocation7 [shape = 'u8[1024]{0}', space=vmem, size = 0x400, scoped, tag = 'input window, operand 2']
    #allocation8 [shape = 'u8[32768]{0}', space=vmem, size = 0x8000, scoped, tag = 'input window, operand 3, single buffered']
    #allocation9 [shape = 's32[1]{0}', space=sflag, size = 0x4, scoped, tag = 'scoped memory for tpu_custom_call.1']
    #allocation10 [shape = 'u8[2048]{0}', space=vmem, size = 0x800, scoped, tag = 'input window, operand 4, single buffered']
    #allocation11 [shape = 'u8[65536]{0}', space=vmem, size = 0x10000, scoped, tag = 'input window, operand 5, single buffered']
    #allocation12 [shape = 's32[1]{0}', space=sflag, size = 0x4, scoped, tag = 'scoped memory for tpu_custom_call.1']
    #allocation13 [shape = 'u8[131072]{0}', space=vmem, size = 0x20000, scoped, tag = 'input window, operand 6, single buffered']
    #allocation14 [shape = 'u8[32768]{0}', space=vmem, size = 0x8000, scoped, tag = 'input window, operand 7, single buffered']
    #allocation15 [shape = 's32[1]{0}', space=sflag, size = 0x4, scoped, tag = 'scoped memory for tpu_custom_call.1']
    #allocation16 [shape = 'u8[512]{0}', space=vmem, size = 0x400, scoped, tag = 'input window, operand 8, single buffered']
    #allocation17 [shape = 'u8[512]{0}', space=vmem, size = 0x400, scoped, tag = 'input window, operand 9, single buffered']
    #allocation18 [shape = 's32[1]{0}', space=sflag, size = 0x4, scoped, tag = 'scoped memory for tpu_custom_call.1']
    #allocation19 [shape = 'u8[512]{0}', space=vmem, size = 0x400, scoped, tag = 'input window, operand 10, single buffered']
    #allocation20 [shape = 'u8[8192]{0}', space=vmem, size = 0x2000, scoped, tag = 'output window, operand 0']
    #allocation21 [shape = 'u8[32768]{0}', space=vmem, size = 0x8000, scoped, tag = 'output window, operand 1']
    #allocation22 [shape = 's32[2]{0}', space=sflag, size = 0x8, scoped, tag = 'scoped memory for tpu_custom_call.1']
    %18 = vsyncpa [#allocation3], 0
    %s19 = scalar_lea.sflag [#allocation3], 1
    %20 = vsyncpa %s19, 0
    %21 = vsyncpa [#allocation6], 0
    %s22 = scalar_lea.sflag [#allocation6], 1
    %23 = vsyncpa %s22, 0
    %24 = vsyncpa [#allocation9], 0
    %25 = vsyncpa [#allocation12], 0
    %26 = vsyncpa [#allocation15], 0
    %27 = vsyncpa [#allocation18], 0
    %28 = vsyncpa [#allocation4], 0
    %s29 = scalar_lea.sflag [#allocation4], 1
    %30 = vsyncpa %s29, 0
    %31 = vsyncpa [#allocation22], 0
    %s32 = scalar_lea.sflag [#allocation22], 1
    %33 = vsyncpa %s32, 0
    loop: start=0, step=1, limit=4
    $region2: #{tpu_custom_call.1} parent=1 // loop_pre_header
      _
    $region3: #{tpu_custom_call.1} parent=1 // loop_header
      %s35 = sphi 0, %s39
      %p36 = scmp.ge.s32.totalorder %s35, 4
      %s42 = sphi 0, %s54
      %s43 = sphi 0, %s50
      %s44 = sphi 0, %s42
      %s45 = sphi 0, %s43
      %s46 = sphi 0, %s44
      %s47 = sphi 0, %s45
      %s59 = sphi 0, %s61
      %s62 = sphi 0, %s59
      %s63 = sphi 0, %s62
      %s79 = sphi 0, %s63
      %s85 = sphi 0, %s87
      %s88 = sphi 0, %s85
      %s89 = sphi 0, %s88
      %s105 = sphi 0, %s89
      %s111 = sphi 0, %s113
      %s114 = sphi 0, %s111
      %s115 = sphi 0, %s114
      %s131 = sphi 0, %s115
      %s135 = sphi 0, %s135
      %s137 = sphi 0, %s135
      %s138 = sphi 0, %s137
      %s152 = sphi 0, %s138
      %s156 = sphi 0, %s156
      %s158 = sphi 0, %s156
      %s159 = sphi 0, %s158
      %s173 = sphi 0, %s159
      %s177 = sphi 0, %s177
      %s179 = sphi 0, %s177
      %s180 = sphi 0, %s179
      %s194 = sphi 0, %s180
      %s198 = sphi 0, %s198
      %s200 = sphi 0, %s198
      %s201 = sphi 0, %s200
      %s215 = sphi 0, %s201
      %s219 = sphi 0, %s219
      %s221 = sphi 0, %s219
      %s222 = sphi 0, %s221
      %s236 = sphi 0, %s222
      %s240 = sphi 0, %s240
      %s242 = sphi 0, %s240
      %s243 = sphi 0, %s242
      %s257 = sphi 0, %s243
      %s261 = sphi 0, %s261
      %s263 = sphi 0, %s261
      %s264 = sphi 0, %s263
      %s278 = sphi 0, %s264
      %s282 = sphi 0, %s282
      %s284 = sphi 0, %s282
      %s285 = sphi 0, %s284
      %s299 = sphi 0, %s285
      %s307 = sphi 0, %s309
      %s310 = sphi 0, %s307
      %s311 = sphi 0, %s310
      %s327 = sphi 0, %s311
      %s335 = sphi 0, %s337
      %s338 = sphi 0, %s335
      %s339 = sphi 0, %s338
      %s355 = sphi 0, %s339
    $region4: #{tpu_custom_call.1} parent=1 // loop_header_branch
      %38 = sbr.rel (%p36) target = $region8
    $region5: #{tpu_custom_call.1} parent=1 // loop_body
      %s40 = ssub.s32 %s35, 1
      %s41 = ssub.s32 %s35, 2
      %s48 = sadd.s32 1, %s43
      %p49 = scmp.ge.s32.totalorder %s48, 1
      %s50 = scalar_select %p49, 0, %s48
      %s51 = sadd.s32 1, %s42
      %s52 = scalar_select %p49, %s51, %s42
      %p53 = scmp.ge.s32.totalorder %s52, 2
      %s54 = scalar_select %p53, 0, %s52
      %s55 = ssub.s32 %s42, %s54
      %s56 = ssub.s32 %s43, %s50
      %s57 = sor.u32 %s55, %s56
      %p58 = scmp.eq.s32.totalorder %s57, 0
      %s60 = sadd.s32 %s59, 1
      %s61 = scalar_select %p58, %s59, %s60
      %p64 = pneg %p58
      %p65 = scmp.eq.s32.totalorder %s35, 1
      %p66 = por %p64, %p65
      %p67 = scmp.ne.s32.totalorder %s59, %s62
      %p68 = scmp.eq.s32.totalorder %s35, 0
      %p69 = por %p67, %p68
      %p70 = scmp.ne.s32.totalorder %s59, %s62
      %p71 = scmp.eq.s32.totalorder %s40, 1
      %p72 = por %p70, %p71
      %p73 = scmp.ne.s32.totalorder %s62, %s63
      %p74 = scmp.eq.s32.totalorder %s40, 0
      %p75 = por %p73, %p74
      %p76 = scmp.ne.s32.totalorder %s62, %s63
      %p77 = scmp.eq.s32.totalorder %s41, 1
      %p78 = por %p76, %p77
      %p80 = scmp.ne.s32.totalorder %s63, %s79
      %p81 = scmp.eq.s32.totalorder %s41, 0
      %p82 = por %p80, %p81
      %s83 = ssub.s32 %s42, %s54
      %p84 = scmp.eq.s32.totalorder %s83, 0
      %s86 = sadd.s32 %s85, 1
      %s87 = scalar_select %p84, %s85, %s86
      %p90 = pneg %p84
      %p91 = scmp.eq.s32.totalorder %s35, 1
      %p92 = por %p90, %p91
      %p93 = scmp.ne.s32.totalorder %s85, %s88
      %p94 = scmp.eq.s32.totalorder %s35, 0
      %p95 = por %p93, %p94
      %p96 = scmp.ne.s32.totalorder %s85, %s88
      %p97 = scmp.eq.s32.totalorder %s40, 1
      %p98 = por %p96, %p97
      %p99 = scmp.ne.s32.totalorder %s88, %s89
      %p100 = scmp.eq.s32.totalorder %s40, 0
      %p101 = por %p99, %p100
      %p102 = scmp.ne.s32.totalorder %s88, %s89
      %p103 = scmp.eq.s32.totalorder %s41, 1
      %p104 = por %p102, %p103
      %p106 = scmp.ne.s32.totalorder %s89, %s105
      %p107 = scmp.eq.s32.totalorder %s41, 0
      %p108 = por %p106, %p107
      %s109 = ssub.s32 %s42, %s54
      %p110 = scmp.eq.s32.totalorder %s109, 0
      %s112 = sadd.s32 %s111, 1
      %s113 = scalar_select %p110, %s111, %s112
      %p116 = pneg %p110
      %p117 = scmp.eq.s32.totalorder %s35, 1
      %p118 = por %p116, %p117
      %p119 = scmp.ne.s32.totalorder %s111, %s114
      %p120 = scmp.eq.s32.totalorder %s35, 0
      %p121 = por %p119, %p120
      %p122 = scmp.ne.s32.totalorder %s111, %s114
      %p123 = scmp.eq.s32.totalorder %s40, 1
      %p124 = por %p122, %p123
      %p125 = scmp.ne.s32.totalorder %s114, %s115
      %p126 = scmp.eq.s32.totalorder %s40, 0
      %p127 = por %p125, %p126
      %p128 = scmp.ne.s32.totalorder %s114, %s115
      %p129 = scmp.eq.s32.totalorder %s41, 1
      %p130 = por %p128, %p129
      %p132 = scmp.ne.s32.totalorder %s115, %s131
      %p133 = scmp.eq.s32.totalorder %s41, 0
      %p134 = por %p132, %p133
      %s136 = sadd.s32 %s135, 1
      %p139 = scmp.eq.s32.totalorder %s35, 1
      %p140 = scmp.ne.s32.totalorder %s135, %s137
      %p141 = scmp.eq.s32.totalorder %s35, 0
      %p142 = por %p140, %p141
      %p143 = scmp.ne.s32.totalorder %s135, %s137
      %p144 = scmp.eq.s32.totalorder %s40, 1
      %p145 = por %p143, %p144
      %p146 = scmp.ne.s32.totalorder %s137, %s138
      %p147 = scmp.eq.s32.totalorder %s40, 0
      %p148 = por %p146, %p147
      %p149 = scmp.ne.s32.totalorder %s137, %s138
      %p150 = scmp.eq.s32.totalorder %s41, 1
      %p151 = por %p149, %p150
      %p153 = scmp.ne.s32.totalorder %s138, %s152
      %p154 = scmp.eq.s32.totalorder %s41, 0
      %p155 = por %p153, %p154
      %s157 = sadd.s32 %s156, 1
      %p160 = scmp.eq.s32.totalorder %s35, 1
      %p161 = scmp.ne.s32.totalorder %s156, %s158
      %p162 = scmp.eq.s32.totalorder %s35, 0
      %p163 = por %p161, %p162
      %p164 = scmp.ne.s32.totalorder %s156, %s158
      %p165 = scmp.eq.s32.totalorder %s40, 1
      %p166 = por %p164, %p165
      %p167 = scmp.ne.s32.totalorder %s158, %s159
      %p168 = scmp.eq.s32.totalorder %s40, 0
      %p169 = por %p167, %p168
      %p170 = scmp.ne.s32.totalorder %s158, %s159
      %p171 = scmp.eq.s32.totalorder %s41, 1
      %p172 = por %p170, %p171
      %p174 = scmp.ne.s32.totalorder %s159, %s173
      %p175 = scmp.eq.s32.totalorder %s41, 0
      %p176 = por %p174, %p175
      %s178 = sadd.s32 %s177, 1
      %p181 = scmp.eq.s32.totalorder %s35, 1
      %p182 = scmp.ne.s32.totalorder %s177, %s179
      %p183 = scmp.eq.s32.totalorder %s35, 0
      %p184 = por %p182, %p183
      %p185 = scmp.ne.s32.totalorder %s177, %s179
      %p186 = scmp.eq.s32.totalorder %s40, 1
      %p187 = por %p185, %p186
      %p188 = scmp.ne.s32.totalorder %s179, %s180
      %p189 = scmp.eq.s32.totalorder %s40, 0
      %p190 = por %p188, %p189
      %p191 = scmp.ne.s32.totalorder %s179, %s180
      %p192 = scmp.eq.s32.totalorder %s41, 1
      %p193 = por %p191, %p192
      %p195 = scmp.ne.s32.totalorder %s180, %s194
      %p196 = scmp.eq.s32.totalorder %s41, 0
      %p197 = por %p195, %p196
      %s199 = sadd.s32 %s198, 1
      %p202 = scmp.eq.s32.totalorder %s35, 1
      %p203 = scmp.ne.s32.totalorder %s198, %s200
      %p204 = scmp.eq.s32.totalorder %s35, 0
      %p205 = por %p203, %p204
      %p206 = scmp.ne.s32.totalorder %s198, %s200
      %p207 = scmp.eq.s32.totalorder %s40, 1
      %p208 = por %p206, %p207
      %p209 = scmp.ne.s32.totalorder %s200, %s201
      %p210 = scmp.eq.s32.totalorder %s40, 0
      %p211 = por %p209, %p210
      %p212 = scmp.ne.s32.totalorder %s200, %s201
      %p213 = scmp.eq.s32.totalorder %s41, 1
      %p214 = por %p212, %p213
      %p216 = scmp.ne.s32.totalorder %s201, %s215
      %p217 = scmp.eq.s32.totalorder %s41, 0
      %p218 = por %p216, %p217
      %s220 = sadd.s32 %s219, 1
      %p223 = scmp.eq.s32.totalorder %s35, 1
      %p224 = scmp.ne.s32.totalorder %s219, %s221
      %p225 = scmp.eq.s32.totalorder %s35, 0
      %p226 = por %p224, %p225
      %p227 = scmp.ne.s32.totalorder %s219, %s221
      %p228 = scmp.eq.s32.totalorder %s40, 1
      %p229 = por %p227, %p228
      %p230 = scmp.ne.s32.totalorder %s221, %s222
      %p231 = scmp.eq.s32.totalorder %s40, 0
      %p232 = por %p230, %p231
      %p233 = scmp.ne.s32.totalorder %s221, %s222
      %p234 = scmp.eq.s32.totalorder %s41, 1
      %p235 = por %p233, %p234
      %p237 = scmp.ne.s32.totalorder %s222, %s236
      %p238 = scmp.eq.s32.totalorder %s41, 0
      %p239 = por %p237, %p238
      %s241 = sadd.s32 %s240, 1
      %p244 = scmp.eq.s32.totalorder %s35, 1
      %p245 = scmp.ne.s32.totalorder %s240, %s242
      %p246 = scmp.eq.s32.totalorder %s35, 0
      %p247 = por %p245, %p246
      %p248 = scmp.ne.s32.totalorder %s240, %s242
      %p249 = scmp.eq.s32.totalorder %s40, 1
      %p250 = por %p248, %p249
      %p251 = scmp.ne.s32.totalorder %s242, %s243
      %p252 = scmp.eq.s32.totalorder %s40, 0
      %p253 = por %p251, %p252
      %p254 = scmp.ne.s32.totalorder %s242, %s243
      %p255 = scmp.eq.s32.totalorder %s41, 1
      %p256 = por %p254, %p255
      %p258 = scmp.ne.s32.totalorder %s243, %s257
      %p259 = scmp.eq.s32.totalorder %s41, 0
      %p260 = por %p258, %p259
      %s262 = sadd.s32 %s261, 1
      %p265 = scmp.eq.s32.totalorder %s35, 1
      %p266 = scmp.ne.s32.totalorder %s261, %s263
      %p267 = scmp.eq.s32.totalorder %s35, 0
      %p268 = por %p266, %p267
      %p269 = scmp.ne.s32.totalorder %s261, %s263
      %p270 = scmp.eq.s32.totalorder %s40, 1
      %p271 = por %p269, %p270
      %p272 = scmp.ne.s32.totalorder %s263, %s264
      %p273 = scmp.eq.s32.totalorder %s40, 0
      %p274 = por %p272, %p273
      %p275 = scmp.ne.s32.totalorder %s263, %s264
      %p276 = scmp.eq.s32.totalorder %s41, 1
      %p277 = por %p275, %p276
      %p279 = scmp.ne.s32.totalorder %s264, %s278
      %p280 = scmp.eq.s32.totalorder %s41, 0
      %p281 = por %p279, %p280
      %s283 = sadd.s32 %s282, 1
      %p286 = scmp.eq.s32.totalorder %s35, 1
      %p287 = scmp.ne.s32.totalorder %s282, %s284
      %p288 = scmp.eq.s32.totalorder %s35, 0
      %p289 = por %p287, %p288
      %p290 = scmp.ne.s32.totalorder %s282, %s284
      %p291 = scmp.eq.s32.totalorder %s40, 1
      %p292 = por %p290, %p291
      %p293 = scmp.ne.s32.totalorder %s284, %s285
      %p294 = scmp.eq.s32.totalorder %s40, 0
      %p295 = por %p293, %p294
      %p296 = scmp.ne.s32.totalorder %s284, %s285
      %p297 = scmp.eq.s32.totalorder %s41, 1
      %p298 = por %p296, %p297
      %p300 = scmp.ne.s32.totalorder %s285, %s299
      %p301 = scmp.eq.s32.totalorder %s41, 0
      %p302 = por %p300, %p301
      %s303 = ssub.s32 %s42, %s54
      %s304 = ssub.s32 %s43, %s50
      %s305 = sor.u32 %s303, %s304
      %p306 = scmp.eq.s32.totalorder %s305, 0
      %s308 = sadd.s32 %s307, 1
      %s309 = scalar_select %p306, %s307, %s308
      %p312 = pneg %p306
      %p313 = scmp.eq.s32.totalorder %s35, 1
      %p314 = por %p312, %p313
      %p315 = scmp.ne.s32.totalorder %s307, %s310
      %p316 = scmp.eq.s32.totalorder %s35, 0
      %p317 = por %p315, %p316
      %p318 = scmp.ne.s32.totalorder %s307, %s310
      %p319 = scmp.eq.s32.totalorder %s40, 1
      %p320 = por %p318, %p319
      %p321 = scmp.ne.s32.totalorder %s310, %s311
      %p322 = scmp.eq.s32.totalorder %s40, 0
      %p323 = por %p321, %p322
      %p324 = scmp.ne.s32.totalorder %s310, %s311
      %p325 = scmp.eq.s32.totalorder %s41, 1
      %p326 = por %p324, %p325
      %p328 = scmp.ne.s32.totalorder %s311, %s327
      %p329 = scmp.eq.s32.totalorder %s41, 0
      %p330 = por %p328, %p329
      %s331 = ssub.s32 %s42, %s54
      %s332 = ssub.s32 %s43, %s50
      %s333 = sor.u32 %s331, %s332
      %p334 = scmp.eq.s32.totalorder %s333, 0
      %s336 = sadd.s32 %s335, 1
      %s337 = scalar_select %p334, %s335, %s336
      %p340 = pneg %p334
      %p341 = scmp.eq.s32.totalorder %s35, 1
      %p342 = por %p340, %p341
      %p343 = scmp.ne.s32.totalorder %s335, %s338
      %p344 = scmp.eq.s32.totalorder %s35, 0
      %p345 = por %p343, %p344
      %p346 = scmp.ne.s32.totalorder %s335, %s338
      %p347 = scmp.eq.s32.totalorder %s40, 1
      %p348 = por %p346, %p347
      %p349 = scmp.ne.s32.totalorder %s338, %s339
      %p350 = scmp.eq.s32.totalorder %s40, 0
      %p351 = por %p349, %p350
      %p352 = scmp.ne.s32.totalorder %s338, %s339
      %p353 = scmp.eq.s32.totalorder %s41, 1
      %p354 = por %p352, %p353
      %p356 = scmp.ne.s32.totalorder %s339, %s355
      %p357 = scmp.eq.s32.totalorder %s41, 0
      %p358 = por %p356, %p357
      %p359 = scmp.le.s32.totalorder 1, %s35
      %p360 = scmp.lt.s32.totalorder %s35, 3
      %p361 = pnand %p359, %p360
      %p362 = pneg %p361
      // Predicated region
      $region9: #{tpu_custom_call.1} parent=5 // pred_check
        _
      $region10: #{tpu_custom_call.1} parent=5 // pred_check_branch
        %364 = sbr.rel (%p361) target = $region12
      $region11: #{tpu_custom_call.1} parent=5 // pred_region
        %s365 = ssub.s32 %s35, 1
        // Predicated region
        $region13: #{tpu_custom_call.1} parent=11 // pred_check
          %p366 = pneg %p148
        $region14: #{tpu_custom_call.1} parent=11 // pred_check_branch
          %368 = sbr.rel (%p366) target = $region16
        $region15: #{tpu_custom_call.1} parent=11 // pred_region
          %s370 = ssub.s32 1024, 1024
          %371 = vsyncadd [#allocation9], %s370
          %s372 = sshll.u32 [#allocation8], 4
          %s373 = int_to_ptr.vmem [resolvable:$true] %s372
          %378 = dma.hbm_to_vmem [thread:$0]  %s3, 1024, %s373, [#allocation9], 64, 64, 4
        $region16: #{tpu_custom_call.1} parent=11 // pred_fallthru
          _
        // Predicated region
        $region17: #{tpu_custom_call.1} parent=11 // pred_check
          %p379 = pneg %p169
        $region18: #{tpu_custom_call.1} parent=11 // pred_check_branch
          %381 = sbr.rel (%p379) target = $region20
        $region19: #{tpu_custom_call.1} parent=11 // pred_region
          %s383 = ssub.s32 64, 64
          %384 = vsyncadd [#allocation9], %s383
          %s385 = sshll.u32 [#allocation10], 4
          %s386 = int_to_ptr.vmem [resolvable:$true] %s385
          %391 = dma.hbm_to_vmem [thread:$0]  %s4, 64, %s386, [#allocation9], 16, 16, 1
        $region20: #{tpu_custom_call.1} parent=11 // pred_fallthru
          _
        // Predicated region
        $region21: #{tpu_custom_call.1} parent=11 // pred_check
          %p392 = pneg %p190
        $region22: #{tpu_custom_call.1} parent=11 // pred_check_branch
          %394 = sbr.rel (%p392) target = $region24
        $region23: #{tpu_custom_call.1} parent=11 // pred_region
          %s396 = ssub.s32 2048, 2048
          %397 = vsyncadd [#allocation12], %s396
          %s398 = sshll.u32 [#allocation11], 4
          %s399 = int_to_ptr.vmem [resolvable:$true] %s398
          %404 = dma.hbm_to_vmem [thread:$0]  %s5, 2048, %s399, [#allocation12], 64, 64, 4
        $region24: #{tpu_custom_call.1} parent=11 // pred_fallthru
          _
        // Predicated region
        $region25: #{tpu_custom_call.1} parent=11 // pred_check
          %p405 = pneg %p211
        $region26: #{tpu_custom_call.1} parent=11 // pred_check_branch
          %407 = sbr.rel (%p405) target = $region28
        $region27: #{tpu_custom_call.1} parent=11 // pred_region
          %s409 = ssub.s32 4096, 4096
          %410 = vsyncadd [#allocation12], %s409
          %s411 = sshll.u32 [#allocation13], 4
          %s412 = int_to_ptr.vmem [resolvable:$true] %s411
          %417 = dma.hbm_to_vmem [thread:$0]  %s6, 4096, %s412, [#allocation12], 128, 128, 8
        $region28: #{tpu_custom_call.1} parent=11 // pred_fallthru
          _
        // Predicated region
        $region29: #{tpu_custom_call.1} parent=11 // pred_check
          %p418 = pneg %p232
        $region30: #{tpu_custom_call.1} parent=11 // pred_check_branch
          %420 = sbr.rel (%p418) target = $region32
        $region31: #{tpu_custom_call.1} parent=11 // pred_region
          %s422 = ssub.s32 1024, 1024
          %423 = vsyncadd [#allocation15], %s422
          %s424 = sshll.u32 [#allocation14], 4
          %s425 = int_to_ptr.vmem [resolvable:$true] %s424
          %430 = dma.hbm_to_vmem [thread:$0]  %s7, 1024, %s425, [#allocation15], 64, 64, 4
        $region32: #{tpu_custom_call.1} parent=11 // pred_fallthru
          _
        // Predicated region
        $region33: #{tpu_custom_call.1} parent=11 // pred_check
          %p431 = pneg %p253
        $region34: #{tpu_custom_call.1} parent=11 // pred_check_branch
          %433 = sbr.rel (%p431) target = $region36
        $region35: #{tpu_custom_call.1} parent=11 // pred_region
          %s435 = ssub.s32 16, 16
          %436 = vsyncadd [#allocation15], %s435
          %s438 = sshll.u32 [#allocation16], 4
          %s439 = int_to_ptr.vmem [resolvable:$true] %s438
          %441 = dma.hbm_to_vmem [thread:$0]  %s8, 16, %s439, [#allocation15]
        $region36: #{tpu_custom_call.1} parent=11 // pred_fallthru
          _
        // Predicated region
        $region37: #{tpu_custom_call.1} parent=11 // pred_check
          %p442 = pneg %p274
        $region38: #{tpu_custom_call.1} parent=11 // pred_check_branch
          %444 = sbr.rel (%p442) target = $region40
        $region39: #{tpu_custom_call.1} parent=11 // pred_region
          %s446 = ssub.s32 16, 16
          %447 = vsyncadd [#allocation18], %s446
          %s449 = sshll.u32 [#allocation17], 4
          %s450 = int_to_ptr.vmem [resolvable:$true] %s449
          %452 = dma.hbm_to_vmem [thread:$0]  %s9, 16, %s450, [#allocation18]
        $region40: #{tpu_custom_call.1} parent=11 // pred_fallthru
          _
        // Predicated region
        $region41: #{tpu_custom_call.1} parent=11 // pred_check
          %p453 = pneg %p295
        $region42: #{tpu_custom_call.1} parent=11 // pred_check_branch
          %455 = sbr.rel (%p453) target = $region44
        $region43: #{tpu_custom_call.1} parent=11 // pred_region
          %s457 = ssub.s32 16, 16
          %458 = vsyncadd [#allocation18], %s457
          %s460 = sshll.u32 [#allocation19], 4
          %s461 = int_to_ptr.vmem [resolvable:$true] %s460
          %463 = dma.hbm_to_vmem [thread:$0]  %s10, 16, %s461, [#allocation18]
        $region44: #{tpu_custom_call.1} parent=11 // pred_fallthru
          _
      $region12: #{tpu_custom_call.1} parent=5 // pred_fallthru
        _
      %p464 = scmp.lt.s32.totalorder %s35, 2
      // Predicated region
      $region45: #{tpu_custom_call.1} parent=5 // pred_check
        %p465 = pneg %p464
      $region46: #{tpu_custom_call.1} parent=5 // pred_check_branch
        %467 = sbr.rel (%p465) target = $region48
      $region47: #{tpu_custom_call.1} parent=5 // pred_region
        // Predicated region
        $region49: #{tpu_custom_call.1} parent=47 // pred_check
          %p468 = pneg %p69
        $region50: #{tpu_custom_call.1} parent=47 // pred_check_branch
          %470 = sbr.rel (%p468) target = $region52
        $region51: #{tpu_custom_call.1} parent=47 // pred_region
          %s471 = sand.u32 %s59, 1
          %s472 = scalar_lea.sflag [#allocation3], %s471
          %s473 = sand.u32 %s59, 1
          %s474 = smul.addr %s473, 8
          %s475 = scalar_lea.vmem [#allocation2], %s474
          %s477 = ssub.s32 128, 128
          %478 = vsyncadd %s472, %s477
          %s479 = sadd.s32 %s43, %s42
          %s480 = smul.addr %s479, 128
          %s481 = scalar_lea.hbm %s0, %s480
          %s483 = sshll.u32 %s475, 4
          %s484 = int_to_ptr.vmem [resolvable:$true] %s483
          %486 = dma.hbm_to_vmem [thread:$0]  %s481, 128, %s484, %s472
        $region52: #{tpu_custom_call.1} parent=47 // pred_fallthru
          _
        // Predicated region
        $region53: #{tpu_custom_call.1} parent=47 // pred_check
          %p487 = pneg %p95
        $region54: #{tpu_custom_call.1} parent=47 // pred_check_branch
          %489 = sbr.rel (%p487) target = $region56
        $region55: #{tpu_custom_call.1} parent=47 // pred_region
          %s490 = sand.u32 %s35, 1
          %s491 = scalar_lea.sflag [#allocation6], %s490
          %s492 = sand.u32 %s85, 1
          %s493 = smul.addr %s492, 8
          %s494 = scalar_lea.vmem [#allocation5], %s493
          %s496 = ssub.s32 128, 128
          %497 = vsyncadd %s491, %s496
          %s498 = smul.addr %s42, 2
          %s499 = smul.addr %s498, 64
          %s500 = scalar_lea.hbm %s1, %s499
          %s501 = sshll.u32 %s494, 4
          %s502 = int_to_ptr.vmem [resolvable:$true] %s501
          %507 = dma.hbm_to_vmem [thread:$0]  %s500, 128, %s502, %s491, 64, 64, 4
        $region56: #{tpu_custom_call.1} parent=47 // pred_fallthru
          _
        // Predicated region
        $region57: #{tpu_custom_call.1} parent=47 // pred_check
          %p508 = pneg %p121
        $region58: #{tpu_custom_call.1} parent=47 // pred_check_branch
          %510 = sbr.rel (%p508) target = $region60
        $region59: #{tpu_custom_call.1} parent=47 // pred_region
          %s511 = sand.u32 %s35, 1
          %s512 = scalar_lea.sflag [#allocation6], %s511
          %s513 = sand.u32 %s111, 1
          %s514 = scalar_lea.vmem [#allocation7], %s513
          %s516 = ssub.s32 16, 16
          %517 = vsyncadd %s512, %s516
          %s518 = smul.addr %s42, 16
          %s519 = scalar_lea.hbm %s2, %s518
          %s521 = sshll.u32 %s514, 4
          %s522 = int_to_ptr.vmem [resolvable:$true] %s521
          %524 = dma.hbm_to_vmem [thread:$0]  %s519, 16, %s522, %s512
        $region60: #{tpu_custom_call.1} parent=47 // pred_fallthru
          _
      $region48: #{tpu_custom_call.1} parent=5 // pred_fallthru
        _
      %p525 = scmp.le.s32.totalorder 1, %s35
      %p526 = scmp.lt.s32.totalorder %s35, 3
      %p527 = pnand %p525, %p526
      %p528 = pneg %p527
      // Predicated region
      $region61: #{tpu_custom_call.1} parent=5 // pred_check
        _
      $region62: #{tpu_custom_call.1} parent=5 // pred_check_branch
        %530 = sbr.rel (%p527) target = $region64
      $region63: #{tpu_custom_call.1} parent=5 // pred_region
        %s531 = ssub.s32 %s35, 1
        %s532 = sand.u32 %s62, 1
        %s533 = scalar_lea.sflag [#allocation3], %s532
        %s534 = sand.u32 %s62, 1
        %s535 = smul.addr %s534, 8
        %s536 = scalar_lea.vmem [#allocation2], %s535
        // Predicated region
        $region65: #{tpu_custom_call.1} parent=63 // pred_check
          %p537 = pneg %p75
        $region66: #{tpu_custom_call.1} parent=63 // pred_check_branch
          %539 = sbr.rel (%p537) target = $region68
        $region67: #{tpu_custom_call.1} parent=63 // pred_region
          %540 = dma.done %s533, 128
        $region68: #{tpu_custom_call.1} parent=63 // pred_fallthru
          _
        %s541 = sand.u32 %s40, 1
        %s542 = scalar_lea.sflag [#allocation6], %s541
        %s543 = sand.u32 %s88, 1
        %s544 = smul.addr %s543, 8
        %s545 = scalar_lea.vmem [#allocation5], %s544
        // Predicated region
        $region69: #{tpu_custom_call.1} parent=63 // pred_check
          %p546 = pneg %p101
        $region70: #{tpu_custom_call.1} parent=63 // pred_check_branch
          %548 = sbr.rel (%p546) target = $region72
        $region71: #{tpu_custom_call.1} parent=63 // pred_region
          %549 = dma.done %s542, 128
        $region72: #{tpu_custom_call.1} parent=63 // pred_fallthru
          _
        %s550 = sand.u32 %s40, 1
        %s551 = scalar_lea.sflag [#allocation6], %s550
        %s552 = sand.u32 %s114, 1
        %s553 = scalar_lea.vmem [#allocation7], %s552
        // Predicated region
        $region73: #{tpu_custom_call.1} parent=63 // pred_check
          %p554 = pneg %p127
        $region74: #{tpu_custom_call.1} parent=63 // pred_check_branch
          %556 = sbr.rel (%p554) target = $region76
        $region75: #{tpu_custom_call.1} parent=63 // pred_region
          %557 = dma.done %s551, 16
        $region76: #{tpu_custom_call.1} parent=63 // pred_fallthru
          _
        // Predicated region
        $region77: #{tpu_custom_call.1} parent=63 // pred_check
          %p558 = pneg %p148
        $region78: #{tpu_custom_call.1} parent=63 // pred_check_branch
          %560 = sbr.rel (%p558) target = $region80
        $region79: #{tpu_custom_call.1} parent=63 // pred_region
          %561 = dma.done [#allocation9], 1024
        $region80: #{tpu_custom_call.1} parent=63 // pred_fallthru
          _
        // Predicated region
        $region81: #{tpu_custom_call.1} parent=63 // pred_check
          %p562 = pneg %p169
        $region82: #{tpu_custom_call.1} parent=63 // pred_check_branch
          %564 = sbr.rel (%p562) target = $region84
        $region83: #{tpu_custom_call.1} parent=63 // pred_region
          %565 = dma.done [#allocation9], 64
        $region84: #{tpu_custom_call.1} parent=63 // pred_fallthru
          _
        // Predicated region
        $region85: #{tpu_custom_call.1} parent=63 // pred_check
          %p566 = pneg %p190
        $region86: #{tpu_custom_call.1} parent=63 // pred_check_branch
          %568 = sbr.rel (%p566) target = $region88
        $region87: #{tpu_custom_call.1} parent=63 // pred_region
          %569 = dma.done [#allocation12], 2048
        $region88: #{tpu_custom_call.1} parent=63 // pred_fallthru
          _
        // Predicated region
        $region89: #{tpu_custom_call.1} parent=63 // pred_check
          %p570 = pneg %p211
        $region90: #{tpu_custom_call.1} parent=63 // pred_check_branch
          %572 = sbr.rel (%p570) target = $region92
        $region91: #{tpu_custom_call.1} parent=63 // pred_region
          %573 = dma.done [#allocation12], 4096
        $region92: #{tpu_custom_call.1} parent=63 // pred_fallthru
          _
        // Predicated region
        $region93: #{tpu_custom_call.1} parent=63 // pred_check
          %p574 = pneg %p232
        $region94: #{tpu_custom_call.1} parent=63 // pred_check_branch
          %576 = sbr.rel (%p574) target = $region96
        $region95: #{tpu_custom_call.1} parent=63 // pred_region
          %577 = dma.done [#allocation15], 1024
        $region96: #{tpu_custom_call.1} parent=63 // pred_fallthru
          _
        // Predicated region
        $region97: #{tpu_custom_call.1} parent=63 // pred_check
          %p578 = pneg %p253
        $region98: #{tpu_custom_call.1} parent=63 // pred_check_branch
          %580 = sbr.rel (%p578) target = $region100
        $region99: #{tpu_custom_call.1} parent=63 // pred_region
          %581 = dma.done [#allocation15], 16
        $region100: #{tpu_custom_call.1} parent=63 // pred_fallthru
          _
        // Predicated region
        $region101: #{tpu_custom_call.1} parent=63 // pred_check
          %p582 = pneg %p274
        $region102: #{tpu_custom_call.1} parent=63 // pred_check_branch
          %584 = sbr.rel (%p582) target = $region104
        $region103: #{tpu_custom_call.1} parent=63 // pred_region
          %585 = dma.done [#allocation18], 16
        $region104: #{tpu_custom_call.1} parent=63 // pred_fallthru
          _
        // Predicated region
        $region105: #{tpu_custom_call.1} parent=63 // pred_check
          %p586 = pneg %p295
        $region106: #{tpu_custom_call.1} parent=63 // pred_check_branch
          %588 = sbr.rel (%p586) target = $region108
        $region107: #{tpu_custom_call.1} parent=63 // pred_region
          %589 = dma.done [#allocation18], 16
        $region108: #{tpu_custom_call.1} parent=63 // pred_fallthru
          _
        %s590 = sand.u32 %s62, 1
        %s591 = scalar_lea.sflag [#allocation3], %s590
        %s592 = sand.u32 %s62, 1
        %s593 = smul.addr %s592, 8
        %s594 = scalar_lea.vmem [#allocation2], %s593
        %p595 = pneg %p75
        %p596 = pneg %p72
        %s597 = sand.u32 %s40, 1
        %s598 = scalar_lea.sflag [#allocation6], %s597
        %s599 = sand.u32 %s88, 1
        %s600 = smul.addr %s599, 8
        %s601 = scalar_lea.vmem [#allocation5], %s600
        %p602 = pneg %p101
        %p603 = pneg %p98
        %s604 = sand.u32 %s40, 1
        %s605 = scalar_lea.sflag [#allocation6], %s604
        %s606 = sand.u32 %s114, 1
        %s607 = scalar_lea.vmem [#allocation7], %s606
        %p608 = pneg %p127
        %p609 = pneg %p124
        %p610 = pneg %p148
        %p611 = pneg %p145
        %p612 = pneg %p169
        %p613 = pneg %p166
        %p614 = pneg %p190
        %p615 = pneg %p187
        %p616 = pneg %p211
        %p617 = pneg %p208
        %p618 = pneg %p232
        %p619 = pneg %p229
        %p620 = pneg %p253
        %p621 = pneg %p250
        %p622 = pneg %p274
        %p623 = pneg %p271
        %p624 = pneg %p295
        %p625 = pneg %p292
        %p626 = pneg %p323
        %p627 = pneg %p320
        %s628 = sand.u32 %s310, 1
        %s629 = scalar_lea.sflag [#allocation4], %s628
        %s630 = sand.u32 %s310, 1
        %s631 = smul.addr %s630, 8
        %s632 = scalar_lea.vmem [#allocation20], %s631
        %p633 = pneg %p351
        %p634 = pneg %p348
        %s635 = sand.u32 %s338, 1
        %s636 = scalar_lea.sflag [#allocation22], %s635
        %s637 = sand.u32 %s338, 1
        %s638 = smul.addr %s637, 32
        %s639 = scalar_lea.vmem [#allocation21], %s638
        %v641 = vld [vmem:[%s536] sm:$0xff]
        %v642 = vld [vmem:[%s545] sm:$0xf]
        %v643 = vld [vmem:[%s545 + $0x4] sm:$0xf]
        %v644 = vld [vmem:[%s553] sm:$0x1]
        %v645 = vpack.c.bf16 %v641, %v641
        %v646 = vld [vmem:[#allocation11] sm:$0xf]
        %v647 = vld [vmem:[#allocation11 + $0x4] sm:$0xf]
        %v648 = vld [vmem:[#allocation11 + $0x8] sm:$0xf]
        %v649 = vld [vmem:[#allocation11 + $0xc] sm:$0xf]
        %v650 = vld [vmem:[#allocation11 + $0x10] sm:$0xf]
        %v651 = vld [vmem:[#allocation11 + $0x14] sm:$0xf]
        %v652 = vld [vmem:[#allocation11 + $0x18] sm:$0xf]
        %v653 = vld [vmem:[#allocation11 + $0x1c] sm:$0xf]
        %v654 = vld [vmem:[#allocation11 + $0x20] sm:$0xf]
        %v655 = vld [vmem:[#allocation11 + $0x24] sm:$0xf]
        %v656 = vld [vmem:[#allocation11 + $0x28] sm:$0xf]
        %v657 = vld [vmem:[#allocation11 + $0x2c] sm:$0xf]
        %v658 = vld [vmem:[#allocation11 + $0x30] sm:$0xf]
        %v659 = vld [vmem:[#allocation11 + $0x34] sm:$0xf]
        %v660 = vld [vmem:[#allocation11 + $0x38] sm:$0xf]
        %v661 = vld [vmem:[#allocation11 + $0x3c] sm:$0xf]
        %v662 = vld [vmem:[#allocation11 + $0x40] sm:$0xf]
        %v663 = vld [vmem:[#allocation11 + $0x44] sm:$0xf]
        %v664 = vld [vmem:[#allocation11 + $0x48] sm:$0xf]
        %v665 = vld [vmem:[#allocation11 + $0x4c] sm:$0xf]
        %v666 = vld [vmem:[#allocation11 + $0x50] sm:$0xf]
        %v667 = vld [vmem:[#allocation11 + $0x54] sm:$0xf]
        %v668 = vld [vmem:[#allocation11 + $0x58] sm:$0xf]
        %v669 = vld [vmem:[#allocation11 + $0x5c] sm:$0xf]
        %v670 = vld [vmem:[#allocation11 + $0x60] sm:$0xf]
        %v671 = vld [vmem:[#allocation11 + $0x64] sm:$0xf]
        %v672 = vld [vmem:[#allocation11 + $0x68] sm:$0xf]
        %v673 = vld [vmem:[#allocation11 + $0x6c] sm:$0xf]
        %v674 = vld [vmem:[#allocation11 + $0x70] sm:$0xf]
        %v675 = vld [vmem:[#allocation11 + $0x74] sm:$0xf]
        %v676 = vld [vmem:[#allocation11 + $0x78] sm:$0xf]
        %v677 = vld [vmem:[#allocation11 + $0x7c] sm:$0xf]
        %v678 = vld [vmem:[#allocation13] sm:$0xff]
        %v679 = vld [vmem:[#allocation13 + $0x8] sm:$0xff]
        %v680 = vld [vmem:[#allocation13 + $0x10] sm:$0xff]
        %v681 = vld [vmem:[#allocation13 + $0x18] sm:$0xff]
        %v682 = vld [vmem:[#allocation13 + $0x20] sm:$0xff]
        %v683 = vld [vmem:[#allocation13 + $0x28] sm:$0xff]
        %v684 = vld [vmem:[#allocation13 + $0x30] sm:$0xff]
        %v685 = vld [vmem:[#allocation13 + $0x38] sm:$0xff]
        %v686 = vld [vmem:[#allocation13 + $0x40] sm:$0xff]
        %v687 = vld [vmem:[#allocation13 + $0x48] sm:$0xff]
        %v688 = vld [vmem:[#allocation13 + $0x50] sm:$0xff]
        %v689 = vld [vmem:[#allocation13 + $0x58] sm:$0xff]
        %v690 = vld [vmem:[#allocation13 + $0x60] sm:$0xff]
        %v691 = vld [vmem:[#allocation13 + $0x68] sm:$0xff]
        %v692 = vld [vmem:[#allocation13 + $0x70] sm:$0xff]
        %v693 = vld [vmem:[#allocation13 + $0x78] sm:$0xff]
        %v694 = vld [vmem:[#allocation13 + $0x80] sm:$0xff]
        %v695 = vld [vmem:[#allocation13 + $0x88] sm:$0xff]
        %v696 = vld [vmem:[#allocation13 + $0x90] sm:$0xff]
        %v697 = vld [vmem:[#allocation13 + $0x98] sm:$0xff]
        %v698 = vld [vmem:[#allocation13 + $0xa0] sm:$0xff]
        %v699 = vld [vmem:[#allocation13 + $0xa8] sm:$0xff]
        %v700 = vld [vmem:[#allocation13 + $0xb0] sm:$0xff]
        %v701 = vld [vmem:[#allocation13 + $0xb8] sm:$0xff]
        %v702 = vld [vmem:[#allocation13 + $0xc0] sm:$0xff]
        %v703 = vld [vmem:[#allocation13 + $0xc8] sm:$0xff]
        %v704 = vld [vmem:[#allocation13 + $0xd0] sm:$0xff]
        %v705 = vld [vmem:[#allocation13 + $0xd8] sm:$0xff]
        %v706 = vld [vmem:[#allocation13 + $0xe0] sm:$0xff]
        %v707 = vld [vmem:[#allocation13 + $0xe8] sm:$0xff]
        %v708 = vld [vmem:[#allocation13 + $0xf0] sm:$0xff]
        %v709 = vld [vmem:[#allocation13 + $0xf8] sm:$0xff]
        %711 = vset.pattern.permute.xlu0 0
        %712 = vperm.xlu0 %711, %v678
        %v713 = vpop.permute.xlu0 %712
        %716 = vset.pattern.permute.xlu0 0
        %717 = vperm.xlu0 %716, %v679
        %v718 = vpop.permute.xlu0 %717
        %721 = vset.pattern.permute.xlu0 0
        %722 = vperm.xlu0 %721, %v680
        %v723 = vpop.permute.xlu0 %722
        %726 = vset.pattern.permute.xlu0 0
        %727 = vperm.xlu0 %726, %v681
        %v728 = vpop.permute.xlu0 %727
        %731 = vset.pattern.permute.xlu0 0
        %732 = vperm.xlu0 %731, %v682
        %v733 = vpop.permute.xlu0 %732
        %736 = vset.pattern.permute.xlu0 0
        %737 = vperm.xlu0 %736, %v683
        %v738 = vpop.permute.xlu0 %737
        %741 = vset.pattern.permute.xlu0 0
        %742 = vperm.xlu0 %741, %v684
        %v743 = vpop.permute.xlu0 %742
        %746 = vset.pattern.permute.xlu0 0
        %747 = vperm.xlu0 %746, %v685
        %v748 = vpop.permute.xlu0 %747
        %751 = vset.pattern.permute.xlu0 0
        %752 = vperm.xlu0 %751, %v686
        %v753 = vpop.permute.xlu0 %752
        %756 = vset.pattern.permute.xlu0 0
        %757 = vperm.xlu0 %756, %v687
        %v758 = vpop.permute.xlu0 %757
        %761 = vset.pattern.permute.xlu0 0
        %762 = vperm.xlu0 %761, %v688
        %v763 = vpop.permute.xlu0 %762
        %766 = vset.pattern.permute.xlu0 0
        %767 = vperm.xlu0 %766, %v689
        %v768 = vpop.permute.xlu0 %767
        %771 = vset.pattern.permute.xlu0 0
        %772 = vperm.xlu0 %771, %v690
        %v773 = vpop.permute.xlu0 %772
        %776 = vset.pattern.permute.xlu0 0
        %777 = vperm.xlu0 %776, %v691
        %v778 = vpop.permute.xlu0 %777
        %781 = vset.pattern.permute.xlu0 0
        %782 = vperm.xlu0 %781, %v692
        %v783 = vpop.permute.xlu0 %782
        %786 = vset.pattern.permute.xlu0 0
        %787 = vperm.xlu0 %786, %v693
        %v788 = vpop.permute.xlu0 %787
        %791 = vset.pattern.permute.xlu0 0
        %792 = vperm.xlu0 %791, %v694
        %v793 = vpop.permute.xlu0 %792
        %796 = vset.pattern.permute.xlu0 0
        %797 = vperm.xlu0 %796, %v695
        %v798 = vpop.permute.xlu0 %797
        %801 = vset.pattern.permute.xlu0 0
        %802 = vperm.xlu0 %801, %v696
        %v803 = vpop.permute.xlu0 %802
        %806 = vset.pattern.permute.xlu0 0
        %807 = vperm.xlu0 %806, %v697
        %v808 = vpop.permute.xlu0 %807
        %811 = vset.pattern.permute.xlu0 0
        %812 = vperm.xlu0 %811, %v698
        %v813 = vpop.permute.xlu0 %812
        %816 = vset.pattern.permute.xlu0 0
        %817 = vperm.xlu0 %816, %v699
        %v818 = vpop.permute.xlu0 %817
        %821 = vset.pattern.permute.xlu0 0
        %822 = vperm.xlu0 %821, %v700
        %v823 = vpop.permute.xlu0 %822
        %826 = vset.pattern.permute.xlu0 0
        %827 = vperm.xlu0 %826, %v701
        %v828 = vpop.permute.xlu0 %827
        %831 = vset.pattern.permute.xlu0 0
        %832 = vperm.xlu0 %831, %v702
        %v833 = vpop.permute.xlu0 %832
        %836 = vset.pattern.permute.xlu0 0
        %837 = vperm.xlu0 %836, %v703
        %v838 = vpop.permute.xlu0 %837
        %841 = vset.pattern.permute.xlu0 0
        %842 = vperm.xlu0 %841, %v704
        %v843 = vpop.permute.xlu0 %842
        %846 = vset.pattern.permute.xlu0 0
        %847 = vperm.xlu0 %846, %v705
        %v848 = vpop.permute.xlu0 %847
        %851 = vset.pattern.permute.xlu0 0
        %852 = vperm.xlu0 %851, %v706
        %v853 = vpop.permute.xlu0 %852
        %856 = vset.pattern.permute.xlu0 0
        %857 = vperm.xlu0 %856, %v707
        %v858 = vpop.permute.xlu0 %857
        %861 = vset.pattern.permute.xlu0 0
        %862 = vperm.xlu0 %861, %v708
        %v863 = vpop.permute.xlu0 %862
        %866 = vset.pattern.permute.xlu0 0
        %867 = vperm.xlu0 %866, %v709
        %v868 = vpop.permute.xlu0 %867
        %v902 = vunpack.c.l.b16 %v646
        %v903 = vunpack.c.l.b16 %v647
        %v904 = vunpack.c.l.b16 %v648
        %v905 = vunpack.c.l.b16 %v649
        %v906 = vunpack.c.l.b16 %v650
        %v907 = vunpack.c.l.b16 %v651
        %v908 = vunpack.c.l.b16 %v652
        %v909 = vunpack.c.l.b16 %v653
        %v910 = vunpack.c.l.b16 %v654
        %v911 = vunpack.c.l.b16 %v655
        %v912 = vunpack.c.l.b16 %v656
        %v913 = vunpack.c.l.b16 %v657
        %v914 = vunpack.c.l.b16 %v658
        %v915 = vunpack.c.l.b16 %v659
        %v916 = vunpack.c.l.b16 %v660
        %v917 = vunpack.c.l.b16 %v661
        %v918 = vunpack.c.l.b16 %v662
        %v919 = vunpack.c.l.b16 %v663
        %v920 = vunpack.c.l.b16 %v664
        %v921 = vunpack.c.l.b16 %v665
        %v922 = vunpack.c.l.b16 %v666
        %v923 = vunpack.c.l.b16 %v667
        %v924 = vunpack.c.l.b16 %v668
        %v925 = vunpack.c.l.b16 %v669
        %v926 = vunpack.c.l.b16 %v670
        %v927 = vunpack.c.l.b16 %v671
        %v928 = vunpack.c.l.b16 %v672
        %v929 = vunpack.c.l.b16 %v673
        %v930 = vunpack.c.l.b16 %v674
        %v931 = vunpack.c.l.b16 %v675
        %v932 = vunpack.c.l.b16 %v676
        %v933 = vunpack.c.l.b16 %v677
        %v934 = vpack.c.b16 %v903, %v902
        %v935 = vpack.c.b16 %v905, %v904
        %v936 = vpack.c.b16 %v907, %v906
        %v937 = vpack.c.b16 %v909, %v908
        %v938 = vpack.c.b16 %v911, %v910
        %v939 = vpack.c.b16 %v913, %v912
        %v940 = vpack.c.b16 %v915, %v914
        %v941 = vpack.c.b16 %v917, %v916
        %v942 = vpack.c.b16 %v919, %v918
        %v943 = vpack.c.b16 %v921, %v920
        %v944 = vpack.c.b16 %v923, %v922
        %v945 = vpack.c.b16 %v925, %v924
        %v946 = vpack.c.b16 %v927, %v926
        %v947 = vpack.c.b16 %v929, %v928
        %v948 = vpack.c.b16 %v931, %v930
        %v949 = vpack.c.b16 %v933, %v932
        %v968 = vunpack.c.l.b16 %v642
        %v969 = vunpack.c.l.b16 %v643
        %v970 = vpack.c.b16 %v969, %v968
        %972 = vmatprep.subr.bf16.mxu0 0
        %973 = vmatpush1.bf16.xpose.msra.mxu0 %v970
        %974 = vmatprep.subr.bf16.mxu0 0
        %975 = vmatpush1.bf16.xpose.msra.mxu0 0
        %976 = vmatprep.subr.bf16.mxu0 0
        %977 = vmatpush1.bf16.xpose.msra.mxu0 0
        %978 = vmatprep.subr.bf16.mxu0 0
        %979 = vmatpush1.bf16.xpose.msra.mxu0 0
        %980 = vmatprep.subr.bf16.mxu0 0
        %981 = vmatpush1.bf16.xpose.msra.mxu0 0
        %982 = vmatprep.subr.bf16.mxu0 0
        %983 = vmatpush1.bf16.xpose.msra.mxu0 0
        %984 = vmatprep.subr.bf16.mxu0 0
        %985 = vmatpush1.bf16.xpose.msra.mxu0 0
        %986 = vmatprep.subr.bf16.mxu0 0
        %987 = vmatpush1.bf16.xpose.msra.mxu0 0
        %988 = vmatprep.subr.bf16.mxu0 0
        %989 = vmatpush1.bf16.xpose.msra.mxu0 0
        %990 = vmatprep.subr.bf16.mxu0 0
        %991 = vmatpush1.bf16.xpose.msra.mxu0 0
        %992 = vmatprep.subr.bf16.mxu0 0
        %993 = vmatpush1.bf16.xpose.msra.mxu0 0
        %994 = vmatprep.subr.bf16.mxu0 0
        %995 = vmatpush1.bf16.xpose.msra.mxu0 0
        %996 = vmatprep.subr.bf16.mxu0 0
        %997 = vmatpush1.bf16.xpose.msra.mxu0 0
        %998 = vmatprep.subr.bf16.mxu0 0
        %999 = vmatpush1.bf16.xpose.msra.mxu0 0
        %1000 = vmatprep.subr.bf16.mxu0 0
        %1001 = vmatpush1.bf16.xpose.msra.mxu0 0
        %1002 = vmatprep.subr.bf16.mxu0 0
        %1003 = vmatpush1.bf16.xpose.msra.mxu0 0
        %1004 = vmatprep.mubr.bf16.mxu0 0
        %1005 = vmatmul.mubr.bf16.gmra.mrb[0].mxu0 %v934
        %v1006 = vpop.f32.mrb[0].mxu0
        %v1007 = vadd.f32 %v713, %v1006
        %v1008 = vpop.f32.mrb[0].mxu0
        %v1009 = vpop.f32.mrb[0].mxu0
        %v1010 = vadd.f32 %v718, %v1009
        %v1011 = vpop.f32.mrb[0].mxu0
        %1012 = vmatprep.mubr.bf16.mxu0 0
        %1013 = vmatmul.mubr.bf16.gmra.mrb[0].mxu0 %v935
        %v1014 = vpop.f32.mrb[0].mxu0
        %v1015 = vadd.f32 %v723, %v1014
        %v1016 = vpop.f32.mrb[0].mxu0
        %v1017 = vpop.f32.mrb[0].mxu0
        %v1018 = vadd.f32 %v728, %v1017
        %v1019 = vpop.f32.mrb[0].mxu0
        %1020 = vmatprep.mubr.bf16.mxu0 0
        %1021 = vmatmul.mubr.bf16.gmra.mrb[0].mxu0 %v936
        %v1022 = vpop.f32.mrb[0].mxu0
        %v1023 = vadd.f32 %v733, %v1022
        %v1024 = vpop.f32.mrb[0].mxu0
        %v1025 = vpop.f32.mrb[0].mxu0
        %v1026 = vadd.f32 %v738, %v1025
        %v1027 = vpop.f32.mrb[0].mxu0
        %1028 = vmatprep.mubr.bf16.mxu0 0
        %1029 = vmatmul.mubr.bf16.gmra.mrb[0].mxu0 %v937
        %v1030 = vpop.f32.mrb[0].mxu0
        %v1031 = vadd.f32 %v743, %v1030
        %v1032 = vpop.f32.mrb[0].mxu0
        %v1033 = vpop.f32.mrb[0].mxu0
        %v1034 = vadd.f32 %v748, %v1033
        %v1035 = vpop.f32.mrb[0].mxu0
        %1036 = vmatprep.mubr.bf16.mxu0 0
        %1037 = vmatmul.mubr.bf16.gmra.mrb[0].mxu0 %v938
        %v1038 = vpop.f32.mrb[0].mxu0
        %v1039 = vadd.f32 %v753, %v1038
        %v1040 = vpop.f32.mrb[0].mxu0
        %v1041 = vpop.f32.mrb[0].mxu0
        %v1042 = vadd.f32 %v758, %v1041
        %v1043 = vpop.f32.mrb[0].mxu0
        %1044 = vmatprep.mubr.bf16.mxu0 0
        %1045 = vmatmul.mubr.bf16.gmra.mrb[0].mxu0 %v939
        %v1046 = vpop.f32.mrb[0].mxu0
        %v1047 = vadd.f32 %v763, %v1046
        %v1048 = vpop.f32.mrb[0].mxu0
        %v1049 = vpop.f32.mrb[0].mxu0
        %v1050 = vadd.f32 %v768, %v1049
        %v1051 = vpop.f32.mrb[0].mxu0
        %1052 = vmatprep.mubr.bf16.mxu0 0
        %1053 = vmatmul.mubr.bf16.gmra.mrb[0].mxu0 %v940
        %v1054 = vpop.f32.mrb[0].mxu0
        %v1055 = vadd.f32 %v773, %v1054
        %v1056 = vpop.f32.mrb[0].mxu0
        %v1057 = vpop.f32.mrb[0].mxu0
        %v1058 = vadd.f32 %v778, %v1057
        %v1059 = vpop.f32.mrb[0].mxu0
        %1060 = vmatprep.mubr.bf16.mxu0 0
        %1061 = vmatmul.mubr.bf16.gmra.mrb[0].mxu0 %v941
        %v1062 = vpop.f32.mrb[0].mxu0
        %v1063 = vadd.f32 %v783, %v1062
        %v1064 = vpop.f32.mrb[0].mxu0
        %v1065 = vpop.f32.mrb[0].mxu0
        %v1066 = vadd.f32 %v788, %v1065
        %v1067 = vpop.f32.mrb[0].mxu0
        %1068 = vmatprep.mubr.bf16.mxu0 0
        %1069 = vmatmul.mubr.bf16.gmra.mrb[0].mxu0 %v942
        %v1070 = vpop.f32.mrb[0].mxu0
        %v1071 = vadd.f32 %v793, %v1070
        %v1072 = vpop.f32.mrb[0].mxu0
        %v1073 = vpop.f32.mrb[0].mxu0
        %v1074 = vadd.f32 %v798, %v1073
        %v1075 = vpop.f32.mrb[0].mxu0
        %1076 = vmatprep.mubr.bf16.mxu0 0
        %1077 = vmatmul.mubr.bf16.gmra.mrb[0].mxu0 %v943
        %v1078 = vpop.f32.mrb[0].mxu0
        %v1079 = vadd.f32 %v803, %v1078
        %v1080 = vpop.f32.mrb[0].mxu0
        %v1081 = vpop.f32.mrb[0].mxu0
        %v1082 = vadd.f32 %v808, %v1081
        %v1083 = vpop.f32.mrb[0].mxu0
        %1084 = vmatprep.mubr.bf16.mxu0 0
        %1085 = vmatmul.mubr.bf16.gmra.mrb[0].mxu0 %v944
        %v1086 = vpop.f32.mrb[0].mxu0
        %v1087 = vadd.f32 %v813, %v1086
        %v1088 = vpop.f32.mrb[0].mxu0
        %v1089 = vpop.f32.mrb[0].mxu0
        %v1090 = vadd.f32 %v818, %v1089
        %v1091 = vpop.f32.mrb[0].mxu0
        %1092 = vmatprep.mubr.bf16.mxu0 0
        %1093 = vmatmul.mubr.bf16.gmra.mrb[0].mxu0 %v945
        %v1094 = vpop.f32.mrb[0].mxu0
        %v1095 = vadd.f32 %v823, %v1094
        %v1096 = vpop.f32.mrb[0].mxu0
        %v1097 = vpop.f32.mrb[0].mxu0
        %v1098 = vadd.f32 %v828, %v1097
        %v1099 = vpop.f32.mrb[0].mxu0
        %1100 = vmatprep.mubr.bf16.mxu0 0
        %1101 = vmatmul.mubr.bf16.gmra.mrb[0].mxu0 %v946
        %v1102 = vpop.f32.mrb[0].mxu0
        %v1103 = vadd.f32 %v833, %v1102
        %v1104 = vpop.f32.mrb[0].mxu0
        %v1105 = vpop.f32.mrb[0].mxu0
        %v1106 = vadd.f32 %v838, %v1105
        %v1107 = vpop.f32.mrb[0].mxu0
        %1108 = vmatprep.mubr.bf16.mxu0 0
        %1109 = vmatmul.mubr.bf16.gmra.mrb[0].mxu0 %v947
        %v1110 = vpop.f32.mrb[0].mxu0
        %v1111 = vadd.f32 %v843, %v1110
        %v1112 = vpop.f32.mrb[0].mxu0
        %v1113 = vpop.f32.mrb[0].mxu0
        %v1114 = vadd.f32 %v848, %v1113
        %v1115 = vpop.f32.mrb[0].mxu0
        %1116 = vmatprep.mubr.bf16.mxu0 0
        %1117 = vmatmul.mubr.bf16.gmra.mrb[0].mxu0 %v948
        %v1118 = vpop.f32.mrb[0].mxu0
        %v1119 = vadd.f32 %v853, %v1118
        %v1120 = vpop.f32.mrb[0].mxu0
        %v1121 = vpop.f32.mrb[0].mxu0
        %v1122 = vadd.f32 %v858, %v1121
        %v1123 = vpop.f32.mrb[0].mxu0
        %1124 = vmatprep.mubr.bf16.mxu0 0
        %1125 = vmatmul.mubr.bf16.gmra.mrb[0].mxu0 %v949
        %v1126 = vpop.f32.mrb[0].mxu0
        %v1127 = vadd.f32 %v863, %v1126
        %v1128 = vpop.f32.mrb[0].mxu0
        %v1129 = vpop.f32.mrb[0].mxu0
        %v1130 = vadd.f32 %v868, %v1129
        %v1131 = vpop.f32.mrb[0].mxu0
        %1132 = vdwg.mxu0
        %v1133 = vpack.c.bf16 %v1010, %v1007
        %v1134 = vpack.c.bf16 %v1018, %v1015
        %v1135 = vpack.c.bf16 %v1026, %v1023
        %v1136 = vpack.c.bf16 %v1034, %v1031
        %v1137 = vpack.c.bf16 %v1042, %v1039
        %v1138 = vpack.c.bf16 %v1050, %v1047
        %v1139 = vpack.c.bf16 %v1058, %v1055
        %v1140 = vpack.c.bf16 %v1066, %v1063
        %v1141 = vpack.c.bf16 %v1074, %v1071
        %v1142 = vpack.c.bf16 %v1082, %v1079
        %v1143 = vpack.c.bf16 %v1090, %v1087
        %v1144 = vpack.c.bf16 %v1098, %v1095
        %v1145 = vpack.c.bf16 %v1106, %v1103
        %v1146 = vpack.c.bf16 %v1114, %v1111
        %v1147 = vpack.c.bf16 %v1122, %v1119
        %v1148 = vpack.c.bf16 %v1130, %v1127
        %vm1149 = vcmp.eq.f32.partialorder %v644, 0.0
        %v1150 = vsel %vm1149, -1e+30, 0.0
        %v1152 = vlaneseq
        %v1153 = vshrl.u32 %v1152, 7
        %v1154 = vsub.s32 0, %v1153
        %v1155 = vrot.slane %v1150, %v1154
        %v1157 = vld [vmem:[#allocation8] sm:$0xf]
        %v1158 = vld [vmem:[#allocation8 + $0x4] sm:$0xf]
        %v1159 = vld [vmem:[#allocation8 + $0x8] sm:$0xf]
        %v1160 = vld [vmem:[#allocation8 + $0xc] sm:$0xf]
        %v1161 = vld [vmem:[#allocation10] sm:$0x1]
        %v1163 = vlaneseq
        %v1164 = vshrl.u32 %v1163, 7
        %v1165 = vsub.s32 0, %v1164
        %v1166 = vrot.slane %v1161, %v1165
        %v1172 = vunpack.c.l.b16 %v1157
        %v1173 = vunpack.c.l.b16 %v1158
        %v1174 = vunpack.c.l.b16 %v1159
        %v1175 = vunpack.c.l.b16 %v1160
        %v1176 = vpack.c.b16 %v1173, %v1172
        %v1177 = vpack.c.b16 %v1175, %v1174
        %1180 = vmatprep.subr.bf16.mxu0 0
        %1181 = vmatpush1.bf16.xpose.msra.mxu0 %v1176
        %1182 = vmatprep.subr.bf16.mxu0 0
        %1183 = vmatpush1.bf16.xpose.msra.mxu0 %v1177
        %1184 = vmatprep.subr.bf16.mxu0 0
        %1185 = vmatpush1.bf16.xpose.msra.mxu0 0
        %1186 = vmatprep.subr.bf16.mxu0 0
        %1187 = vmatpush1.bf16.xpose.msra.mxu0 0
        %1188 = vmatprep.subr.bf16.mxu0 0
        %1189 = vmatpush1.bf16.xpose.msra.mxu0 0
        %1190 = vmatprep.subr.bf16.mxu0 0
        %1191 = vmatpush1.bf16.xpose.msra.mxu0 0
        %1192 = vmatprep.subr.bf16.mxu0 0
        %1193 = vmatpush1.bf16.xpose.msra.mxu0 0
        %1194 = vmatprep.subr.bf16.mxu0 0
        %1195 = vmatpush1.bf16.xpose.msra.mxu0 0
        %1196 = vmatprep.subr.bf16.mxu0 0
        %1197 = vmatpush1.bf16.xpose.msra.mxu0 0
        %1198 = vmatprep.subr.bf16.mxu0 0
        %1199 = vmatpush1.bf16.xpose.msra.mxu0 0
        %1200 = vmatprep.subr.bf16.mxu0 0
        %1201 = vmatpush1.bf16.xpose.msra.mxu0 0
        %1202 = vmatprep.subr.bf16.mxu0 0
        %1203 = vmatpush1.bf16.xpose.msra.mxu0 0
        %1204 = vmatprep.subr.bf16.mxu0 0
        %1205 = vmatpush1.bf16.xpose.msra.mxu0 0
        %1206 = vmatprep.subr.bf16.mxu0 0
        %1207 = vmatpush1.bf16.xpose.msra.mxu0 0
        %1208 = vmatprep.subr.bf16.mxu0 0
        %1209 = vmatpush1.bf16.xpose.msra.mxu0 0
        %1210 = vmatprep.subr.bf16.mxu0 0
        %1211 = vmatpush1.bf16.xpose.msra.mxu0 0
        %1212 = vmatprep.mubr.bf16.mxu0 0
        %1213 = vmatmul.mubr.bf16.gmra.mrb[0].mxu0 %v645
        %v1214 = vpop.f32.mrb[0].mxu0
        %v1215 = vadd.f32 %v1166, %v1214
        %v1216 = vpop.f32.mrb[0].mxu0
        %v1217 = vpop.f32.mrb[0].mxu0
        %v1218 = vpop.f32.mrb[0].mxu0
        %1219 = vdwg.mxu0
        %v1220 = vmul.f32 %v1215, 0.17677669
        %v1221 = vpack.c.bf16 %v1220, %v1220
        %vm1222 = vcmask 261120
        %v1224 = vsel %vm1222, %v1221, 0
        %1226 = vmatprep.subr.bf16.mxu0 0
        %1227 = vmatpush1.bf16.msra.mxu0 %v1133
        %1228 = vmatprep.subr.bf16.mxu0 0
        %1229 = vmatpush1.bf16.msra.mxu0 %v1134
        %1230 = vmatprep.subr.bf16.mxu0 0
        %1231 = vmatpush1.bf16.msra.mxu0 0
        %1232 = vmatprep.subr.bf16.mxu0 0
        %1233 = vmatpush1.bf16.msra.mxu0 0
        %1234 = vmatprep.subr.bf16.mxu0 0
        %1235 = vmatpush1.bf16.msra.mxu0 0
        %1236 = vmatprep.subr.bf16.mxu0 0
        %1237 = vmatpush1.bf16.msra.mxu0 0
        %1238 = vmatprep.subr.bf16.mxu0 0
        %1239 = vmatpush1.bf16.msra.mxu0 0
        %1240 = vmatprep.subr.bf16.mxu0 0
        %1241 = vmatpush1.bf16.msra.mxu0 0
        %1242 = vmatprep.subr.bf16.mxu0 0
        %1243 = vmatpush1.bf16.msra.mxu0 0
        %1244 = vmatprep.subr.bf16.mxu0 0
        %1245 = vmatpush1.bf16.msra.mxu0 0
        %1246 = vmatprep.subr.bf16.mxu0 0
        %1247 = vmatpush1.bf16.msra.mxu0 0
        %1248 = vmatprep.subr.bf16.mxu0 0
        %1249 = vmatpush1.bf16.msra.mxu0 0
        %1250 = vmatprep.subr.bf16.mxu0 0
        %1251 = vmatpush1.bf16.msra.mxu0 0
        %1252 = vmatprep.subr.bf16.mxu0 0
        %1253 = vmatpush1.bf16.msra.mxu0 0
        %1254 = vmatprep.subr.bf16.mxu0 0
        %1255 = vmatpush1.bf16.msra.mxu0 0
        %1256 = vmatprep.subr.bf16.mxu0 0
        %1257 = vmatpush1.bf16.msra.mxu0 0
        %1258 = vmatprep.mubr.bf16.mxu0 0
        %1259 = vmatmul.mubr.bf16.gmra.mrb[0].mxu0 %v1224
        %v1260 = vpop.f32.mrb[0].mxu0
        %v1261 = vadd.f32 %v1155, %v1260
        %v1262 = vpop.f32.mrb[0].mxu0
        %v1263 = vpop.f32.mrb[0].mxu0
        %v1264 = vpop.f32.mrb[0].mxu0
        %1265 = vdwg.mxu0
        %vm1266 = vcmask 130048
        %v1267 = vsel %vm1266, %v1261, -inf
        %1268 = vmax.xlane.f32.xlu0 %v1267
        %v1269 = vpop.xlane.xlu0 %1268
        %v1270 = vsub.f32 %v1261, %v1269
        %v1271 = vmul.f32 %v1270, 1.442695
        %v1272 = vpow.pop %v1271
        %v1273 = vsel %vm1266, %v1272, 0.0
        %1274 = vadd.xlane.f32.xlu0 %v1273
        %v1275 = vpop.xlane.xlu0 %1274
        %v1276 = vrcp.pop %v1275
        %v1277 = vmul.f32 %v1272, %v1276
        %1278 = vst.msk [vmem:[%s639] sm:$0xff] %vm1266, %v1277
        %v1279 = vpack.c.bf16 %v1277, %v1277
        %v1281 = vsel %vm1266, %v1279, 0
        %v1284 = vsel %vm1266, %v1141, 0
        %v1287 = vsel %vm1266, %v1142, 0
        %1289 = vmatprep.subr.bf16.mxu0 0
        %1290 = vmatpush1.bf16.xpose.msra.mxu0 %v1284
        %1291 = vmatprep.subr.bf16.mxu0 0
        %1292 = vmatpush1.bf16.xpose.msra.mxu0 %v1287
        %1293 = vmatprep.subr.bf16.mxu0 0
        %1294 = vmatpush1.bf16.xpose.msra.mxu0 0
        %1295 = vmatprep.subr.bf16.mxu0 0
        %1296 = vmatpush1.bf16.xpose.msra.mxu0 0
        %1297 = vmatprep.subr.bf16.mxu0 0
        %1298 = vmatpush1.bf16.xpose.msra.mxu0 0
        %1299 = vmatprep.subr.bf16.mxu0 0
        %1300 = vmatpush1.bf16.xpose.msra.mxu0 0
        %1301 = vmatprep.subr.bf16.mxu0 0
        %1302 = vmatpush1.bf16.xpose.msra.mxu0 0
        %1303 = vmatprep.subr.bf16.mxu0 0
        %1304 = vmatpush1.bf16.xpose.msra.mxu0 0
        %1305 = vmatprep.subr.bf16.mxu0 0
        %1306 = vmatpush1.bf16.xpose.msra.mxu0 0
        %1307 = vmatprep.subr.bf16.mxu0 0
        %1308 = vmatpush1.bf16.xpose.msra.mxu0 0
        %1309 = vmatprep.subr.bf16.mxu0 0
        %1310 = vmatpush1.bf16.xpose.msra.mxu0 0
        %1311 = vmatprep.subr.bf16.mxu0 0
        %1312 = vmatpush1.bf16.xpose.msra.mxu0 0
        %1313 = vmatprep.subr.bf16.mxu0 0
        %1314 = vmatpush1.bf16.xpose.msra.mxu0 0
        %1315 = vmatprep.subr.bf16.mxu0 0
        %1316 = vmatpush1.bf16.xpose.msra.mxu0 0
        %1317 = vmatprep.subr.bf16.mxu0 0
        %1318 = vmatpush1.bf16.xpose.msra.mxu0 0
        %1319 = vmatprep.subr.bf16.mxu0 0
        %1320 = vmatpush1.bf16.xpose.msra.mxu0 0
        %1321 = vmatprep.mubr.bf16.mxu0 0
        %1322 = vmatmul.mubr.bf16.gmra.mrb[0].mxu0 %v1281
        %v1323 = vpop.f32.mrb[0].mxu0
        %v1324 = vadd.f32 0.0, %v1323
        %v1325 = vpop.f32.mrb[0].mxu0
        %v1326 = vpop.f32.mrb[0].mxu0
        %v1327 = vpop.f32.mrb[0].mxu0
        %1328 = vdwg.mxu0
        %v1329 = vpack.c.bf16 %v1324, %v1324
        %v1330 = vld [vmem:[#allocation14] sm:$0xf]
        %v1331 = vld [vmem:[#allocation14 + $0x4] sm:$0xf]
        %v1332 = vld [vmem:[#allocation14 + $0x8] sm:$0xf]
        %v1333 = vld [vmem:[#allocation14 + $0xc] sm:$0xf]
        %s1334 = scalar_lea.vmem [#allocation8], 16
        %v1335 = vld [vmem:[%s1334] sm:$0xf]
        %v1336 = vld [vmem:[%s1334 + $0x4] sm:$0xf]
        %v1337 = vld [vmem:[%s1334 + $0x8] sm:$0xf]
        %v1338 = vld [vmem:[%s1334 + $0xc] sm:$0xf]
        %s1339 = scalar_lea.vmem [#allocation10], 1
        %v1340 = vld [vmem:[%s1339] sm:$0x1]
        %v1342 = vlaneseq
        %v1343 = vshrl.u32 %v1342, 7
        %v1344 = vsub.s32 0, %v1343
        %v1345 = vrot.slane %v1340, %v1344
        %v1351 = vunpack.c.l.b16 %v1335
        %v1352 = vunpack.c.l.b16 %v1336
        %v1353 = vunpack.c.l.b16 %v1337
        %v1354 = vunpack.c.l.b16 %v1338
        %v1355 = vpack.c.b16 %v1352, %v1351
        %v1356 = vpack.c.b16 %v1354, %v1353
        %1359 = vmatprep.subr.bf16.mxu0 0
        %1360 = vmatpush1.bf16.xpose.msra.mxu0 %v1355
        %1361 = vmatprep.subr.bf16.mxu0 0
        %1362 = vmatpush1.bf16.xpose.msra.mxu0 %v1356
        %1363 = vmatprep.subr.bf16.mxu0 0
        %1364 = vmatpush1.bf16.xpose.msra.mxu0 0
        %1365 = vmatprep.subr.bf16.mxu0 0
        %1366 = vmatpush1.bf16.xpose.msra.mxu0 0
        %1367 = vmatprep.subr.bf16.mxu0 0
        %1368 = vmatpush1.bf16.xpose.msra.mxu0 0
        %1369 = vmatprep.subr.bf16.mxu0 0
        %1370 = vmatpush1.bf16.xpose.msra.mxu0 0
        %1371 = vmatprep.subr.bf16.mxu0 0
        %1372 = vmatpush1.bf16.xpose.msra.mxu0 0
        %1373 = vmatprep.subr.bf16.mxu0 0
        %1374 = vmatpush1.bf16.xpose.msra.mxu0 0
        %1375 = vmatprep.subr.bf16.mxu0 0
        %1376 = vmatpush1.bf16.xpose.msra.mxu0 0
        %1377 = vmatprep.subr.bf16.mxu0 0
        %1378 = vmatpush1.bf16.xpose.msra.mxu0 0
        %1379 = vmatprep.subr.bf16.mxu0 0
        %1380 = vmatpush1.bf16.xpose.msra.mxu0 0
        %1381 = vmatprep.subr.bf16.mxu0 0
        %1382 = vmatpush1.bf16.xpose.msra.mxu0 0
        %1383 = vmatprep.subr.bf16.mxu0 0
        %1384 = vmatpush1.bf16.xpose.msra.mxu0 0
        %1385 = vmatprep.subr.bf16.mxu0 0
        %1386 = vmatpush1.bf16.xpose.msra.mxu0 0
        %1387 = vmatprep.subr.bf16.mxu0 0
        %1388 = vmatpush1.bf16.xpose.msra.mxu0 0
        %1389 = vmatprep.subr.bf16.mxu0 0
        %1390 = vmatpush1.bf16.xpose.msra.mxu0 0
        %1391 = vmatprep.mubr.bf16.mxu0 0
        %1392 = vmatmul.mubr.bf16.gmra.mrb[0].mxu0 %v645
        %v1393 = vpop.f32.mrb[0].mxu0
        %v1394 = vadd.f32 %v1345, %v1393
        %v1395 = vpop.f32.mrb[0].mxu0
        %v1396 = vpop.f32.mrb[0].mxu0
        %v1397 = vpop.f32.mrb[0].mxu0
        %1398 = vdwg.mxu0
        %v1399 = vmul.f32 %v1394, 0.17677669
        %v1400 = vpack.c.bf16 %v1399, %v1399
        %v1402 = vsel %vm1222, %v1400, 0
        %1404 = vmatprep.subr.bf16.mxu0 0
        %1405 = vmatpush1.bf16.msra.mxu0 %v1135
        %1406 = vmatprep.subr.bf16.mxu0 0
        %1407 = vmatpush1.bf16.msra.mxu0 %v1136
        %1408 = vmatprep.subr.bf16.mxu0 0
        %1409 = vmatpush1.bf16.msra.mxu0 0
        %1410 = vmatprep.subr.bf16.mxu0 0
        %1411 = vmatpush1.bf16.msra.mxu0 0
        %1412 = vmatprep.subr.bf16.mxu0 0
        %1413 = vmatpush1.bf16.msra.mxu0 0
        %1414 = vmatprep.subr.bf16.mxu0 0
        %1415 = vmatpush1.bf16.msra.mxu0 0
        %1416 = vmatprep.subr.bf16.mxu0 0
        %1417 = vmatpush1.bf16.msra.mxu0 0
        %1418 = vmatprep.subr.bf16.mxu0 0
        %1419 = vmatpush1.bf16.msra.mxu0 0
        %1420 = vmatprep.subr.bf16.mxu0 0
        %1421 = vmatpush1.bf16.msra.mxu0 0
        %1422 = vmatprep.subr.bf16.mxu0 0
        %1423 = vmatpush1.bf16.msra.mxu0 0
        %1424 = vmatprep.subr.bf16.mxu0 0
        %1425 = vmatpush1.bf16.msra.mxu0 0
        %1426 = vmatprep.subr.bf16.mxu0 0
        %1427 = vmatpush1.bf16.msra.mxu0 0
        %1428 = vmatprep.subr.bf16.mxu0 0
        %1429 = vmatpush1.bf16.msra.mxu0 0
        %1430 = vmatprep.subr.bf16.mxu0 0
        %1431 = vmatpush1.bf16.msra.mxu0 0
        %1432 = vmatprep.subr.bf16.mxu0 0
        %1433 = vmatpush1.bf16.msra.mxu0 0
        %1434 = vmatprep.subr.bf16.mxu0 0
        %1435 = vmatpush1.bf16.msra.mxu0 0
        %1436 = vmatprep.mubr.bf16.mxu0 0
        %1437 = vmatmul.mubr.bf16.gmra.mrb[0].mxu0 %v1402
        %v1438 = vpop.f32.mrb[0].mxu0
        %v1439 = vadd.f32 %v1155, %v1438
        %v1440 = vpop.f32.mrb[0].mxu0
        %v1441 = vpop.f32.mrb[0].mxu0
        %v1442 = vpop.f32.mrb[0].mxu0
        %1443 = vdwg.mxu0
        %v1444 = vsel %vm1266, %v1439, -inf
        %1445 = vmax.xlane.f32.xlu0 %v1444
        %v1446 = vpop.xlane.xlu0 %1445
        %v1447 = vsub.f32 %v1439, %v1446
        %v1448 = vmul.f32 %v1447, 1.442695
        %v1449 = vpow.pop %v1448
        %v1450 = vsel %vm1266, %v1449, 0.0
        %1451 = vadd.xlane.f32.xlu0 %v1450
        %v1452 = vpop.xlane.xlu0 %1451
        %v1453 = vrcp.pop %v1452
        %v1454 = vmul.f32 %v1449, %v1453
        %s1455 = scalar_lea.vmem %s639, 8 [#allocation21]
        %1456 = vst.msk [vmem:[%s1455] sm:$0xff] %vm1266, %v1454
        %v1457 = vpack.c.bf16 %v1454, %v1454
        %v1459 = vsel %vm1266, %v1457, 0
        %v1462 = vsel %vm1266, %v1143, 0
        %v1465 = vsel %vm1266, %v1144, 0
        %1467 = vmatprep.subr.bf16.mxu0 0
        %1468 = vmatpush1.bf16.xpose.msra.mxu0 %v1462
        %1469 = vmatprep.subr.bf16.mxu0 0
        %1470 = vmatpush1.bf16.xpose.msra.mxu0 %v1465
        %1471 = vmatprep.subr.bf16.mxu0 0
        %1472 = vmatpush1.bf16.xpose.msra.mxu0 0
        %1473 = vmatprep.subr.bf16.mxu0 0
        %1474 = vmatpush1.bf16.xpose.msra.mxu0 0
        %1475 = vmatprep.subr.bf16.mxu0 0
        %1476 = vmatpush1.bf16.xpose.msra.mxu0 0
        %1477 = vmatprep.subr.bf16.mxu0 0
        %1478 = vmatpush1.bf16.xpose.msra.mxu0 0
        %1479 = vmatprep.subr.bf16.mxu0 0
        %1480 = vmatpush1.bf16.xpose.msra.mxu0 0
        %1481 = vmatprep.subr.bf16.mxu0 0
        %1482 = vmatpush1.bf16.xpose.msra.mxu0 0
        %1483 = vmatprep.subr.bf16.mxu0 0
        %1484 = vmatpush1.bf16.xpose.msra.mxu0 0
        %1485 = vmatprep.subr.bf16.mxu0 0
        %1486 = vmatpush1.bf16.xpose.msra.mxu0 0
        %1487 = vmatprep.subr.bf16.mxu0 0
        %1488 = vmatpush1.bf16.xpose.msra.mxu0 0
        %1489 = vmatprep.subr.bf16.mxu0 0
        %1490 = vmatpush1.bf16.xpose.msra.mxu0 0
        %1491 = vmatprep.subr.bf16.mxu0 0
        %1492 = vmatpush1.bf16.xpose.msra.mxu0 0
        %1493 = vmatprep.subr.bf16.mxu0 0
        %1494 = vmatpush1.bf16.xpose.msra.mxu0 0
        %1495 = vmatprep.subr.bf16.mxu0 0
        %1496 = vmatpush1.bf16.xpose.msra.mxu0 0
        %1497 = vmatprep.subr.bf16.mxu0 0
        %1498 = vmatpush1.bf16.xpose.msra.mxu0 0
        %1499 = vmatprep.mubr.bf16.mxu0 0
        %1500 = vmatmul.mubr.bf16.gmra.mrb[0].mxu0 %v1459
        %v1501 = vpop.f32.mrb[0].mxu0
        %v1502 = vadd.f32 0.0, %v1501
        %v1503 = vpop.f32.mrb[0].mxu0
        %v1504 = vpop.f32.mrb[0].mxu0
        %v1505 = vpop.f32.mrb[0].mxu0
        %1506 = vdwg.mxu0
        %v1507 = vpack.c.bf16 %v1502, %v1502
        %s1508 = scalar_lea.vmem [#allocation14], 16
        %v1509 = vld [vmem:[%s1508] sm:$0xf]
        %v1510 = vld [vmem:[%s1508 + $0x4] sm:$0xf]
        %v1511 = vld [vmem:[%s1508 + $0x8] sm:$0xf]
        %v1512 = vld [vmem:[%s1508 + $0xc] sm:$0xf]
        %v1517 = vunpack.c.l.b16 %v1509
        %v1518 = vunpack.c.l.b16 %v1510
        %v1519 = vunpack.c.l.b16 %v1511
        %v1520 = vunpack.c.l.b16 %v1512
        %v1521 = vpack.c.b16 %v1518, %v1517
        %v1522 = vpack.c.b16 %v1520, %v1519
        %v1526 = vsel %vm1222, %v1507, 0
        %1528 = vmatprep.subr.bf16.mxu0 0
        %1529 = vmatpush1.bf16.msra.mxu0 %v1521
        %1530 = vmatprep.subr.bf16.mxu0 0
        %1531 = vmatpush1.bf16.msra.mxu0 %v1522
        %1532 = vmatprep.subr.bf16.mxu0 0
        %1533 = vmatpush1.bf16.msra.mxu0 0
        %1534 = vmatprep.subr.bf16.mxu0 0
        %1535 = vmatpush1.bf16.msra.mxu0 0
        %1536 = vmatprep.subr.bf16.mxu0 0
        %1537 = vmatpush1.bf16.msra.mxu0 0
        %1538 = vmatprep.subr.bf16.mxu0 0
        %1539 = vmatpush1.bf16.msra.mxu0 0
        %1540 = vmatprep.subr.bf16.mxu0 0
        %1541 = vmatpush1.bf16.msra.mxu0 0
        %1542 = vmatprep.subr.bf16.mxu0 0
        %1543 = vmatpush1.bf16.msra.mxu0 0
        %1544 = vmatprep.subr.bf16.mxu0 0
        %1545 = vmatpush1.bf16.msra.mxu0 0
        %1546 = vmatprep.subr.bf16.mxu0 0
        %1547 = vmatpush1.bf16.msra.mxu0 0
        %1548 = vmatprep.subr.bf16.mxu0 0
        %1549 = vmatpush1.bf16.msra.mxu0 0
        %1550 = vmatprep.subr.bf16.mxu0 0
        %1551 = vmatpush1.bf16.msra.mxu0 0
        %1552 = vmatprep.subr.bf16.mxu0 0
        %1553 = vmatpush1.bf16.msra.mxu0 0
        %1554 = vmatprep.subr.bf16.mxu0 0
        %1555 = vmatpush1.bf16.msra.mxu0 0
        %1556 = vmatprep.subr.bf16.mxu0 0
        %1557 = vmatpush1.bf16.msra.mxu0 0
        %1558 = vmatprep.subr.bf16.mxu0 0
        %1559 = vmatpush1.bf16.msra.mxu0 0
        %1560 = vmatprep.mubr.bf16.mxu0 0
        %1561 = vmatmul.mubr.bf16.gmra.mrb[0].mxu0 %v1526
        %v1562 = vpop.f32.mrb[0].mxu0
        %v1563 = vadd.f32 0.0, %v1562
        %v1564 = vpop.f32.mrb[0].mxu0
        %v1565 = vpop.f32.mrb[0].mxu0
        %v1566 = vpop.f32.mrb[0].mxu0
        %1567 = vdwg.mxu0
        %v1572 = vunpack.c.l.b16 %v1330
        %v1573 = vunpack.c.l.b16 %v1331
        %v1574 = vunpack.c.l.b16 %v1332
        %v1575 = vunpack.c.l.b16 %v1333
        %v1576 = vpack.c.b16 %v1573, %v1572
        %v1577 = vpack.c.b16 %v1575, %v1574
        %v1581 = vsel %vm1222, %v1329, 0
        %1583 = vmatprep.subr.bf16.mxu0 0
        %1584 = vmatpush1.bf16.msra.mxu0 %v1576
        %1585 = vmatprep.subr.bf16.mxu0 0
        %1586 = vmatpush1.bf16.msra.mxu0 %v1577
        %1587 = vmatprep.subr.bf16.mxu0 0
        %1588 = vmatpush1.bf16.msra.mxu0 0
        %1589 = vmatprep.subr.bf16.mxu0 0
        %1590 = vmatpush1.bf16.msra.mxu0 0
        %1591 = vmatprep.subr.bf16.mxu0 0
        %1592 = vmatpush1.bf16.msra.mxu0 0
        %1593 = vmatprep.subr.bf16.mxu0 0
        %1594 = vmatpush1.bf16.msra.mxu0 0
        %1595 = vmatprep.subr.bf16.mxu0 0
        %1596 = vmatpush1.bf16.msra.mxu0 0
        %1597 = vmatprep.subr.bf16.mxu0 0
        %1598 = vmatpush1.bf16.msra.mxu0 0
        %1599 = vmatprep.subr.bf16.mxu0 0
        %1600 = vmatpush1.bf16.msra.mxu0 0
        %1601 = vmatprep.subr.bf16.mxu0 0
        %1602 = vmatpush1.bf16.msra.mxu0 0
        %1603 = vmatprep.subr.bf16.mxu0 0
        %1604 = vmatpush1.bf16.msra.mxu0 0
        %1605 = vmatprep.subr.bf16.mxu0 0
        %1606 = vmatpush1.bf16.msra.mxu0 0
        %1607 = vmatprep.subr.bf16.mxu0 0
        %1608 = vmatpush1.bf16.msra.mxu0 0
        %1609 = vmatprep.subr.bf16.mxu0 0
        %1610 = vmatpush1.bf16.msra.mxu0 0
        %1611 = vmatprep.subr.bf16.mxu0 0
        %1612 = vmatpush1.bf16.msra.mxu0 0
        %1613 = vmatprep.subr.bf16.mxu0 0
        %1614 = vmatpush1.bf16.msra.mxu0 0
        %1615 = vmatprep.mubr.bf16.mxu0 0
        %1616 = vmatmul.mubr.bf16.gmra.mrb[0].mxu0 %v1581
        %v1617 = vpop.f32.mrb[0].mxu0
        %v1618 = vadd.f32 %v1563, %v1617
        %v1619 = vpop.f32.mrb[0].mxu0
        %v1620 = vpop.f32.mrb[0].mxu0
        %v1621 = vpop.f32.mrb[0].mxu0
        %1622 = vdwg.mxu0
        %s1623 = scalar_lea.vmem [#allocation8], 32
        %v1624 = vld [vmem:[%s1623] sm:$0xf]
        %v1625 = vld [vmem:[%s1623 + $0x4] sm:$0xf]
        %v1626 = vld [vmem:[%s1623 + $0x8] sm:$0xf]
        %v1627 = vld [vmem:[%s1623 + $0xc] sm:$0xf]
        %s1628 = scalar_lea.vmem [#allocation10], 2
        %v1629 = vld [vmem:[%s1628] sm:$0x1]
        %v1631 = vlaneseq
        %v1632 = vshrl.u32 %v1631, 7
        %v1633 = vsub.s32 0, %v1632
        %v1634 = vrot.slane %v1629, %v1633
        %v1640 = vunpack.c.l.b16 %v1624
        %v1641 = vunpack.c.l.b16 %v1625
        %v1642 = vunpack.c.l.b16 %v1626
        %v1643 = vunpack.c.l.b16 %v1627
        %v1644 = vpack.c.b16 %v1641, %v1640
        %v1645 = vpack.c.b16 %v1643, %v1642
        %1648 = vmatprep.subr.bf16.mxu0 0
        %1649 = vmatpush1.bf16.xpose.msra.mxu0 %v1644
        %1650 = vmatprep.subr.bf16.mxu0 0
        %1651 = vmatpush1.bf16.xpose.msra.mxu0 %v1645
        %1652 = vmatprep.subr.bf16.mxu0 0
        %1653 = vmatpush1.bf16.xpose.msra.mxu0 0
        %1654 = vmatprep.subr.bf16.mxu0 0
        %1655 = vmatpush1.bf16.xpose.msra.mxu0 0
        %1656 = vmatprep.subr.bf16.mxu0 0
        %1657 = vmatpush1.bf16.xpose.msra.mxu0 0
        %1658 = vmatprep.subr.bf16.mxu0 0
        %1659 = vmatpush1.bf16.xpose.msra.mxu0 0
        %1660 = vmatprep.subr.bf16.mxu0 0
        %1661 = vmatpush1.bf16.xpose.msra.mxu0 0
        %1662 = vmatprep.subr.bf16.mxu0 0
        %1663 = vmatpush1.bf16.xpose.msra.mxu0 0
        %1664 = vmatprep.subr.bf16.mxu0 0
        %1665 = vmatpush1.bf16.xpose.msra.mxu0 0
        %1666 = vmatprep.subr.bf16.mxu0 0
        %1667 = vmatpush1.bf16.xpose.msra.mxu0 0
        %1668 = vmatprep.subr.bf16.mxu0 0
        %1669 = vmatpush1.bf16.xpose.msra.mxu0 0
        %1670 = vmatprep.subr.bf16.mxu0 0
        %1671 = vmatpush1.bf16.xpose.msra.mxu0 0
        %1672 = vmatprep.subr.bf16.mxu0 0
        %1673 = vmatpush1.bf16.xpose.msra.mxu0 0
        %1674 = vmatprep.subr.bf16.mxu0 0
        %1675 = vmatpush1.bf16.xpose.msra.mxu0 0
        %1676 = vmatprep.subr.bf16.mxu0 0
        %1677 = vmatpush1.bf16.xpose.msra.mxu0 0
        %1678 = vmatprep.subr.bf16.mxu0 0
        %1679 = vmatpush1.bf16.xpose.msra.mxu0 0
        %1680 = vmatprep.mubr.bf16.mxu0 0
        %1681 = vmatmul.mubr.bf16.gmra.mrb[0].mxu0 %v645
        %v1682 = vpop.f32.mrb[0].mxu0
        %v1683 = vadd.f32 %v1634, %v1682
        %v1684 = vpop.f32.mrb[0].mxu0
        %v1685 = vpop.f32.mrb[0].mxu0
        %v1686 = vpop.f32.mrb[0].mxu0
        %1687 = vdwg.mxu0
        %v1688 = vmul.f32 %v1683, 0.17677669
        %v1689 = vpack.c.bf16 %v1688, %v1688
        %v1691 = vsel %vm1222, %v1689, 0
        %1693 = vmatprep.subr.bf16.mxu0 0
        %1694 = vmatpush1.bf16.msra.mxu0 %v1137
        %1695 = vmatprep.subr.bf16.mxu0 0
        %1696 = vmatpush1.bf16.msra.mxu0 %v1138
        %1697 = vmatprep.subr.bf16.mxu0 0
        %1698 = vmatpush1.bf16.msra.mxu0 0
        %1699 = vmatprep.subr.bf16.mxu0 0
        %1700 = vmatpush1.bf16.msra.mxu0 0
        %1701 = vmatprep.subr.bf16.mxu0 0
        %1702 = vmatpush1.bf16.msra.mxu0 0
        %1703 = vmatprep.subr.bf16.mxu0 0
        %1704 = vmatpush1.bf16.msra.mxu0 0
        %1705 = vmatprep.subr.bf16.mxu0 0
        %1706 = vmatpush1.bf16.msra.mxu0 0
        %1707 = vmatprep.subr.bf16.mxu0 0
        %1708 = vmatpush1.bf16.msra.mxu0 0
        %1709 = vmatprep.subr.bf16.mxu0 0
        %1710 = vmatpush1.bf16.msra.mxu0 0
        %1711 = vmatprep.subr.bf16.mxu0 0
        %1712 = vmatpush1.bf16.msra.mxu0 0
        %1713 = vmatprep.subr.bf16.mxu0 0
        %1714 = vmatpush1.bf16.msra.mxu0 0
        %1715 = vmatprep.subr.bf16.mxu0 0
        %1716 = vmatpush1.bf16.msra.mxu0 0
        %1717 = vmatprep.subr.bf16.mxu0 0
        %1718 = vmatpush1.bf16.msra.mxu0 0
        %1719 = vmatprep.subr.bf16.mxu0 0
        %1720 = vmatpush1.bf16.msra.mxu0 0
        %1721 = vmatprep.subr.bf16.mxu0 0
        %1722 = vmatpush1.bf16.msra.mxu0 0
        %1723 = vmatprep.subr.bf16.mxu0 0
        %1724 = vmatpush1.bf16.msra.mxu0 0
        %1725 = vmatprep.mubr.bf16.mxu0 0
        %1726 = vmatmul.mubr.bf16.gmra.mrb[0].mxu0 %v1691
        %v1727 = vpop.f32.mrb[0].mxu0
        %v1728 = vadd.f32 %v1155, %v1727
        %v1729 = vpop.f32.mrb[0].mxu0
        %v1730 = vpop.f32.mrb[0].mxu0
        %v1731 = vpop.f32.mrb[0].mxu0
        %1732 = vdwg.mxu0
        %v1733 = vsel %vm1266, %v1728, -inf
        %1734 = vmax.xlane.f32.xlu0 %v1733
        %v1735 = vpop.xlane.xlu0 %1734
        %v1736 = vsub.f32 %v1728, %v1735
        %v1737 = vmul.f32 %v1736, 1.442695
        %v1738 = vpow.pop %v1737
        %v1739 = vsel %vm1266, %v1738, 0.0
        %1740 = vadd.xlane.f32.xlu0 %v1739
        %v1741 = vpop.xlane.xlu0 %1740
        %v1742 = vrcp.pop %v1741
        %v1743 = vmul.f32 %v1738, %v1742
        %s1744 = scalar_lea.vmem %s639, 16 [#allocation21]
        %1745 = vst.msk [vmem:[%s1744] sm:$0xff] %vm1266, %v1743
        %v1746 = vpack.c.bf16 %v1743, %v1743
        %v1748 = vsel %vm1266, %v1746, 0
        %v1751 = vsel %vm1266, %v1145, 0
        %v1754 = vsel %vm1266, %v1146, 0
        %1756 = vmatprep.subr.bf16.mxu0 0
        %1757 = vmatpush1.bf16.xpose.msra.mxu0 %v1751
        %1758 = vmatprep.subr.bf16.mxu0 0
        %1759 = vmatpush1.bf16.xpose.msra.mxu0 %v1754
        %1760 = vmatprep.subr.bf16.mxu0 0
        %1761 = vmatpush1.bf16.xpose.msra.mxu0 0
        %1762 = vmatprep.subr.bf16.mxu0 0
        %1763 = vmatpush1.bf16.xpose.msra.mxu0 0
        %1764 = vmatprep.subr.bf16.mxu0 0
        %1765 = vmatpush1.bf16.xpose.msra.mxu0 0
        %1766 = vmatprep.subr.bf16.mxu0 0
        %1767 = vmatpush1.bf16.xpose.msra.mxu0 0
        %1768 = vmatprep.subr.bf16.mxu0 0
        %1769 = vmatpush1.bf16.xpose.msra.mxu0 0
        %1770 = vmatprep.subr.bf16.mxu0 0
        %1771 = vmatpush1.bf16.xpose.msra.mxu0 0
        %1772 = vmatprep.subr.bf16.mxu0 0
        %1773 = vmatpush1.bf16.xpose.msra.mxu0 0
        %1774 = vmatprep.subr.bf16.mxu0 0
        %1775 = vmatpush1.bf16.xpose.msra.mxu0 0
        %1776 = vmatprep.subr.bf16.mxu0 0
        %1777 = vmatpush1.bf16.xpose.msra.mxu0 0
        %1778 = vmatprep.subr.bf16.mxu0 0
        %1779 = vmatpush1.bf16.xpose.msra.mxu0 0
        %1780 = vmatprep.subr.bf16.mxu0 0
        %1781 = vmatpush1.bf16.xpose.msra.mxu0 0
        %1782 = vmatprep.subr.bf16.mxu0 0
        %1783 = vmatpush1.bf16.xpose.msra.mxu0 0
        %1784 = vmatprep.subr.bf16.mxu0 0
        %1785 = vmatpush1.bf16.xpose.msra.mxu0 0
        %1786 = vmatprep.subr.bf16.mxu0 0
        %1787 = vmatpush1.bf16.xpose.msra.mxu0 0
        %1788 = vmatprep.mubr.bf16.mxu0 0
        %1789 = vmatmul.mubr.bf16.gmra.mrb[0].mxu0 %v1748
        %v1790 = vpop.f32.mrb[0].mxu0
        %v1791 = vadd.f32 0.0, %v1790
        %v1792 = vpop.f32.mrb[0].mxu0
        %v1793 = vpop.f32.mrb[0].mxu0
        %v1794 = vpop.f32.mrb[0].mxu0
        %1795 = vdwg.mxu0
        %v1796 = vpack.c.bf16 %v1791, %v1791
        %s1797 = scalar_lea.vmem [#allocation14], 32
        %v1798 = vld [vmem:[%s1797] sm:$0xf]
        %v1799 = vld [vmem:[%s1797 + $0x4] sm:$0xf]
        %v1800 = vld [vmem:[%s1797 + $0x8] sm:$0xf]
        %v1801 = vld [vmem:[%s1797 + $0xc] sm:$0xf]
        %v1806 = vunpack.c.l.b16 %v1798
        %v1807 = vunpack.c.l.b16 %v1799
        %v1808 = vunpack.c.l.b16 %v1800
        %v1809 = vunpack.c.l.b16 %v1801
        %v1810 = vpack.c.b16 %v1807, %v1806
        %v1811 = vpack.c.b16 %v1809, %v1808
        %v1815 = vsel %vm1222, %v1796, 0
        %1817 = vmatprep.subr.bf16.mxu0 0
        %1818 = vmatpush1.bf16.msra.mxu0 %v1810
        %1819 = vmatprep.subr.bf16.mxu0 0
        %1820 = vmatpush1.bf16.msra.mxu0 %v1811
        %1821 = vmatprep.subr.bf16.mxu0 0
        %1822 = vmatpush1.bf16.msra.mxu0 0
        %1823 = vmatprep.subr.bf16.mxu0 0
        %1824 = vmatpush1.bf16.msra.mxu0 0
        %1825 = vmatprep.subr.bf16.mxu0 0
        %1826 = vmatpush1.bf16.msra.mxu0 0
        %1827 = vmatprep.subr.bf16.mxu0 0
        %1828 = vmatpush1.bf16.msra.mxu0 0
        %1829 = vmatprep.subr.bf16.mxu0 0
        %1830 = vmatpush1.bf16.msra.mxu0 0
        %1831 = vmatprep.subr.bf16.mxu0 0
        %1832 = vmatpush1.bf16.msra.mxu0 0
        %1833 = vmatprep.subr.bf16.mxu0 0
        %1834 = vmatpush1.bf16.msra.mxu0 0
        %1835 = vmatprep.subr.bf16.mxu0 0
        %1836 = vmatpush1.bf16.msra.mxu0 0
        %1837 = vmatprep.subr.bf16.mxu0 0
        %1838 = vmatpush1.bf16.msra.mxu0 0
        %1839 = vmatprep.subr.bf16.mxu0 0
        %1840 = vmatpush1.bf16.msra.mxu0 0
        %1841 = vmatprep.subr.bf16.mxu0 0
        %1842 = vmatpush1.bf16.msra.mxu0 0
        %1843 = vmatprep.subr.bf16.mxu0 0
        %1844 = vmatpush1.bf16.msra.mxu0 0
        %1845 = vmatprep.subr.bf16.mxu0 0
        %1846 = vmatpush1.bf16.msra.mxu0 0
        %1847 = vmatprep.subr.bf16.mxu0 0
        %1848 = vmatpush1.bf16.msra.mxu0 0
        %1849 = vmatprep.mubr.bf16.mxu0 0
        %1850 = vmatmul.mubr.bf16.gmra.mrb[0].mxu0 %v1815
        %v1851 = vpop.f32.mrb[0].mxu0
        %v1852 = vadd.f32 0.0, %v1851
        %v1853 = vpop.f32.mrb[0].mxu0
        %v1854 = vpop.f32.mrb[0].mxu0
        %v1855 = vpop.f32.mrb[0].mxu0
        %1856 = vdwg.mxu0
        %v1857 = vadd.f32 %v1618, %v1852
        %s1858 = scalar_lea.vmem [#allocation8], 48
        %v1859 = vld [vmem:[%s1858] sm:$0xf]
        %v1860 = vld [vmem:[%s1858 + $0x4] sm:$0xf]
        %v1861 = vld [vmem:[%s1858 + $0x8] sm:$0xf]
        %v1862 = vld [vmem:[%s1858 + $0xc] sm:$0xf]
        %s1863 = scalar_lea.vmem [#allocation10], 3
        %v1864 = vld [vmem:[%s1863] sm:$0x1]
        %v1866 = vlaneseq
        %v1867 = vshrl.u32 %v1866, 7
        %v1868 = vsub.s32 0, %v1867
        %v1869 = vrot.slane %v1864, %v1868
        %v1875 = vunpack.c.l.b16 %v1859
        %v1876 = vunpack.c.l.b16 %v1860
        %v1877 = vunpack.c.l.b16 %v1861
        %v1878 = vunpack.c.l.b16 %v1862
        %v1879 = vpack.c.b16 %v1876, %v1875
        %v1880 = vpack.c.b16 %v1878, %v1877
        %1883 = vmatprep.subr.bf16.mxu0 0
        %1884 = vmatpush1.bf16.xpose.msra.mxu0 %v1879
        %1885 = vmatprep.subr.bf16.mxu0 0
        %1886 = vmatpush1.bf16.xpose.msra.mxu0 %v1880
        %1887 = vmatprep.subr.bf16.mxu0 0
        %1888 = vmatpush1.bf16.xpose.msra.mxu0 0
        %1889 = vmatprep.subr.bf16.mxu0 0
        %1890 = vmatpush1.bf16.xpose.msra.mxu0 0
        %1891 = vmatprep.subr.bf16.mxu0 0
        %1892 = vmatpush1.bf16.xpose.msra.mxu0 0
        %1893 = vmatprep.subr.bf16.mxu0 0
        %1894 = vmatpush1.bf16.xpose.msra.mxu0 0
        %1895 = vmatprep.subr.bf16.mxu0 0
        %1896 = vmatpush1.bf16.xpose.msra.mxu0 0
        %1897 = vmatprep.subr.bf16.mxu0 0
        %1898 = vmatpush1.bf16.xpose.msra.mxu0 0
        %1899 = vmatprep.subr.bf16.mxu0 0
        %1900 = vmatpush1.bf16.xpose.msra.mxu0 0
        %1901 = vmatprep.subr.bf16.mxu0 0
        %1902 = vmatpush1.bf16.xpose.msra.mxu0 0
        %1903 = vmatprep.subr.bf16.mxu0 0
        %1904 = vmatpush1.bf16.xpose.msra.mxu0 0
        %1905 = vmatprep.subr.bf16.mxu0 0
        %1906 = vmatpush1.bf16.xpose.msra.mxu0 0
        %1907 = vmatprep.subr.bf16.mxu0 0
        %1908 = vmatpush1.bf16.xpose.msra.mxu0 0
        %1909 = vmatprep.subr.bf16.mxu0 0
        %1910 = vmatpush1.bf16.xpose.msra.mxu0 0
        %1911 = vmatprep.subr.bf16.mxu0 0
        %1912 = vmatpush1.bf16.xpose.msra.mxu0 0
        %1913 = vmatprep.subr.bf16.mxu0 0
        %1914 = vmatpush1.bf16.xpose.msra.mxu0 0
        %1915 = vmatprep.mubr.bf16.mxu0 0
        %1916 = vmatmul.mubr.bf16.gmra.mrb[0].mxu0 %v645
        %v1917 = vpop.f32.mrb[0].mxu0
        %v1918 = vadd.f32 %v1869, %v1917
        %v1919 = vpop.f32.mrb[0].mxu0
        %v1920 = vpop.f32.mrb[0].mxu0
        %v1921 = vpop.f32.mrb[0].mxu0
        %1922 = vdwg.mxu0
        %v1923 = vmul.f32 %v1918, 0.17677669
        %v1924 = vpack.c.bf16 %v1923, %v1923
        %v1926 = vsel %vm1222, %v1924, 0
        %1928 = vmatprep.subr.bf16.mxu0 0
        %1929 = vmatpush1.bf16.msra.mxu0 %v1139
        %1930 = vmatprep.subr.bf16.mxu0 0
        %1931 = vmatpush1.bf16.msra.mxu0 %v1140
        %1932 = vmatprep.subr.bf16.mxu0 0
        %1933 = vmatpush1.bf16.msra.mxu0 0
        %1934 = vmatprep.subr.bf16.mxu0 0
        %1935 = vmatpush1.bf16.msra.mxu0 0
        %1936 = vmatprep.subr.bf16.mxu0 0
        %1937 = vmatpush1.bf16.msra.mxu0 0
        %1938 = vmatprep.subr.bf16.mxu0 0
        %1939 = vmatpush1.bf16.msra.mxu0 0
        %1940 = vmatprep.subr.bf16.mxu0 0
        %1941 = vmatpush1.bf16.msra.mxu0 0
        %1942 = vmatprep.subr.bf16.mxu0 0
        %1943 = vmatpush1.bf16.msra.mxu0 0
        %1944 = vmatprep.subr.bf16.mxu0 0
        %1945 = vmatpush1.bf16.msra.mxu0 0
        %1946 = vmatprep.subr.bf16.mxu0 0
        %1947 = vmatpush1.bf16.msra.mxu0 0
        %1948 = vmatprep.subr.bf16.mxu0 0
        %1949 = vmatpush1.bf16.msra.mxu0 0
        %1950 = vmatprep.subr.bf16.mxu0 0
        %1951 = vmatpush1.bf16.msra.mxu0 0
        %1952 = vmatprep.subr.bf16.mxu0 0
        %1953 = vmatpush1.bf16.msra.mxu0 0
        %1954 = vmatprep.subr.bf16.mxu0 0
        %1955 = vmatpush1.bf16.msra.mxu0 0
        %1956 = vmatprep.subr.bf16.mxu0 0
        %1957 = vmatpush1.bf16.msra.mxu0 0
        %1958 = vmatprep.subr.bf16.mxu0 0
        %1959 = vmatpush1.bf16.msra.mxu0 0
        %1960 = vmatprep.mubr.bf16.mxu0 0
        %1961 = vmatmul.mubr.bf16.gmra.mrb[0].mxu0 %v1926
        %v1962 = vpop.f32.mrb[0].mxu0
        %v1963 = vadd.f32 %v1155, %v1962
        %v1964 = vpop.f32.mrb[0].mxu0
        %v1965 = vpop.f32.mrb[0].mxu0
        %v1966 = vpop.f32.mrb[0].mxu0
        %1967 = vdwg.mxu0
        %v1968 = vsel %vm1266, %v1963, -inf
        %1969 = vmax.xlane.f32.xlu0 %v1968
        %v1970 = vpop.xlane.xlu0 %1969
        %v1971 = vsub.f32 %v1963, %v1970
        %v1972 = vmul.f32 %v1971, 1.442695
        %v1973 = vpow.pop %v1972
        %v1974 = vsel %vm1266, %v1973, 0.0
        %1975 = vadd.xlane.f32.xlu0 %v1974
        %v1976 = vpop.xlane.xlu0 %1975
        %v1977 = vrcp.pop %v1976
        %v1978 = vmul.f32 %v1973, %v1977
        %s1979 = scalar_lea.vmem %s639, 24 [#allocation21]
        %1980 = vst.msk [vmem:[%s1979] sm:$0xff] %vm1266, %v1978
        %v1981 = vpack.c.bf16 %v1978, %v1978
        %v1983 = vsel %vm1266, %v1981, 0
        %v1986 = vsel %vm1266, %v1147, 0
        %v1989 = vsel %vm1266, %v1148, 0
        %1991 = vmatprep.subr.bf16.mxu0 0
        %1992 = vmatpush1.bf16.xpose.msra.mxu0 %v1986
        %1993 = vmatprep.subr.bf16.mxu0 0
        %1994 = vmatpush1.bf16.xpose.msra.mxu0 %v1989
        %1995 = vmatprep.subr.bf16.mxu0 0
        %1996 = vmatpush1.bf16.xpose.msra.mxu0 0
        %1997 = vmatprep.subr.bf16.mxu0 0
        %1998 = vmatpush1.bf16.xpose.msra.mxu0 0
        %1999 = vmatprep.subr.bf16.mxu0 0
        %2000 = vmatpush1.bf16.xpose.msra.mxu0 0
        %2001 = vmatprep.subr.bf16.mxu0 0
        %2002 = vmatpush1.bf16.xpose.msra.mxu0 0
        %2003 = vmatprep.subr.bf16.mxu0 0
        %2004 = vmatpush1.bf16.xpose.msra.mxu0 0
        %2005 = vmatprep.subr.bf16.mxu0 0
        %2006 = vmatpush1.bf16.xpose.msra.mxu0 0
        %2007 = vmatprep.subr.bf16.mxu0 0
        %2008 = vmatpush1.bf16.xpose.msra.mxu0 0
        %2009 = vmatprep.subr.bf16.mxu0 0
        %2010 = vmatpush1.bf16.xpose.msra.mxu0 0
        %2011 = vmatprep.subr.bf16.mxu0 0
        %2012 = vmatpush1.bf16.xpose.msra.mxu0 0
        %2013 = vmatprep.subr.bf16.mxu0 0
        %2014 = vmatpush1.bf16.xpose.msra.mxu0 0
        %2015 = vmatprep.subr.bf16.mxu0 0
        %2016 = vmatpush1.bf16.xpose.msra.mxu0 0
        %2017 = vmatprep.subr.bf16.mxu0 0
        %2018 = vmatpush1.bf16.xpose.msra.mxu0 0
        %2019 = vmatprep.subr.bf16.mxu0 0
        %2020 = vmatpush1.bf16.xpose.msra.mxu0 0
        %2021 = vmatprep.subr.bf16.mxu0 0
        %2022 = vmatpush1.bf16.xpose.msra.mxu0 0
        %2023 = vmatprep.mubr.bf16.mxu0 0
        %2024 = vmatmul.mubr.bf16.gmra.mrb[0].mxu0 %v1983
        %v2025 = vpop.f32.mrb[0].mxu0
        %v2026 = vadd.f32 0.0, %v2025
        %v2027 = vpop.f32.mrb[0].mxu0
        %v2028 = vpop.f32.mrb[0].mxu0
        %v2029 = vpop.f32.mrb[0].mxu0
        %2030 = vdwg.mxu0
        %v2031 = vpack.c.bf16 %v2026, %v2026
        %s2032 = scalar_lea.vmem [#allocation14], 48
        %v2033 = vld [vmem:[%s2032] sm:$0xf]
        %v2034 = vld [vmem:[%s2032 + $0x4] sm:$0xf]
        %v2035 = vld [vmem:[%s2032 + $0x8] sm:$0xf]
        %v2036 = vld [vmem:[%s2032 + $0xc] sm:$0xf]
        %v2041 = vunpack.c.l.b16 %v2033
        %v2042 = vunpack.c.l.b16 %v2034
        %v2043 = vunpack.c.l.b16 %v2035
        %v2044 = vunpack.c.l.b16 %v2036
        %v2045 = vpack.c.b16 %v2042, %v2041
        %v2046 = vpack.c.b16 %v2044, %v2043
        %v2050 = vsel %vm1222, %v2031, 0
        %2052 = vmatprep.subr.bf16.mxu0 0
        %2053 = vmatpush1.bf16.msra.mxu0 %v2045
        %2054 = vmatprep.subr.bf16.mxu0 0
        %2055 = vmatpush1.bf16.msra.mxu0 %v2046
        %2056 = vmatprep.subr.bf16.mxu0 0
        %2057 = vmatpush1.bf16.msra.mxu0 0
        %2058 = vmatprep.subr.bf16.mxu0 0
        %2059 = vmatpush1.bf16.msra.mxu0 0
        %2060 = vmatprep.subr.bf16.mxu0 0
        %2061 = vmatpush1.bf16.msra.mxu0 0
        %2062 = vmatprep.subr.bf16.mxu0 0
        %2063 = vmatpush1.bf16.msra.mxu0 0
        %2064 = vmatprep.subr.bf16.mxu0 0
        %2065 = vmatpush1.bf16.msra.mxu0 0
        %2066 = vmatprep.subr.bf16.mxu0 0
        %2067 = vmatpush1.bf16.msra.mxu0 0
        %2068 = vmatprep.subr.bf16.mxu0 0
        %2069 = vmatpush1.bf16.msra.mxu0 0
        %2070 = vmatprep.subr.bf16.mxu0 0
        %2071 = vmatpush1.bf16.msra.mxu0 0
        %2072 = vmatprep.subr.bf16.mxu0 0
        %2073 = vmatpush1.bf16.msra.mxu0 0
        %2074 = vmatprep.subr.bf16.mxu0 0
        %2075 = vmatpush1.bf16.msra.mxu0 0
        %2076 = vmatprep.subr.bf16.mxu0 0
        %2077 = vmatpush1.bf16.msra.mxu0 0
        %2078 = vmatprep.subr.bf16.mxu0 0
        %2079 = vmatpush1.bf16.msra.mxu0 0
        %2080 = vmatprep.subr.bf16.mxu0 0
        %2081 = vmatpush1.bf16.msra.mxu0 0
        %2082 = vmatprep.subr.bf16.mxu0 0
        %2083 = vmatpush1.bf16.msra.mxu0 0
        %2084 = vmatprep.mubr.bf16.mxu0 0
        %2085 = vmatmul.mubr.bf16.gmra.mrb[0].mxu0 %v2050
        %v2086 = vpop.f32.mrb[0].mxu0
        %v2087 = vadd.f32 0.0, %v2086
        %v2088 = vpop.f32.mrb[0].mxu0
        %v2089 = vpop.f32.mrb[0].mxu0
        %v2090 = vpop.f32.mrb[0].mxu0
        %2091 = vdwg.mxu0
        %v2092 = vadd.f32 %v1857, %v2087
        %v2093 = vld [vmem:[#allocation16] sm:$0x1]
        %v2095 = vlaneseq
        %v2096 = vshrl.u32 %v2095, 7
        %v2097 = vsub.s32 0, %v2096
        %v2098 = vrot.slane %v2093, %v2097
        %v2100 = vadd.f32 %v2092, %v2098
        %v2101 = vadd.f32 %v2100, %v641
        %2102 = vadd.xlane.f32.xlu0 %v2101
        %v2103 = vpop.xlane.xlu0 %2102
        %v2104 = vrcp.pop 128.0
        %v2105 = vmul.f32 %v2103, %v2104
        %v2106 = vsub.f32 %v2101, %v2105
        %v2107 = vmul.f32 %v2106, %v2106
        %2108 = vadd.xlane.f32.xlu0 %v2107
        %v2109 = vpop.xlane.xlu0 %2108
        %v2110 = vmul.f32 %v2109, %v2104
        %v2111 = vadd.f32 %v2110, 1e-05
        %v2112 = vrsqrt.pop %v2111
        %v2113 = vmul.f32 %v2106, %v2112
        %v2114 = vld [vmem:[#allocation17] sm:$0x1]
        %v2116 = vlaneseq
        %v2117 = vshrl.u32 %v2116, 7
        %v2118 = vsub.s32 0, %v2117
        %v2119 = vrot.slane %v2114, %v2118
        %v2121 = vmul.f32 %v2113, %v2119
        %v2122 = vld [vmem:[#allocation19] sm:$0x1]
        %v2124 = vlaneseq
        %v2125 = vshrl.u32 %v2124, 7
        %v2126 = vsub.s32 0, %v2125
        %v2127 = vrot.slane %v2122, %v2126
        %v2129 = vadd.f32 %v2121, %v2127
        %2130 = vst [vmem:[%s632] sm:$0xff] %v2129
        %s2131 = sand.u32 %s310, 1
        %s2132 = scalar_lea.sflag [#allocation4], %s2131
        %s2133 = sand.u32 %s310, 1
        %s2134 = smul.addr %s2133, 8
        %s2135 = scalar_lea.vmem [#allocation20], %s2134
        %s2136 = sand.u32 %s338, 1
        %s2137 = scalar_lea.sflag [#allocation22], %s2136
        %s2138 = sand.u32 %s338, 1
        %s2139 = smul.addr %s2138, 32
        %s2140 = scalar_lea.vmem [#allocation21], %s2139
        // Predicated region
        $region109: #{tpu_custom_call.1} parent=63 // pred_check
          %p2141 = pneg %p320
        $region110: #{tpu_custom_call.1} parent=63 // pred_check_branch
          %2143 = sbr.rel (%p2141) target = $region112
        $region111: #{tpu_custom_call.1} parent=63 // pred_region
          %s2145 = ssub.s32 128, 128
          %2146 = vsyncadd %s2132, %s2145
          %s2147 = sadd.s32 %s45, %s44
          %s2148 = smul.addr %s2147, 128
          %s2149 = scalar_lea.hbm %s11, %s2148
          %s2151 = sshll.u32 %s2135, 4
          %s2152 = int_to_ptr.vmem [resolvable:$true] %s2151
          %2154 = dma.vmem_to_hbm [thread:$0]  %s2152, 128, %s2149, %s2132
        $region112: #{tpu_custom_call.1} parent=63 // pred_fallthru
          _
        // Predicated region
        $region113: #{tpu_custom_call.1} parent=63 // pred_check
          %p2155 = pneg %p348
        $region114: #{tpu_custom_call.1} parent=63 // pred_check_branch
          %2157 = sbr.rel (%p2155) target = $region116
        $region115: #{tpu_custom_call.1} parent=63 // pred_region
          %s2159 = ssub.s32 512, 512
          %2160 = vsyncadd %s2137, %s2159
          %s2161 = smul.addr %s44, 4
          %s2162 = sadd.s32 %s45, %s2161
          %s2163 = smul.addr %s2162, 128
          %s2164 = scalar_lea.hbm %s12, %s2163
          %s2165 = sshll.u32 %s2140, 4
          %s2166 = int_to_ptr.vmem [resolvable:$true] %s2165
          %2171 = dma.vmem_to_hbm [thread:$0]  %s2166, 512, %s2164, %s2137, 128, 128, 8
        $region116: #{tpu_custom_call.1} parent=63 // pred_fallthru
          _
      $region64: #{tpu_custom_call.1} parent=5 // pred_fallthru
        _
      %p2172 = scmp.le.s32.totalorder 2, %s35
      // Predicated region
      $region117: #{tpu_custom_call.1} parent=5 // pred_check
        %p2173 = pneg %p2172
      $region118: #{tpu_custom_call.1} parent=5 // pred_check_branch
        %2175 = sbr.rel (%p2173) target = $region120
      $region119: #{tpu_custom_call.1} parent=5 // pred_region
        %s2176 = ssub.s32 %s35, 2
        // Predicated region
        $region121: #{tpu_custom_call.1} parent=119 // pred_check
          %p2177 = pneg %p326
        $region122: #{tpu_custom_call.1} parent=119 // pred_check_branch
          %2179 = sbr.rel (%p2177) target = $region124
        $region123: #{tpu_custom_call.1} parent=119 // pred_region
          %s2180 = sand.u32 %s311, 1
          %s2181 = scalar_lea.sflag [#allocation4], %s2180
          %s2182 = sand.u32 %s311, 1
          %s2183 = smul.addr %s2182, 8
          %s2184 = scalar_lea.vmem [#allocation20], %s2183
          %2185 = dma.done %s2181, 128
        $region124: #{tpu_custom_call.1} parent=119 // pred_fallthru
          _
        // Predicated region
        $region125: #{tpu_custom_call.1} parent=119 // pred_check
          %p2186 = pneg %p354
        $region126: #{tpu_custom_call.1} parent=119 // pred_check_branch
          %2188 = sbr.rel (%p2186) target = $region128
        $region127: #{tpu_custom_call.1} parent=119 // pred_region
          %s2189 = sand.u32 %s339, 1
          %s2190 = scalar_lea.sflag [#allocation22], %s2189
          %s2191 = sand.u32 %s339, 1
          %s2192 = smul.addr %s2191, 32
          %s2193 = scalar_lea.vmem [#allocation21], %s2192
          %2194 = dma.done %s2190, 512
        $region128: #{tpu_custom_call.1} parent=119 // pred_fallthru
          _
      $region120: #{tpu_custom_call.1} parent=5 // pred_fallthru
        _
    $region6: #{tpu_custom_call.1} parent=1 // loop_footer
      %s39 = sadd.s32 1, %s35
    $region7: #{tpu_custom_call.1} parent=1 // loop_footer_branch
      %34 = sbr.rel target = $region3
    $region8: #{tpu_custom_call.1} parent=1 // loop_exit
      _
    %2195 = vsyncpa [#allocation3], 1
    %s2196 = scalar_lea.sflag [#allocation3], 1
    %2197 = vsyncpa %s2196, 1
    %2198 = vsyncpa [#allocation6], 1
    %s2199 = scalar_lea.sflag [#allocation6], 1
    %2200 = vsyncpa %s2199, 1
    %2201 = vsyncpa [#allocation9], 1
    %2202 = vsyncpa [#allocation12], 1
    %2203 = vsyncpa [#allocation15], 1
    %2204 = vsyncpa [#allocation18], 1
    %2205 = vsyncpa [#allocation4], 1
    %s2206 = scalar_lea.sflag [#allocation4], 1
    %2207 = vsyncpa %s2206, 1
    %2208 = vsyncpa [#allocation22], 1
    %s2209 = scalar_lea.sflag [#allocation22], 1
    %2210 = vsyncpa %s2209, 1

// kernel: tpu_custom_call.1
$region0: #{tpu_custom_call.1}
  #allocation0 [shape = 'u32[]', space=smem, size = 0x4, offset = 0x4, fixed_abs, tag = 'smem constant byte address 0x4 - core index']
  #allocation1 [shape = 'u32[144,128]{1,0:T(1,128)}', space=vmem, size = 0x12000, scoped, tag = 'internal scratch']
  %s0 = inlined_call_operand.hbm [shape: f32[2,8,128], index: 0, kind: input, shape index: {}]
  %s1 = inlined_call_operand.hbm [shape: bf16[2,16,128], index: 1, kind: input, shape index: {}]
  %s2 = inlined_call_operand.hbm [shape: f32[2,1,16], index: 2, kind: input, shape index: {}]
  %s3 = inlined_call_operand.hbm [shape: bf16[4,32,128], index: 3, kind: input, shape index: {}]
  %s4 = inlined_call_operand.hbm [shape: f32[4,1,32], index: 4, kind: input, shape index: {}]
  %s5 = inlined_call_operand.hbm [shape: bf16[256,128], index: 5, kind: input, shape index: {}]
  %s6 = inlined_call_operand.hbm [shape: f32[256,1], index: 6, kind: input, shape index: {}]
  %s7 = inlined_call_operand.hbm [shape: bf16[4,32,128], index: 7, kind: input, shape index: {}]
  %s8 = inlined_call_operand.hbm [shape: f32[1,128], index: 8, kind: input, shape index: {}]
  %s9 = inlined_call_operand.hbm [shape: f32[1,128], index: 9, kind: input, shape index: {}]
  %s10 = inlined_call_operand.hbm [shape: f32[1,128], index: 10, kind: input, shape index: {}]
  %s11 = inlined_call_operand.hbm [shape: f32[2,8,128], index: 11, kind: output, shape index: {0}]
  %s12 = inlined_call_operand.hbm [shape: f32[2,4,8,16], index: 12, kind: output, shape index: {1}]
  %13 = xla_tuple %s11, %s12
  %s14 = sld [smem:[#allocation0]]
  $region129: #{tpu_custom_call.1} parent=0
    _
  %s16 = ssub.s32 1, %s14
  %s17 = scalar_select 0, %s16, %s14
  $region1: #{tpu_custom_call.1} parent=0
    #allocation2 [shape = 'u8[8192]{0}', space=vmem, size = 0x2000, scoped, tag = 'input window, operand 0']
    #allocation3 [shape = 's32[2]{0}', space=sflag, size = 0x8, scoped, tag = 'scoped memory for tpu_custom_call.1']
    #allocation4 [shape = 's32[2]{0}', space=sflag, size = 0x8, scoped, tag = 'scoped memory for tpu_custom_call.1']
    #allocation5 [shape = 'u8[8192]{0}', space=vmem, size = 0x2000, scoped, tag = 'input window, operand 1']
    #allocation6 [shape = 's32[2]{0}', space=sflag, size = 0x8, scoped, tag = 'scoped memory for tpu_custom_call.1']
    #allocation7 [shape = 'u8[1024]{0}', space=vmem, size = 0x400, scoped, tag = 'input window, operand 2']
    #allocation8 [shape = 'u8[32768]{0}', space=vmem, size = 0x8000, scoped, tag = 'input window, operand 3, single buffered']
    #allocation9 [shape = 's32[1]{0}', space=sflag, size = 0x4, scoped, tag = 'scoped memory for tpu_custom_call.1']
    #allocation10 [shape = 'u8[2048]{0}', space=vmem, size = 0x800, scoped, tag = 'input window, operand 4, single buffered']
    #allocation11 [shape = 'u8[65536]{0}', space=vmem, size = 0x10000, scoped, tag = 'input window, operand 5, single buffered']
    #allocation12 [shape = 's32[1]{0}', space=sflag, size = 0x4, scoped, tag = 'scoped memory for tpu_custom_call.1']
    #allocation13 [shape = 'u8[131072]{0}', space=vmem, size = 0x20000, scoped, tag = 'input window, operand 6, single buffered']
    #allocation14 [shape = 'u8[32768]{0}', space=vmem, size = 0x8000, scoped, tag = 'input window, operand 7, single buffered']
    #allocation15 [shape = 's32[1]{0}', space=sflag, size = 0x4, scoped, tag = 'scoped memory for tpu_custom_call.1']
    #allocation16 [shape = 'u8[512]{0}', space=vmem, size = 0x400, scoped, tag = 'input window, operand 8, single buffered']
    #allocation17 [shape = 'u8[512]{0}', space=vmem, size = 0x400, scoped, tag = 'input window, operand 9, single buffered']
    #allocation18 [shape = 's32[1]{0}', space=sflag, size = 0x4, scoped, tag = 'scoped memory for tpu_custom_call.1']
    #allocation19 [shape = 'u8[512]{0}', space=vmem, size = 0x400, scoped, tag = 'input window, operand 10, single buffered']
    #allocation20 [shape = 'u8[8192]{0}', space=vmem, size = 0x2000, scoped, tag = 'output window, operand 0']
    #allocation21 [shape = 'u8[32768]{0}', space=vmem, size = 0x8000, scoped, tag = 'output window, operand 1']
    #allocation22 [shape = 's32[2]{0}', space=sflag, size = 0x8, scoped, tag = 'scoped memory for tpu_custom_call.1']
    %18 = vsyncpa [#allocation3], 0
    %s19 = scalar_lea.sflag [#allocation3], 1
    %20 = vsyncpa %s19, 0
    %21 = vsyncpa [#allocation6], 0
    %s22 = scalar_lea.sflag [#allocation6], 1
    %23 = vsyncpa %s22, 0
    %24 = vsyncpa [#allocation9], 0
    %25 = vsyncpa [#allocation12], 0
    %26 = vsyncpa [#allocation15], 0
    %27 = vsyncpa [#allocation18], 0
    %28 = vsyncpa [#allocation4], 0
    %s29 = scalar_lea.sflag [#allocation4], 1
    %30 = vsyncpa %s29, 0
    %31 = vsyncpa [#allocation22], 0
    %s32 = scalar_lea.sflag [#allocation22], 1
    %33 = vsyncpa %s32, 0
    loop: start=0, step=1, limit=4
    $region2: #{tpu_custom_call.1} parent=1 // loop_pre_header
      _
    $region3: #{tpu_custom_call.1} parent=1 // loop_header
      %s35 = sphi 0, %s39
      %p36 = scmp.ge.s32.totalorder %s35, 4
      %s42 = sphi 0, %s54
      %s43 = sphi 0, %s50
      %s44 = sphi 0, %s42
      %s45 = sphi 0, %s43
      %s46 = sphi 0, %s44
      %s47 = sphi 0, %s45
      %s59 = sphi 0, %s61
      %s62 = sphi 0, %s59
      %s63 = sphi 0, %s62
      %s79 = sphi 0, %s63
      %s85 = sphi 0, %s87
      %s88 = sphi 0, %s85
      %s89 = sphi 0, %s88
      %s105 = sphi 0, %s89
      %s111 = sphi 0, %s113
      %s114 = sphi 0, %s111
      %s115 = sphi 0, %s114
      %s131 = sphi 0, %s115
      %s135 = sphi 0, %s135
      %s137 = sphi 0, %s135
      %s138 = sphi 0, %s137
      %s152 = sphi 0, %s138
      %s156 = sphi 0, %s156
      %s158 = sphi 0, %s156
      %s159 = sphi 0, %s158
      %s173 = sphi 0, %s159
      %s177 = sphi 0, %s177
      %s179 = sphi 0, %s177
      %s180 = sphi 0, %s179
      %s194 = sphi 0, %s180
      %s198 = sphi 0, %s198
      %s200 = sphi 0, %s198
      %s201 = sphi 0, %s200
      %s215 = sphi 0, %s201
      %s219 = sphi 0, %s219
      %s221 = sphi 0, %s219
      %s222 = sphi 0, %s221
      %s236 = sphi 0, %s222
      %s240 = sphi 0, %s240
      %s242 = sphi 0, %s240
      %s243 = sphi 0, %s242
      %s257 = sphi 0, %s243
      %s261 = sphi 0, %s261
      %s263 = sphi 0, %s261
      %s264 = sphi 0, %s263
      %s278 = sphi 0, %s264
      %s282 = sphi 0, %s282
      %s284 = sphi 0, %s282
      %s285 = sphi 0, %s284
      %s299 = sphi 0, %s285
      %s307 = sphi 0, %s309
      %s310 = sphi 0, %s307
      %s311 = sphi 0, %s310
      %s327 = sphi 0, %s311
      %s335 = sphi 0, %s337
      %s338 = sphi 0, %s335
      %s339 = sphi 0, %s338
      %s355 = sphi 0, %s339
    $region4: #{tpu_custom_call.1} parent=1 // loop_header_branch
      %38 = sbr.rel (%p36) target = $region8
    $region5: #{tpu_custom_call.1} parent=1 // loop_body
      %s40 = ssub.s32 %s35, 1
      %s41 = ssub.s32 %s35, 2
      %s48 = sadd.s32 1, %s43
      %p49 = scmp.ge.s32.totalorder %s48, 1
      %s50 = scalar_select %p49, 0, %s48
      %s51 = sadd.s32 1, %s42
      %s52 = scalar_select %p49, %s51, %s42
      %p53 = scmp.ge.s32.totalorder %s52, 2
      %s54 = scalar_select %p53, 0, %s52
      %s55 = ssub.s32 %s42, %s54
      %s56 = ssub.s32 %s43, %s50
      %s57 = sor.u32 %s55, %s56
      %p58 = scmp.eq.s32.totalorder %s57, 0
      %s60 = sadd.s32 %s59, 1
      %s61 = scalar_select %p58, %s59, %s60
      %p64 = pneg %p58
      %p65 = scmp.eq.s32.totalorder %s35, 1
      %p66 = por %p64, %p65
      %p67 = scmp.ne.s32.totalorder %s59, %s62
      %p68 = scmp.eq.s32.totalorder %s35, 0
      %p69 = por %p67, %p68
      %p70 = scmp.ne.s32.totalorder %s59, %s62
      %p71 = scmp.eq.s32.totalorder %s40, 1
      %p72 = por %p70, %p71
      %p73 = scmp.ne.s32.totalorder %s62, %s63
      %p74 = scmp.eq.s32.totalorder %s40, 0
      %p75 = por %p73, %p74
      %p76 = scmp.ne.s32.totalorder %s62, %s63
      %p77 = scmp.eq.s32.totalorder %s41, 1
      %p78 = por %p76, %p77
      %p80 = scmp.ne.s32.totalorder %s63, %s79
      %p81 = scmp.eq.s32.totalorder %s41, 0
      %p82 = por %p80, %p81
      %s83 = ssub.s32 %s42, %s54
      %p84 = scmp.eq.s32.totalorder %s83, 0
      %s86 = sadd.s32 %s85, 1
      %s87 = scalar_select %p84, %s85, %s86
      %p90 = pneg %p84
      %p91 = scmp.eq.s32.totalorder %s35, 1
      %p92 = por %p90, %p91
      %p93 = scmp.ne.s32.totalorder %s85, %s88
      %p94 = scmp.eq.s32.totalorder %s35, 0
      %p95 = por %p93, %p94
      %p96 = scmp.ne.s32.totalorder %s85, %s88
      %p97 = scmp.eq.s32.totalorder %s40, 1
      %p98 = por %p96, %p97
      %p99 = scmp.ne.s32.totalorder %s88, %s89
      %p100 = scmp.eq.s32.totalorder %s40, 0
      %p101 = por %p99, %p100
      %p102 = scmp.ne.s32.totalorder %s88, %s89
      %p103 = scmp.eq.s32.totalorder %s41, 1
      %p104 = por %p102, %p103
      %p106 = scmp.ne.s32.totalorder %s89, %s105
      %p107 = scmp.eq.s32.totalorder %s41, 0
      %p108 = por %p106, %p107
      %s109 = ssub.s32 %s42, %s54
      %p110 = scmp.eq.s32.totalorder %s109, 0
      %s112 = sadd.s32 %s111, 1
      %s113 = scalar_select %p110, %s111, %s112
      %p116 = pneg %p110
      %p117 = scmp.eq.s32.totalorder %s35, 1
      %p118 = por %p116, %p117
      %p119 = scmp.ne.s32.totalorder %s111, %s114
      %p120 = scmp.eq.s32.totalorder %s35, 0
      %p121 = por %p119, %p120
      %p122 = scmp.ne.s32.totalorder %s111, %s114
      %p123 = scmp.eq.s32.totalorder %s40, 1
      %p124 = por %p122, %p123
      %p125 = scmp.ne.s32.totalorder %s114, %s115
      %p126 = scmp.eq.s32.totalorder %s40, 0
      %p127 = por %p125, %p126
      %p128 = scmp.ne.s32.totalorder %s114, %s115
      %p129 = scmp.eq.s32.totalorder %s41, 1
      %p130 = por %p128, %p129
      %p132 = scmp.ne.s32.totalorder %s115, %s131
      %p133 = scmp.eq.s32.totalorder %s41, 0
      %p134 = por %p132, %p133
      %s136 = sadd.s32 %s135, 1
      %p139 = scmp.eq.s32.totalorder %s35, 1
      %p140 = scmp.ne.s32.totalorder %s135, %s137
      %p141 = scmp.eq.s32.totalorder %s35, 0
      %p142 = por %p140, %p141
      %p143 = scmp.ne.s32.totalorder %s135, %s137
      %p144 = scmp.eq.s32.totalorder %s40, 1
      %p145 = por %p143, %p144
      %p146 = scmp.ne.s32.totalorder %s137, %s138
      %p147 = scmp.eq.s32.totalorder %s40, 0
      %p148 = por %p146, %p147
      %p149 = scmp.ne.s32.totalorder %s137, %s138
      %p150 = scmp.eq.s32.totalorder %s41, 1
      %p151 = por %p149, %p150
      %p153 = scmp.ne.s32.totalorder %s138, %s152
      %p154 = scmp.eq.s32.totalorder %s41, 0
      %p155 = por %p153, %p154
      %s157 = sadd.s32 %s156, 1
      %p160 = scmp.eq.s32.totalorder %s35, 1
      %p161 = scmp.ne.s32.totalorder %s156, %s158
      %p162 = scmp.eq.s32.totalorder %s35, 0
      %p163 = por %p161, %p162
      %p164 = scmp.ne.s32.totalorder %s156, %s158
      %p165 = scmp.eq.s32.totalorder %s40, 1
      %p166 = por %p164, %p165
      %p167 = scmp.ne.s32.totalorder %s158, %s159
      %p168 = scmp.eq.s32.totalorder %s40, 0
      %p169 = por %p167, %p168
      %p170 = scmp.ne.s32.totalorder %s158, %s159
      %p171 = scmp.eq.s32.totalorder %s41, 1
      %p172 = por %p170, %p171
      %p174 = scmp.ne.s32.totalorder %s159, %s173
      %p175 = scmp.eq.s32.totalorder %s41, 0
      %p176 = por %p174, %p175
      %s178 = sadd.s32 %s177, 1
      %p181 = scmp.eq.s32.totalorder %s35, 1
      %p182 = scmp.ne.s32.totalorder %s177, %s179
      %p183 = scmp.eq.s32.totalorder %s35, 0
      %p184 = por %p182, %p183
      %p185 = scmp.ne.s32.totalorder %s177, %s179
      %p186 = scmp.eq.s32.totalorder %s40, 1
      %p187 = por %p185, %p186
      %p188 = scmp.ne.s32.totalorder %s179, %s180
      %p189 = scmp.eq.s32.totalorder %s40, 0
      %p190 = por %p188, %p189
      %p191 = scmp.ne.s32.totalorder %s179, %s180
      %p192 = scmp.eq.s32.totalorder %s41, 1
      %p193 = por %p191, %p192
      %p195 = scmp.ne.s32.totalorder %s180, %s194
      %p196 = scmp.eq.s32.totalorder %s41, 0
      %p197 = por %p195, %p196
      %s199 = sadd.s32 %s198, 1
      %p202 = scmp.eq.s32.totalorder %s35, 1
      %p203 = scmp.ne.s32.totalorder %s198, %s200
      %p204 = scmp.eq.s32.totalorder %s35, 0
      %p205 = por %p203, %p204
      %p206 = scmp.ne.s32.totalorder %s198, %s200
      %p207 = scmp.eq.s32.totalorder %s40, 1
      %p208 = por %p206, %p207
      %p209 = scmp.ne.s32.totalorder %s200, %s201
      %p210 = scmp.eq.s32.totalorder %s40, 0
      %p211 = por %p209, %p210
      %p212 = scmp.ne.s32.totalorder %s200, %s201
      %p213 = scmp.eq.s32.totalorder %s41, 1
      %p214 = por %p212, %p213
      %p216 = scmp.ne.s32.totalorder %s201, %s215
      %p217 = scmp.eq.s32.totalorder %s41, 0
      %p218 = por %p216, %p217
      %s220 = sadd.s32 %s219, 1
      %p223 = scmp.eq.s32.totalorder %s35, 1
      %p224 = scmp.ne.s32.totalorder %s219, %s221
      %p225 = scmp.eq.s32.totalorder %s35, 0
      %p226 = por %p224, %p225
      %p227 = scmp.ne.s32.totalorder %s219, %s221
      %p228 = scmp.eq.s32.totalorder %s40, 1
      %p229 = por %p227, %p228
      %p230 = scmp.ne.s32.totalorder %s221, %s222
      %p231 = scmp.eq.s32.totalorder %s40, 0
      %p232 = por %p230, %p231
      %p233 = scmp.ne.s32.totalorder %s221, %s222
      %p234 = scmp.eq.s32.totalorder %s41, 1
      %p235 = por %p233, %p234
      %p237 = scmp.ne.s32.totalorder %s222, %s236
      %p238 = scmp.eq.s32.totalorder %s41, 0
      %p239 = por %p237, %p238
      %s241 = sadd.s32 %s240, 1
      %p244 = scmp.eq.s32.totalorder %s35, 1
      %p245 = scmp.ne.s32.totalorder %s240, %s242
      %p246 = scmp.eq.s32.totalorder %s35, 0
      %p247 = por %p245, %p246
      %p248 = scmp.ne.s32.totalorder %s240, %s242
      %p249 = scmp.eq.s32.totalorder %s40, 1
      %p250 = por %p248, %p249
      %p251 = scmp.ne.s32.totalorder %s242, %s243
      %p252 = scmp.eq.s32.totalorder %s40, 0
      %p253 = por %p251, %p252
      %p254 = scmp.ne.s32.totalorder %s242, %s243
      %p255 = scmp.eq.s32.totalorder %s41, 1
      %p256 = por %p254, %p255
      %p258 = scmp.ne.s32.totalorder %s243, %s257
      %p259 = scmp.eq.s32.totalorder %s41, 0
      %p260 = por %p258, %p259
      %s262 = sadd.s32 %s261, 1
      %p265 = scmp.eq.s32.totalorder %s35, 1
      %p266 = scmp.ne.s32.totalorder %s261, %s263
      %p267 = scmp.eq.s32.totalorder %s35, 0
      %p268 = por %p266, %p267
      %p269 = scmp.ne.s32.totalorder %s261, %s263
      %p270 = scmp.eq.s32.totalorder %s40, 1
      %p271 = por %p269, %p270
      %p272 = scmp.ne.s32.totalorder %s263, %s264
      %p273 = scmp.eq.s32.totalorder %s40, 0
      %p274 = por %p272, %p273
      %p275 = scmp.ne.s32.totalorder %s263, %s264
      %p276 = scmp.eq.s32.totalorder %s41, 1
      %p277 = por %p275, %p276
      %p279 = scmp.ne.s32.totalorder %s264, %s278
      %p280 = scmp.eq.s32.totalorder %s41, 0
      %p281 = por %p279, %p280
      %s283 = sadd.s32 %s282, 1
      %p286 = scmp.eq.s32.totalorder %s35, 1
      %p287 = scmp.ne.s32.totalorder %s282, %s284
      %p288 = scmp.eq.s32.totalorder %s35, 0
      %p289 = por %p287, %p288
      %p290 = scmp.ne.s32.totalorder %s282, %s284
      %p291 = scmp.eq.s32.totalorder %s40, 1
      %p292 = por %p290, %p291
      %p293 = scmp.ne.s32.totalorder %s284, %s285
      %p294 = scmp.eq.s32.totalorder %s40, 0
      %p295 = por %p293, %p294
      %p296 = scmp.ne.s32.totalorder %s284, %s285
      %p297 = scmp.eq.s32.totalorder %s41, 1
      %p298 = por %p296, %p297
      %p300 = scmp.ne.s32.totalorder %s285, %s299
      %p301 = scmp.eq.s32.totalorder %s41, 0
      %p302 = por %p300, %p301
      %s303 = ssub.s32 %s42, %s54
      %s304 = ssub.s32 %s43, %s50
      %s305 = sor.u32 %s303, %s304
      %p306 = scmp.eq.s32.totalorder %s305, 0
      %s308 = sadd.s32 %s307, 1
      %s309 = scalar_select %p306, %s307, %s308
      %p312 = pneg %p306
      %p313 = scmp.eq.s32.totalorder %s35, 1
      %p314 = por %p312, %p313
      %p315 = scmp.ne.s32.totalorder %s307, %s310
      %p316 = scmp.eq.s32.totalorder %s35, 0
      %p317 = por %p315, %p316
      %p318 = scmp.ne.s32.totalorder %s307, %s310
      %p319 = scmp.eq.s32.totalorder %s40, 1
      %p320 = por %p318, %p319
      %p321 = scmp.ne.s32.totalorder %s310, %s311
      %p322 = scmp.eq.s32.totalorder %s40, 0
      %p323 = por %p321, %p322
      %p324 = scmp.ne.s32.totalorder %s310, %s311
      %p325 = scmp.eq.s32.totalorder %s41, 1
      %p326 = por %p324, %p325
      %p328 = scmp.ne.s32.totalorder %s311, %s327
      %p329 = scmp.eq.s32.totalorder %s41, 0
      %p330 = por %p328, %p329
      %s331 = ssub.s32 %s42, %s54
      %s332 = ssub.s32 %s43, %s50
      %s333 = sor.u32 %s331, %s332
      %p334 = scmp.eq.s32.totalorder %s333, 0
      %s336 = sadd.s32 %s335, 1
      %s337 = scalar_select %p334, %s335, %s336
      %p340 = pneg %p334
      %p341 = scmp.eq.s32.totalorder %s35, 1
      %p342 = por %p340, %p341
      %p343 = scmp.ne.s32.totalorder %s335, %s338
      %p344 = scmp.eq.s32.totalorder %s35, 0
      %p345 = por %p343, %p344
      %p346 = scmp.ne.s32.totalorder %s335, %s338
      %p347 = scmp.eq.s32.totalorder %s40, 1
      %p348 = por %p346, %p347
      %p349 = scmp.ne.s32.totalorder %s338, %s339
      %p350 = scmp.eq.s32.totalorder %s40, 0
      %p351 = por %p349, %p350
      %p352 = scmp.ne.s32.totalorder %s338, %s339
      %p353 = scmp.eq.s32.totalorder %s41, 1
      %p354 = por %p352, %p353
      %p356 = scmp.ne.s32.totalorder %s339, %s355
      %p357 = scmp.eq.s32.totalorder %s41, 0
      %p358 = por %p356, %p357
      %p359 = scmp.le.s32.totalorder 1, %s35
      %p360 = scmp.lt.s32.totalorder %s35, 3
      %p361 = pnand %p359, %p360
      %p362 = pneg %p361
      // Predicated region
      $region9: #{tpu_custom_call.1} parent=5 // pred_check
        _
      $region10: #{tpu_custom_call.1} parent=5 // pred_check_branch
        %364 = sbr.rel (%p361) target = $region12
      $region11: #{tpu_custom_call.1} parent=5 // pred_region
        %s365 = ssub.s32 %s35, 1
        // Predicated region
        $region13: #{tpu_custom_call.1} parent=11 // pred_check
          %p366 = pneg %p148
        $region14: #{tpu_custom_call.1} parent=11 // pred_check_branch
          %368 = sbr.rel (%p366) target = $region16
        $region15: #{tpu_custom_call.1} parent=11 // pred_region
          %s370 = ssub.s32 1024, 1024
          %371 = vsyncadd [#allocation9], %s370
          %s372 = sshll.u32 [#allocation8], 4
          %s373 = int_to_ptr.vmem [resolvable:$true] %s372
          %378 = dma.hbm_to_vmem [thread:$0]  %s3, 1024, %s373, [#allocation9], 64, 64, 4
        $region16: #{tpu_custom_call.1} parent=11 // pred_fallthru
          _
        // Predicated region
        $region17: #{tpu_custom_call.1} parent=11 // pred_check
          %p379 = pneg %p169
        $region18: #{tpu_custom_call.1} parent=11 // pred_check_branch
          %381 = sbr.rel (%p379) target = $region20
        $region19: #{tpu_custom_call.1} parent=11 // pred_region
          %s383 = ssub.s32 64, 64
          %384 = vsyncadd [#allocation9], %s383
          %s385 = sshll.u32 [#allocation10], 4
          %s386 = int_to_ptr.vmem [resolvable:$true] %s385
          %391 = dma.hbm_to_vmem [thread:$0]  %s4, 64, %s386, [#allocation9], 16, 16, 1
        $region20: #{tpu_custom_call.1} parent=11 // pred_fallthru
          _
        // Predicated region
        $region21: #{tpu_custom_call.1} parent=11 // pred_check
          %p392 = pneg %p190
        $region22: #{tpu_custom_call.1} parent=11 // pred_check_branch
          %394 = sbr.rel (%p392) target = $region24
        $region23: #{tpu_custom_call.1} parent=11 // pred_region
          %s396 = ssub.s32 2048, 2048
          %397 = vsyncadd [#allocation12], %s396
          %s398 = sshll.u32 [#allocation11], 4
          %s399 = int_to_ptr.vmem [resolvable:$true] %s398
          %404 = dma.hbm_to_vmem [thread:$0]  %s5, 2048, %s399, [#allocation12], 64, 64, 4
        $region24: #{tpu_custom_call.1} parent=11 // pred_fallthru
          _
        // Predicated region
        $region25: #{tpu_custom_call.1} parent=11 // pred_check
          %p405 = pneg %p211
        $region26: #{tpu_custom_call.1} parent=11 // pred_check_branch
          %407 = sbr.rel (%p405) target = $region28
        $region27: #{tpu_custom_call.1} parent=11 // pred_region
          %s409 = ssub.s32 4096, 4096
          %410 = vsyncadd [#allocation12], %s409
          %s411 = sshll.u32 [#allocation13], 4
          %s412 = int_to_ptr.vmem [resolvable:$true] %s411
          %417 = dma.hbm_to_vmem [thread:$0]  %s6, 4096, %s412, [#allocation12], 128, 128, 8
        $region28: #{tpu_custom_call.1} parent=11 // pred_fallthru
          _
        // Predicated region
        $region29: #{tpu_custom_call.1} parent=11 // pred_check
          %p418 = pneg %p232
        $region30: #{tpu_custom_call.1} parent=11 // pred_check_branch
          %420 = sbr.rel (%p418) target = $region32
        $region31: #{tpu_custom_call.1} parent=11 // pred_region
          %s422 = ssub.s32 1024, 1024
          %423 = vsyncadd [#allocation15], %s422
          %s424 = sshll.u32 [#allocation14], 4
          %s425 = int_to_ptr.vmem [resolvable:$true] %s424
          %430 = dma.hbm_to_vmem [thread:$0]  %s7, 1024, %s425, [#allocation15], 64, 64, 4
        $region32: #{tpu_custom_call.1} parent=11 // pred_fallthru
          _
        // Predicated region
        $region33: #{tpu_custom_call.1} parent=11 // pred_check
          %p431 = pneg %p253
        $region34: #{tpu_custom_call.1} parent=11 // pred_check_branch
          %433 = sbr.rel (%p431) target = $region36
        $region35: #{tpu_custom_call.1} parent=11 // pred_region
          %s435 = ssub.s32 16, 16
          %436 = vsyncadd [#allocation15], %s435
          %s438 = sshll.u32 [#allocation16], 4
          %s439 = int_to_ptr.vmem [resolvable:$true] %s438
          %441 = dma.hbm_to_vmem [thread:$0]  %s8, 16, %s439, [#allocation15]
        $region36: #{tpu_custom_call.1} parent=11 // pred_fallthru
          _
        // Predicated region
        $region37: #{tpu_custom_call.1} parent=11 // pred_check
          %p442 = pneg %p274
        $region38: #{tpu_custom_call.1} parent=11 // pred_check_branch
          %444 = sbr.rel (%p442) target = $region40
        $region39: #{tpu_custom_call.1} parent=11 // pred_region
          %s446 = ssub.s32 16, 16
          %447 = vsyncadd [#allocation18], %s446
          %s449 = sshll.u32 [#allocation17], 4
          %s450 = int_to_ptr.vmem [resolvable:$true] %s449
          %452 = dma.hbm_to_vmem [thread:$0]  %s9, 16, %s450, [#allocation18]
        $region40: #{tpu_custom_call.1} parent=11 // pred_fallthru
          _
        // Predicated region
        $region41: #{tpu_custom_call.1} parent=11 // pred_check
          %p453 = pneg %p295
        $region42: #{tpu_custom_call.1} parent=11 // pred_check_branch
          %455 = sbr.rel (%p453) target = $region44
        $region43: #{tpu_custom_call.1} parent=11 // pred_region
          %s457 = ssub.s32 16, 16
          %458 = vsyncadd [#allocation18], %s457
          %s460 = sshll.u32 [#allocation19], 4
          %s461 = int_to_ptr.vmem [resolvable:$true] %s460
          %463 = dma.hbm_to_vmem [thread:$0]  %s10, 16, %s461, [#allocation18]
        $region44: #{tpu_custom_call.1} parent=11 // pred_fallthru
          _
      $region12: #{tpu_custom_call.1} parent=5 // pred_fallthru
        _
      %p464 = scmp.lt.s32.totalorder %s35, 2
      // Predicated region
      $region45: #{tpu_custom_call.1} parent=5 // pred_check
        %p465 = pneg %p464
      $region46: #{tpu_custom_call.1} parent=5 // pred_check_branch
        %467 = sbr.rel (%p465) target = $region48
      $region47: #{tpu_custom_call.1} parent=5 // pred_region
        // Predicated region
        $region49: #{tpu_custom_call.1} parent=47 // pred_check
          %p468 = pneg %p69
        $region50: #{tpu_custom_call.1} parent=47 // pred_check_branch
          %470 = sbr.rel (%p468) target = $region52
        $region51: #{tpu_custom_call.1} parent=47 // pred_region
          %s471 = sand.u32 %s59, 1
          %s472 = scalar_lea.sflag [#allocation3], %s471
          %s473 = sand.u32 %s59, 1
          %s474 = smul.addr %s473, 8
          %s475 = scalar_lea.vmem [#allocation2], %s474
          %s477 = ssub.s32 128, 128
          %478 = vsyncadd %s472, %s477
          %s479 = sadd.s32 %s43, %s42
          %s480 = smul.addr %s479, 128
          %s481 = scalar_lea.hbm %s0, %s480
          %s483 = sshll.u32 %s475, 4
          %s484 = int_to_ptr.vmem [resolvable:$true] %s483
          %486 = dma.hbm_to_vmem [thread:$0]  %s481, 128, %s484, %s472
        $region52: #{tpu_custom_call.1} parent=47 // pred_fallthru
          _
        // Predicated region
        $region53: #{tpu_custom_call.1} parent=47 // pred_check
          %p487 = pneg %p95
        $region54: #{tpu_custom_call.1} parent=47 // pred_check_branch
          %489 = sbr.rel (%p487) target = $region56
        $region55: #{tpu_custom_call.1} parent=47 // pred_region
          %s490 = sand.u32 %s35, 1
          %s491 = scalar_lea.sflag [#allocation6], %s490
          %s492 = sand.u32 %s85, 1
          %s493 = smul.addr %s492, 8
          %s494 = scalar_lea.vmem [#allocation5], %s493
          %s496 = ssub.s32 128, 128
          %497 = vsyncadd %s491, %s496
          %s498 = smul.addr %s42, 2
          %s499 = smul.addr %s498, 64
          %s500 = scalar_lea.hbm %s1, %s499
          %s501 = sshll.u32 %s494, 4
          %s502 = int_to_ptr.vmem [resolvable:$true] %s501
          %507 = dma.hbm_to_vmem [thread:$0]  %s500, 128, %s502, %s491, 64, 64, 4
        $region56: #{tpu_custom_call.1} parent=47 // pred_fallthru
          _
        // Predicated region
        $region57: #{tpu_custom_call.1} parent=47 // pred_check
          %p508 = pneg %p121
        $region58: #{tpu_custom_call.1} parent=47 // pred_check_branch
          %510 = sbr.rel (%p508) target = $region60
        $region59: #{tpu_custom_call.1} parent=47 // pred_region
          %s511 = sand.u32 %s35, 1
          %s512 = scalar_lea.sflag [#allocation6], %s511
          %s513 = sand.u32 %s111, 1
          %s514 = scalar_lea.vmem [#allocation7], %s513
          %s516 = ssub.s32 16, 16
          %517 = vsyncadd %s512, %s516
          %s518 = smul.addr %s42, 16
          %s519 = scalar_lea.hbm %s2, %s518
          %s521 = sshll.u32 %s514, 4
          %s522 = int_to_ptr.vmem [resolvable:$true] %s521
          %524 = dma.hbm_to_vmem [thread:$0]  %s519, 16, %s522, %s512
        $region60: #{tpu_custom_call.1} parent=47 // pred_fallthru
          _
      $region48: #{tpu_custom_call.1} parent=5 // pred_fallthru
        _
      %p525 = scmp.le.s32.totalorder 1, %s35
      %p526 = scmp.lt.s32.totalorder %s35, 3
      %p527 = pnand %p525, %p526
      %p528 = pneg %p527
      // Predicated region
      $region61: #{tpu_custom_call.1} parent=5 // pred_check
        _
      $region62: #{tpu_custom_call.1} parent=5 // pred_check_branch
        %530 = sbr.rel (%p527) target = $region64
      $region63: #{tpu_custom_call.1} parent=5 // pred_region
        %s531 = ssub.s32 %s35, 1
        %s532 = sand.u32 %s62, 1
        %s533 = scalar_lea.sflag [#allocation3], %s532
        %s534 = sand.u32 %s62, 1
        %s535 = smul.addr %s534, 8
        %s536 = scalar_lea.vmem [#allocation2], %s535
        // Predicated region
        $region65: #{tpu_custom_call.1} parent=63 // pred_check
          %p537 = pneg %p75
        $region66: #{tpu_custom_call.1} parent=63 // pred_check_branch
          %539 = sbr.rel (%p537) target = $region68
        $region67: #{tpu_custom_call.1} parent=63 // pred_region
          %540 = dma.done %s533, 128
        $region68: #{tpu_custom_call.1} parent=63 // pred_fallthru
          _
        %s541 = sand.u32 %s40, 1
        %s542 = scalar_lea.sflag [#allocation6], %s541
        %s543 = sand.u32 %s88, 1
        %s544 = smul.addr %s543, 8
        %s545 = scalar_lea.vmem [#allocation5], %s544
        // Predicated region
        $region69: #{tpu_custom_call.1} parent=63 // pred_check
          %p546 = pneg %p101
        $region70: #{tpu_custom_call.1} parent=63 // pred_check_branch
          %548 = sbr.rel (%p546) target = $region72
        $region71: #{tpu_custom_call.1} parent=63 // pred_region
          %549 = dma.done %s542, 128
        $region72: #{tpu_custom_call.1} parent=63 // pred_fallthru
          _
        %s550 = sand.u32 %s40, 1
        %s551 = scalar_lea.sflag [#allocation6], %s550
        %s552 = sand.u32 %s114, 1
        %s553 = scalar_lea.vmem [#allocation7], %s552
        // Predicated region
        $region73: #{tpu_custom_call.1} parent=63 // pred_check
          %p554 = pneg %p127
        $region74: #{tpu_custom_call.1} parent=63 // pred_check_branch
          %556 = sbr.rel (%p554) target = $region76
        $region75: #{tpu_custom_call.1} parent=63 // pred_region
          %557 = dma.done %s551, 16
        $region76: #{tpu_custom_call.1} parent=63 // pred_fallthru
          _
        // Predicated region
        $region77: #{tpu_custom_call.1} parent=63 // pred_check
          %p558 = pneg %p148
        $region78: #{tpu_custom_call.1} parent=63 // pred_check_branch
          %560 = sbr.rel (%p558) target = $region80
        $region79: #{tpu_custom_call.1} parent=63 // pred_region
          %561 = dma.done [#allocation9], 1024
        $region80: #{tpu_custom_call.1} parent=63 // pred_fallthru
          _
        // Predicated region
        $region81: #{tpu_custom_call.1} parent=63 // pred_check
          %p562 = pneg %p169
        $region82: #{tpu_custom_call.1} parent=63 // pred_check_branch
          %564 = sbr.rel (%p562) target = $region84
        $region83: #{tpu_custom_call.1} parent=63 // pred_region
          %565 = dma.done [#allocation9], 64
        $region84: #{tpu_custom_call.1} parent=63 // pred_fallthru
          _
        // Predicated region
        $region85: #{tpu_custom_call.1} parent=63 // pred_check
          %p566 = pneg %p190
        $region86: #{tpu_custom_call.1} parent=63 // pred_check_branch
          %568 = sbr.rel (%p566) target = $region88
        $region87: #{tpu_custom_call.1} parent=63 // pred_region
          %569 = dma.done [#allocation12], 2048
        $region88: #{tpu_custom_call.1} parent=63 // pred_fallthru
          _
        // Predicated region
        $region89: #{tpu_custom_call.1} parent=63 // pred_check
          %p570 = pneg %p211
        $region90: #{tpu_custom_call.1} parent=63 // pred_check_branch
          %572 = sbr.rel (%p570) target = $region92
        $region91: #{tpu_custom_call.1} parent=63 // pred_region
          %573 = dma.done [#allocation12], 4096
        $region92: #{tpu_custom_call.1} parent=63 // pred_fallthru
          _
        // Predicated region
        $region93: #{tpu_custom_call.1} parent=63 // pred_check
          %p574 = pneg %p232
        $region94: #{tpu_custom_call.1} parent=63 // pred_check_branch
          %576 = sbr.rel (%p574) target = $region96
        $region95: #{tpu_custom_call.1} parent=63 // pred_region
          %577 = dma.done [#allocation15], 1024
        $region96: #{tpu_custom_call.1} parent=63 // pred_fallthru
          _
        // Predicated region
        $region97: #{tpu_custom_call.1} parent=63 // pred_check
          %p578 = pneg %p253
        $region98: #{tpu_custom_call.1} parent=63 // pred_check_branch
          %580 = sbr.rel (%p578) target = $region100
        $region99: #{tpu_custom_call.1} parent=63 // pred_region
          %581 = dma.done [#allocation15], 16
        $region100: #{tpu_custom_call.1} parent=63 // pred_fallthru
          _
        // Predicated region
        $region101: #{tpu_custom_call.1} parent=63 // pred_check
          %p582 = pneg %p274
        $region102: #{tpu_custom_call.1} parent=63 // pred_check_branch
          %584 = sbr.rel (%p582) target = $region104
        $region103: #{tpu_custom_call.1} parent=63 // pred_region
          %585 = dma.done [#allocation18], 16
        $region104: #{tpu_custom_call.1} parent=63 // pred_fallthru
          _
        // Predicated region
        $region105: #{tpu_custom_call.1} parent=63 // pred_check
          %p586 = pneg %p295
        $region106: #{tpu_custom_call.1} parent=63 // pred_check_branch
          %588 = sbr.rel (%p586) target = $region108
        $region107: #{tpu_custom_call.1} parent=63 // pred_region
          %589 = dma.done [#allocation18], 16
        $region108: #{tpu_custom_call.1} parent=63 // pred_fallthru
          _
        %s590 = sand.u32 %s62, 1
        %s591 = scalar_lea.sflag [#allocation3], %s590
        %s592 = sand.u32 %s62, 1
        %s593 = smul.addr %s592, 8
        %s594 = scalar_lea.vmem [#allocation2], %s593
        %p595 = pneg %p75
        %p596 = pneg %p72
        %s597 = sand.u32 %s40, 1
        %s598 = scalar_lea.sflag [#allocation6], %s597
        %s599 = sand.u32 %s88, 1
        %s600 = smul.addr %s599, 8
        %s601 = scalar_lea.vmem [#allocation5], %s600
        %p602 = pneg %p101
        %p603 = pneg %p98
        %s604 = sand.u32 %s40, 1
        %s605 = scalar_lea.sflag [#allocation6], %s604
        %s606 = sand.u32 %s114, 1
        %s607 = scalar_lea.vmem [#allocation7], %s606
        %p608 = pneg %p127
        %p609 = pneg %p124
        %p610 = pneg %p148
        %p611 = pneg %p145
        %p612 = pneg %p169
        %p613 = pneg %p166
        %p614 = pneg %p190
        %p615 = pneg %p187
        %p616 = pneg %p211
        %p617 = pneg %p208
        %p618 = pneg %p232
        %p619 = pneg %p229
        %p620 = pneg %p253
        %p621 = pneg %p250
        %p622 = pneg %p274
        %p623 = pneg %p271
        %p624 = pneg %p295
        %p625 = pneg %p292
        %p626 = pneg %p323
        %p627 = pneg %p320
        %s628 = sand.u32 %s310, 1
        %s629 = scalar_lea.sflag [#allocation4], %s628
        %s630 = sand.u32 %s310, 1
        %s631 = smul.addr %s630, 8
        %s632 = scalar_lea.vmem [#allocation20], %s631
        %p633 = pneg %p351
        %p634 = pneg %p348
        %s635 = sand.u32 %s338, 1
        %s636 = scalar_lea.sflag [#allocation22], %s635
        %s637 = sand.u32 %s338, 1
        %s638 = smul.addr %s637, 32
        %s639 = scalar_lea.vmem [#allocation21], %s638
        %v641 = vld [vmem:[%s536] sm:$0xff]
        %v642 = vld [vmem:[%s545] sm:$0xf]
        %v643 = vld [vmem:[%s545 + $0x4] sm:$0xf]
        %v644 = vld [vmem:[%s553] sm:$0x1]
        %v645 = vpack.c.bf16 %v641, %v641
        %v646 = vld [vmem:[#allocation11] sm:$0xf]
        %v647 = vld [vmem:[#allocation11 + $0x4] sm:$0xf]
        %v648 = vld [vmem:[#allocation11 + $0x8] sm:$0xf]
        %v649 = vld [vmem:[#allocation11 + $0xc] sm:$0xf]
        %v650 = vld [vmem:[#allocation11 + $0x10] sm:$0xf]
        %v651 = vld [vmem:[#allocation11 + $0x14] sm:$0xf]
        %v652 = vld [vmem:[#allocation11 + $0x18] sm:$0xf]
        %v653 = vld [vmem:[#allocation11 + $0x1c] sm:$0xf]
        %v654 = vld [vmem:[#allocation11 + $0x20] sm:$0xf]
        %v655 = vld [vmem:[#allocation11 + $0x24] sm:$0xf]
        %v656 = vld [vmem:[#allocation11 + $0x28] sm:$0xf]
        %v657 = vld [vmem:[#allocation11 + $0x2c] sm:$0xf]
        %v658 = vld [vmem:[#allocation11 + $0x30] sm:$0xf]
        %v659 = vld [vmem:[#allocation11 + $0x34] sm:$0xf]
        %v660 = vld [vmem:[#allocation11 + $0x38] sm:$0xf]
        %v661 = vld [vmem:[#allocation11 + $0x3c] sm:$0xf]
        %v662 = vld [vmem:[#allocation11 + $0x40] sm:$0xf]
        %v663 = vld [vmem:[#allocation11 + $0x44] sm:$0xf]
        %v664 = vld [vmem:[#allocation11 + $0x48] sm:$0xf]
        %v665 = vld [vmem:[#allocation11 + $0x4c] sm:$0xf]
        %v666 = vld [vmem:[#allocation11 + $0x50] sm:$0xf]
        %v667 = vld [vmem:[#allocation11 + $0x54] sm:$0xf]
        %v668 = vld [vmem:[#allocation11 + $0x58] sm:$0xf]
        %v669 = vld [vmem:[#allocation11 + $0x5c] sm:$0xf]
        %v670 = vld [vmem:[#allocation11 + $0x60] sm:$0xf]
        %v671 = vld [vmem:[#allocation11 + $0x64] sm:$0xf]
        %v672 = vld [vmem:[#allocation11 + $0x68] sm:$0xf]
        %v673 = vld [vmem:[#allocation11 + $0x6c] sm:$0xf]
        %v674 = vld [vmem:[#allocation11 + $0x70] sm:$0xf]
        %v675 = vld [vmem:[#allocation11 + $0x74] sm:$0xf]
        %v676 = vld [vmem:[#allocation11 + $0x78] sm:$0xf]
        %v677 = vld [vmem:[#allocation11 + $0x7c] sm:$0xf]
        %v678 = vld [vmem:[#allocation13] sm:$0xff]
        %v679 = vld [vmem:[#allocation13 + $0x8] sm:$0xff]
        %v680 = vld [vmem:[#allocation13 + $0x10] sm:$0xff]
        %v681 = vld [vmem:[#allocation13 + $0x18] sm:$0xff]
        %v682 = vld [vmem:[#allocation13 + $0x20] sm:$0xff]
        %v683 = vld [vmem:[#allocation13 + $0x28] sm:$0xff]
        %v684 = vld [vmem:[#allocation13 + $0x30] sm:$0xff]
        %v685 = vld [vmem:[#allocation13 + $0x38] sm:$0xff]
        %v686 = vld [vmem:[#allocation13 + $0x40] sm:$0xff]
        %v687 = vld [vmem:[#allocation13 + $0x48] sm:$0xff]
        %v688 = vld [vmem:[#allocation13 + $0x50] sm:$0xff]
        %v689 = vld [vmem:[#allocation13 + $0x58] sm:$0xff]
        %v690 = vld [vmem:[#allocation13 + $0x60] sm:$0xff]
        %v691 = vld [vmem:[#allocation13 + $0x68] sm:$0xff]
        %v692 = vld [vmem:[#allocation13 + $0x70] sm:$0xff]
        %v693 = vld [vmem:[#allocation13 + $0x78] sm:$0xff]
        %v694 = vld [vmem:[#allocation13 + $0x80] sm:$0xff]
        %v695 = vld [vmem:[#allocation13 + $0x88] sm:$0xff]
        %v696 = vld [vmem:[#allocation13 + $0x90] sm:$0xff]
        %v697 = vld [vmem:[#allocation13 + $0x98] sm:$0xff]
        %v698 = vld [vmem:[#allocation13 + $0xa0] sm:$0xff]
        %v699 = vld [vmem:[#allocation13 + $0xa8] sm:$0xff]
        %v700 = vld [vmem:[#allocation13 + $0xb0] sm:$0xff]
        %v701 = vld [vmem:[#allocation13 + $0xb8] sm:$0xff]
        %v702 = vld [vmem:[#allocation13 + $0xc0] sm:$0xff]
        %v703 = vld [vmem:[#allocation13 + $0xc8] sm:$0xff]
        %v704 = vld [vmem:[#allocation13 + $0xd0] sm:$0xff]
        %v705 = vld [vmem:[#allocation13 + $0xd8] sm:$0xff]
        %v706 = vld [vmem:[#allocation13 + $0xe0] sm:$0xff]
        %v707 = vld [vmem:[#allocation13 + $0xe8] sm:$0xff]
        %v708 = vld [vmem:[#allocation13 + $0xf0] sm:$0xff]
        %v709 = vld [vmem:[#allocation13 + $0xf8] sm:$0xff]
        %711 = vset.pattern.permute.xlu0 0
        %712 = vperm.xlu0 %711, %v678
        %v713 = vpop.permute.xlu0 %712
        %716 = vset.pattern.permute.xlu0 0
        %717 = vperm.xlu0 %716, %v679
        %v718 = vpop.permute.xlu0 %717
        %721 = vset.pattern.permute.xlu0 0
        %722 = vperm.xlu0 %721, %v680
        %v723 = vpop.permute.xlu0 %722
        %726 = vset.pattern.permute.xlu0 0
        %727 = vperm.xlu0 %726, %v681
        %v728 = vpop.permute.xlu0 %727
        %731 = vset.pattern.permute.xlu0 0
        %732 = vperm.xlu0 %731, %v682
        %v733 = vpop.permute.xlu0 %732
        %736 = vset.pattern.permute.xlu0 0
        %737 = vperm.xlu0 %736, %v683
        %v738 = vpop.permute.xlu0 %737
        %741 = vset.pattern.permute.xlu0 0
        %742 = vperm.xlu0 %741, %v684
        %v743 = vpop.permute.xlu0 %742
        %746 = vset.pattern.permute.xlu0 0
        %747 = vperm.xlu0 %746, %v685
        %v748 = vpop.permute.xlu0 %747
        %751 = vset.pattern.permute.xlu0 0
        %752 = vperm.xlu0 %751, %v686
        %v753 = vpop.permute.xlu0 %752
        %756 = vset.pattern.permute.xlu0 0
        %757 = vperm.xlu0 %756, %v687
        %v758 = vpop.permute.xlu0 %757
        %761 = vset.pattern.permute.xlu0 0
        %762 = vperm.xlu0 %761, %v688
        %v763 = vpop.permute.xlu0 %762
        %766 = vset.pattern.permute.xlu0 0
        %767 = vperm.xlu0 %766, %v689
        %v768 = vpop.permute.xlu0 %767
        %771 = vset.pattern.permute.xlu0 0
        %772 = vperm.xlu0 %771, %v690
        %v773 = vpop.permute.xlu0 %772
        %776 = vset.pattern.permute.xlu0 0
        %777 = vperm.xlu0 %776, %v691
        %v778 = vpop.permute.xlu0 %777
        %781 = vset.pattern.permute.xlu0 0
        %782 = vperm.xlu0 %781, %v692
        %v783 = vpop.permute.xlu0 %782
        %786 = vset.pattern.permute.xlu0 0
        %787 = vperm.xlu0 %786, %v693
        %v788 = vpop.permute.xlu0 %787
        %791 = vset.pattern.permute.xlu0 0
        %792 = vperm.xlu0 %791, %v694
        %v793 = vpop.permute.xlu0 %792
        %796 = vset.pattern.permute.xlu0 0
        %797 = vperm.xlu0 %796, %v695
        %v798 = vpop.permute.xlu0 %797
        %801 = vset.pattern.permute.xlu0 0
        %802 = vperm.xlu0 %801, %v696
        %v803 = vpop.permute.xlu0 %802
        %806 = vset.pattern.permute.xlu0 0
        %807 = vperm.xlu0 %806, %v697
        %v808 = vpop.permute.xlu0 %807
        %811 = vset.pattern.permute.xlu0 0
        %812 = vperm.xlu0 %811, %v698
        %v813 = vpop.permute.xlu0 %812
        %816 = vset.pattern.permute.xlu0 0
        %817 = vperm.xlu0 %816, %v699
        %v818 = vpop.permute.xlu0 %817
        %821 = vset.pattern.permute.xlu0 0
        %822 = vperm.xlu0 %821, %v700
        %v823 = vpop.permute.xlu0 %822
        %826 = vset.pattern.permute.xlu0 0
        %827 = vperm.xlu0 %826, %v701
        %v828 = vpop.permute.xlu0 %827
        %831 = vset.pattern.permute.xlu0 0
        %832 = vperm.xlu0 %831, %v702
        %v833 = vpop.permute.xlu0 %832
        %836 = vset.pattern.permute.xlu0 0
        %837 = vperm.xlu0 %836, %v703
        %v838 = vpop.permute.xlu0 %837
        %841 = vset.pattern.permute.xlu0 0
        %842 = vperm.xlu0 %841, %v704
        %v843 = vpop.permute.xlu0 %842
        %846 = vset.pattern.permute.xlu0 0
        %847 = vperm.xlu0 %846, %v705
        %v848 = vpop.permute.xlu0 %847
        %851 = vset.pattern.permute.xlu0 0
        %852 = vperm.xlu0 %851, %v706
        %v853 = vpop.permute.xlu0 %852
        %856 = vset.pattern.permute.xlu0 0
        %857 = vperm.xlu0 %856, %v707
        %v858 = vpop.permute.xlu0 %857
        %861 = vset.pattern.permute.xlu0 0
        %862 = vperm.xlu0 %861, %v708
        %v863 = vpop.permute.xlu0 %862
        %866 = vset.pattern.permute.xlu0 0
        %867 = vperm.xlu0 %866, %v709
        %v868 = vpop.permute.xlu0 %867
        %v902 = vunpack.c.l.b16 %v646
        %v903 = vunpack.c.l.b16 %v647
        %v904 = vunpack.c.l.b16 %v648
        %v905 = vunpack.c.l.b16 %v649
        %v906 = vunpack.c.l.b16 %v650
        %v907 = vunpack.c.l.b16 %v651
        %v908 = vunpack.c.l.b16 %v652
        %v909 = vunpack.c.l.b16 %v653
        %v910 = vunpack.c.l.b16 %v654
        %v911 = vunpack.c.l.b16 %v655
        %v912 = vunpack.c.l.b16 %v656
        %v913 = vunpack.c.l.b16 %v657
        %v914 = vunpack.c.l.b16 %v658
        %v915 = vunpack.c.l.b16 %v659
        %v916 = vunpack.c.l.b16 %v660
        %v917 = vunpack.c.l.b16 %v661
        %v918 = vunpack.c.l.b16 %v662
        %v919 = vunpack.c.l.b16 %v663
        %v920 = vunpack.c.l.b16 %v664
        %v921 = vunpack.c.l.b16 %v665
        %v922 = vunpack.c.l.b16 %v666
        %v923 = vunpack.c.l.b16 %v667
        %v924 = vunpack.c.l.b16 %v668
        %v925 = vunpack.c.l.b16 %v669
        %v926 = vunpack.c.l.b16 %v670
        %v927 = vunpack.c.l.b16 %v671
        %v928 = vunpack.c.l.b16 %v672
        %v929 = vunpack.c.l.b16 %v673
        %v930 = vunpack.c.l.b16 %v674
        %v931 = vunpack.c.l.b16 %v675
        %v932 = vunpack.c.l.b16 %v676
        %v933 = vunpack.c.l.b16 %v677
        %v934 = vpack.c.b16 %v903, %v902
        %v935 = vpack.c.b16 %v905, %v904
        %v936 = vpack.c.b16 %v907, %v906
        %v937 = vpack.c.b16 %v909, %v908
        %v938 = vpack.c.b16 %v911, %v910
        %v939 = vpack.c.b16 %v913, %v912
        %v940 = vpack.c.b16 %v915, %v914
        %v941 = vpack.c.b16 %v917, %v916
        %v942 = vpack.c.b16 %v919, %v918
        %v943 = vpack.c.b16 %v921, %v920
        %v944 = vpack.c.b16 %v923, %v922
        %v945 = vpack.c.b16 %v925, %v924
        %v946 = vpack.c.b16 %v927, %v926
        %v947 = vpack.c.b16 %v929, %v928
        %v948 = vpack.c.b16 %v931, %v930
        %v949 = vpack.c.b16 %v933, %v932
        %v968 = vunpack.c.l.b16 %v642
        %v969 = vunpack.c.l.b16 %v643
        %v970 = vpack.c.b16 %v969, %v968
        %972 = vmatprep.subr.bf16.mxu0 0
        %973 = vmatpush1.bf16.xpose.msra.mxu0 %v970
        %974 = vmatprep.subr.bf16.mxu0 0
        %975 = vmatpush1.bf16.xpose.msra.mxu0 0
        %976 = vmatprep.subr.bf16.mxu0 0
        %977 = vmatpush1.bf16.xpose.msra.mxu0 0
        %978 = vmatprep.subr.bf16.mxu0 0
        %979 = vmatpush1.bf16.xpose.msra.mxu0 0
        %980 = vmatprep.subr.bf16.mxu0 0
        %981 = vmatpush1.bf16.xpose.msra.mxu0 0
        %982 = vmatprep.subr.bf16.mxu0 0
        %983 = vmatpush1.bf16.xpose.msra.mxu0 0
        %984 = vmatprep.subr.bf16.mxu0 0
        %985 = vmatpush1.bf16.xpose.msra.mxu0 0
        %986 = vmatprep.subr.bf16.mxu0 0
        %987 = vmatpush1.bf16.xpose.msra.mxu0 0
        %988 = vmatprep.subr.bf16.mxu0 0
        %989 = vmatpush1.bf16.xpose.msra.mxu0 0
        %990 = vmatprep.subr.bf16.mxu0 0
        %991 = vmatpush1.bf16.xpose.msra.mxu0 0
        %992 = vmatprep.subr.bf16.mxu0 0
        %993 = vmatpush1.bf16.xpose.msra.mxu0 0
        %994 = vmatprep.subr.bf16.mxu0 0
        %995 = vmatpush1.bf16.xpose.msra.mxu0 0
        %996 = vmatprep.subr.bf16.mxu0 0
        %997 = vmatpush1.bf16.xpose.msra.mxu0 0
        %998 = vmatprep.subr.bf16.mxu0 0
        %999 = vmatpush1.bf16.xpose.msra.mxu0 0
        %1000 = vmatprep.subr.bf16.mxu0 0
        %1001 = vmatpush1.bf16.xpose.msra.mxu0 0
        %1002 = vmatprep.subr.bf16.mxu0 0
        %1003 = vmatpush1.bf16.xpose.msra.mxu0 0
        %1004 = vmatprep.mubr.bf16.mxu0 0
        %1005 = vmatmul.mubr.bf16.gmra.mrb[0].mxu0 %v934
        %v1006 = vpop.f32.mrb[0].mxu0
        %v1007 = vadd.f32 %v713, %v1006
        %v1008 = vpop.f32.mrb[0].mxu0
        %v1009 = vpop.f32.mrb[0].mxu0
        %v1010 = vadd.f32 %v718, %v1009
        %v1011 = vpop.f32.mrb[0].mxu0
        %1012 = vmatprep.mubr.bf16.mxu0 0
        %1013 = vmatmul.mubr.bf16.gmra.mrb[0].mxu0 %v935
        %v1014 = vpop.f32.mrb[0].mxu0
        %v1015 = vadd.f32 %v723, %v1014
        %v1016 = vpop.f32.mrb[0].mxu0
        %v1017 = vpop.f32.mrb[0].mxu0
        %v1018 = vadd.f32 %v728, %v1017
        %v1019 = vpop.f32.mrb[0].mxu0
        %1020 = vmatprep.mubr.bf16.mxu0 0
        %1021 = vmatmul.mubr.bf16.gmra.mrb[0].mxu0 %v936
        %v1022 = vpop.f32.mrb[0].mxu0
        %v1023 = vadd.f32 %v733, %v1022
        %v1024 = vpop.f32.mrb[0].mxu0
        %v1025 = vpop.f32.mrb[0].mxu0
        %v1026 = vadd.f32 %v738, %v1025
        %v1027 = vpop.f32.mrb[0].mxu0
        %1028 = vmatprep.mubr.bf16.mxu0 0
        %1029 = vmatmul.mubr.bf16.gmra.mrb[0].mxu0 %v937
        %v1030 = vpop.f32.mrb[0].mxu0
        %v1031 = vadd.f32 %v743, %v1030
        %v1032 = vpop.f32.mrb[0].mxu0
        %v1033 = vpop.f32.mrb[0].mxu0
        %v1034 = vadd.f32 %v748, %v1033
        %v1035 = vpop.f32.mrb[0].mxu0
        %1036 = vmatprep.mubr.bf16.mxu0 0
        %1037 = vmatmul.mubr.bf16.gmra.mrb[0].mxu0 %v938
        %v1038 = vpop.f32.mrb[0].mxu0
        %v1039 = vadd.f32 %v753, %v1038
        %v1040 = vpop.f32.mrb[0].mxu0
        %v1041 = vpop.f32.mrb[0].mxu0
        %v1042 = vadd.f32 %v758, %v1041
        %v1043 = vpop.f32.mrb[0].mxu0
        %1044 = vmatprep.mubr.bf16.mxu0 0
        %1045 = vmatmul.mubr.bf16.gmra.mrb[0].mxu0 %v939
        %v1046 = vpop.f32.mrb[0].mxu0
        %v1047 = vadd.f32 %v763, %v1046
        %v1048 = vpop.f32.mrb[0].mxu0
        %v1049 = vpop.f32.mrb[0].mxu0
        %v1050 = vadd.f32 %v768, %v1049
        %v1051 = vpop.f32.mrb[0].mxu0
        %1052 = vmatprep.mubr.bf16.mxu0 0
        %1053 = vmatmul.mubr.bf16.gmra.mrb[0].mxu0 %v940
        %v1054 = vpop.f32.mrb[0].mxu0
        %v1055 = vadd.f32 %v773, %v1054
        %v1056 = vpop.f32.mrb[0].mxu0
        %v1057 = vpop.f32.mrb[0].mxu0
        %v1058 = vadd.f32 %v778, %v1057
        %v1059 = vpop.f32.mrb[0].mxu0
        %1060 = vmatprep.mubr.bf16.mxu0 0
        %1061 = vmatmul.mubr.bf16.gmra.mrb[0].mxu0 %v941
        %v1062 = vpop.f32.mrb[0].mxu0
        %v1063 = vadd.f32 %v783, %v1062
        %v1064 = vpop.f32.mrb[0].mxu0
        %v1065 = vpop.f32.mrb[0].mxu0
        %v1066 = vadd.f32 %v788, %v1065
        %v1067 = vpop.f32.mrb[0].mxu0
        %1068 = vmatprep.mubr.bf16.mxu0 0
        %1069 = vmatmul.mubr.bf16.gmra.mrb[0].mxu0 %v942
        %v1070 = vpop.f32.mrb[0].mxu0
        %v1071 = vadd.f32 %v793, %v1070
        %v1072 = vpop.f32.mrb[0].mxu0
        %v1073 = vpop.f32.mrb[0].mxu0
        %v1074 = vadd.f32 %v798, %v1073
        %v1075 = vpop.f32.mrb[0].mxu0
        %1076 = vmatprep.mubr.bf16.mxu0 0
        %1077 = vmatmul.mubr.bf16.gmra.mrb[0].mxu0 %v943
        %v1078 = vpop.f32.mrb[0].mxu0
        %v1079 = vadd.f32 %v803, %v1078
        %v1080 = vpop.f32.mrb[0].mxu0
        %v1081 = vpop.f32.mrb[0].mxu0
        %v1082 = vadd.f32 %v808, %v1081
        %v1083 = vpop.f32.mrb[0].mxu0
        %1084 = vmatprep.mubr.bf16.mxu0 0
        %1085 = vmatmul.mubr.bf16.gmra.mrb[0].mxu0 %v944
        %v1086 = vpop.f32.mrb[0].mxu0
        %v1087 = vadd.f32 %v813, %v1086
        %v1088 = vpop.f32.mrb[0].mxu0
        %v1089 = vpop.f32.mrb[0].mxu0
        %v1090 = vadd.f32 %v818, %v1089
        %v1091 = vpop.f32.mrb[0].mxu0
        %1092 = vmatprep.mubr.bf16.mxu0 0
        %1093 = vmatmul.mubr.bf16.gmra.mrb[0].mxu0 %v945
        %v1094 = vpop.f32.mrb[0].mxu0
        %v1095 = vadd.f32 %v823, %v1094
        %v1096 = vpop.f32.mrb[0].mxu0
        %v1097 = vpop.f32.mrb[0].mxu0
        %v1098 = vadd.f32 %v828, %v1097
        %v1099 = vpop.f32.mrb[0].mxu0
        %1100 = vmatprep.mubr.bf16.mxu0 0
        %1101 = vmatmul.mubr.bf16.gmra.mrb[0].mxu0 %v946
        %v1102 = vpop.f32.mrb[0].mxu0
        %v1103 = vadd.f32 %v833, %v1102
        %v1104 = vpop.f32.mrb[0].mxu0
        %v1105 = vpop.f32.mrb[0].mxu0
        %v1106 = vadd.f32 %v838, %v1105
        %v1107 = vpop.f32.mrb[0].mxu0
        %1108 = vmatprep.mubr.bf16.mxu0 0
        %1109 = vmatmul.mubr.bf16.gmra.mrb[0].mxu0 %v947
        %v1110 = vpop.f32.mrb[0].mxu0
        %v1111 = vadd.f32 %v843, %v1110
        %v1112 = vpop.f32.mrb[0].mxu0
        %v1113 = vpop.f32.mrb[0].mxu0
        %v1114 = vadd.f32 %v848, %v1113
        %v1115 = vpop.f32.mrb[0].mxu0
        %1116 = vmatprep.mubr.bf16.mxu0 0
        %1117 = vmatmul.mubr.bf16.gmra.mrb[0].mxu0 %v948
        %v1118 = vpop.f32.mrb[0].mxu0
        %v1119 = vadd.f32 %v853, %v1118
        %v1120 = vpop.f32.mrb[0].mxu0
        %v1121 = vpop.f32.mrb[0].mxu0
        %v1122 = vadd.f32 %v858, %v1121
        %v1123 = vpop.f32.mrb[0].mxu0
        %1124 = vmatprep.mubr.bf16.mxu0 0
        %1125 = vmatmul.mubr.bf16.gmra.mrb[0].mxu0 %v949
        %v1126 = vpop.f32.mrb[0].mxu0
        %v1127 = vadd.f32 %v863, %v1126
        %v1128 = vpop.f32.mrb[0].mxu0
        %v1129 = vpop.f32.mrb[0].mxu0
        %v1130 = vadd.f32 %v868, %v1129
        %v1131 = vpop.f32.mrb[0].mxu0
        %1132 = vdwg.mxu0
        %v1133 = vpack.c.bf16 %v1010, %v1007
        %v1134 = vpack.c.bf16 %v1018, %v1015
        %v1135 = vpack.c.bf16 %v1026, %v1023
        %v1136 = vpack.c.bf16 %v1034, %v1031
        %v1137 = vpack.c.bf16 %v1042, %v1039
        %v1138 = vpack.c.bf16 %v1050, %v1047
        %v1139 = vpack.c.bf16 %v1058, %v1055
        %v1140 = vpack.c.bf16 %v1066, %v1063
        %v1141 = vpack.c.bf16 %v1074, %v1071
        %v1142 = vpack.c.bf16 %v1082, %v1079
        %v1143 = vpack.c.bf16 %v1090, %v1087
        %v1144 = vpack.c.bf16 %v1098, %v1095
        %v1145 = vpack.c.bf16 %v1106, %v1103
        %v1146 = vpack.c.bf16 %v1114, %v1111
        %v1147 = vpack.c.bf16 %v1122, %v1119
        %v1148 = vpack.c.bf16 %v1130, %v1127
        %vm1149 = vcmp.eq.f32.partialorder %v644, 0.0
        %v1150 = vsel %vm1149, -1e+30, 0.0
        %v1152 = vlaneseq
        %v1153 = vshrl.u32 %v1152, 7
        %v1154 = vsub.s32 0, %v1153
        %v1155 = vrot.slane %v1150, %v1154
        %v1157 = vld [vmem:[#allocation8] sm:$0xf]
        %v1158 = vld [vmem:[#allocation8 + $0x4] sm:$0xf]
        %v1159 = vld [vmem:[#allocation8 + $0x8] sm:$0xf]
        %v1160 = vld [vmem:[#allocation8 + $0xc] sm:$0xf]
        %v1161 = vld [vmem:[#allocation10] sm:$0x1]
        %v1163 = vlaneseq
        %v1164 = vshrl.u32 %v1163, 7
        %v1165 = vsub.s32 0, %v1164
        %v1166 = vrot.slane %v1161, %v1165
        %v1172 = vunpack.c.l.b16 %v1157
        %v1173 = vunpack.c.l.b16 %v1158
        %v1174 = vunpack.c.l.b16 %v1159
        %v1175 = vunpack.c.l.b16 %v1160
        %v1176 = vpack.c.b16 %v1173, %v1172
        %v1177 = vpack.c.b16 %v1175, %v1174
        %1180 = vmatprep.subr.bf16.mxu0 0
        %1181 = vmatpush1.bf16.xpose.msra.mxu0 %v1176
        %1182 = vmatprep.subr.bf16.mxu0 0
        %1183 = vmatpush1.bf16.xpose.msra.mxu0 %v1177
        %1184 = vmatprep.subr.bf16.mxu0 0
        %1185 = vmatpush1.bf16.xpose.msra.mxu0 0
        %1186 = vmatprep.subr.bf16.mxu0 0
        %1187 = vmatpush1.bf16.xpose.msra.mxu0 0
        %1188 = vmatprep.subr.bf16.mxu0 0
        %1189 = vmatpush1.bf16.xpose.msra.mxu0 0
        %1190 = vmatprep.subr.bf16.mxu0 0
        %1191 = vmatpush1.bf16.xpose.msra.mxu0 0
        %1192 = vmatprep.subr.bf16.mxu0 0
        %1193 = vmatpush1.bf16.xpose.msra.mxu0 0
        %1194 = vmatprep.subr.bf16.mxu0 0
        %1195 = vmatpush1.bf16.xpose.msra.mxu0 0
        %1196 = vmatprep.subr.bf16.mxu0 0
        %1197 = vmatpush1.bf16.xpose.msra.mxu0 0
        %1198 = vmatprep.subr.bf16.mxu0 0
        %1199 = vmatpush1.bf16.xpose.msra.mxu0 0
        %1200 = vmatprep.subr.bf16.mxu0 0
        %1201 = vmatpush1.bf16.xpose.msra.mxu0 0
        %1202 = vmatprep.subr.bf16.mxu0 0
        %1203 = vmatpush1.bf16.xpose.msra.mxu0 0
        %1204 = vmatprep.subr.bf16.mxu0 0
        %1205 = vmatpush1.bf16.xpose.msra.mxu0 0
        %1206 = vmatprep.subr.bf16.mxu0 0
        %1207 = vmatpush1.bf16.xpose.msra.mxu0 0
        %1208 = vmatprep.subr.bf16.mxu0 0
        %1209 = vmatpush1.bf16.xpose.msra.mxu0 0
        %1210 = vmatprep.subr.bf16.mxu0 0
        %1211 = vmatpush1.bf16.xpose.msra.mxu0 0
        %1212 = vmatprep.mubr.bf16.mxu0 0
        %1213 = vmatmul.mubr.bf16.gmra.mrb[0].mxu0 %v645
        %v1214 = vpop.f32.mrb[0].mxu0
        %v1215 = vadd.f32 %v1166, %v1214
        %v1216 = vpop.f32.mrb[0].mxu0
        %v1217 = vpop.f32.mrb[0].mxu0
        %v1218 = vpop.f32.mrb[0].mxu0
        %1219 = vdwg.mxu0
        %v1220 = vmul.f32 %v1215, 0.17677669
        %v1221 = vpack.c.bf16 %v1220, %v1220
        %vm1222 = vcmask 261120
        %v1224 = vsel %vm1222, %v1221, 0
        %1226 = vmatprep.subr.bf16.mxu0 0
        %1227 = vmatpush1.bf16.msra.mxu0 %v1133
        %1228 = vmatprep.subr.bf16.mxu0 0
        %1229 = vmatpush1.bf16.msra.mxu0 %v1134
        %1230 = vmatprep.subr.bf16.mxu0 0
        %1231 = vmatpush1.bf16.msra.mxu0 0
        %1232 = vmatprep.subr.bf16.mxu0 0
        %1233 = vmatpush1.bf16.msra.mxu0 0
        %1234 = vmatprep.subr.bf16.mxu0 0
        %1235 = vmatpush1.bf16.msra.mxu0 0
        %1236 = vmatprep.subr.bf16.mxu0 0
        %1237 = vmatpush1.bf16.msra.mxu0 0
        %1238 = vmatprep.subr.bf16.mxu0 0
        %1239 = vmatpush1.bf16.msra.mxu0 0
        %1240 = vmatprep.subr.bf16.mxu0 0
        %1241 = vmatpush1.bf16.msra.mxu0 0
        %1242 = vmatprep.subr.bf16.mxu0 0
        %1243 = vmatpush1.bf16.msra.mxu0 0
        %1244 = vmatprep.subr.bf16.mxu0 0
        %1245 = vmatpush1.bf16.msra.mxu0 0
        %1246 = vmatprep.subr.bf16.mxu0 0
        %1247 = vmatpush1.bf16.msra.mxu0 0
        %1248 = vmatprep.subr.bf16.mxu0 0
        %1249 = vmatpush1.bf16.msra.mxu0 0
        %1250 = vmatprep.subr.bf16.mxu0 0
        %1251 = vmatpush1.bf16.msra.mxu0 0
        %1252 = vmatprep.subr.bf16.mxu0 0
        %1253 = vmatpush1.bf16.msra.mxu0 0
        %1254 = vmatprep.subr.bf16.mxu0 0
        %1255 = vmatpush1.bf16.msra.mxu0 0
        %1256 = vmatprep.subr.bf16.mxu0 0
        %1257 = vmatpush1.bf16.msra.mxu0 0
        %1258 = vmatprep.mubr.bf16.mxu0 0
        %1259 = vmatmul.mubr.bf16.gmra.mrb[0].mxu0 %v1224
        %v1260 = vpop.f32.mrb[0].mxu0
        %v1261 = vadd.f32 %v1155, %v1260
        %v1262 = vpop.f32.mrb[0].mxu0
        %v1263 = vpop.f32.mrb[0].mxu0
        %v1264 = vpop.f32.mrb[0].mxu0
        %1265 = vdwg.mxu0
        %vm1266 = vcmask 130048
        %v1267 = vsel %vm1266, %v1261, -inf
        %1268 = vmax.xlane.f32.xlu0 %v1267
        %v1269 = vpop.xlane.xlu0 %1268
        %v1270 = vsub.f32 %v1261, %v1269
        %v1271 = vmul.f32 %v1270, 1.442695
        %v1272 = vpow.pop %v1271
        %v1273 = vsel %vm1266, %v1272, 0.0
        %1274 = vadd.xlane.f32.xlu0 %v1273
        %v1275 = vpop.xlane.xlu0 %1274
        %v1276 = vrcp.pop %v1275
        %v1277 = vmul.f32 %v1272, %v1276
        %1278 = vst.msk [vmem:[%s639] sm:$0xff] %vm1266, %v1277
        %v1279 = vpack.c.bf16 %v1277, %v1277
        %v1281 = vsel %vm1266, %v1279, 0
        %v1284 = vsel %vm1266, %v1141, 0
        %v1287 = vsel %vm1266, %v1142, 0
        %1289 = vmatprep.subr.bf16.mxu0 0
        %1290 = vmatpush1.bf16.xpose.msra.mxu0 %v1284
        %1291 = vmatprep.subr.bf16.mxu0 0
        %1292 = vmatpush1.bf16.xpose.msra.mxu0 %v1287
        %1293 = vmatprep.subr.bf16.mxu0 0
        %1294 = vmatpush1.bf16.xpose.msra.mxu0 0
        %1295 = vmatprep.subr.bf16.mxu0 0
        %1296 = vmatpush1.bf16.xpose.msra.mxu0 0
        %1297 = vmatprep.subr.bf16.mxu0 0
        %1298 = vmatpush1.bf16.xpose.msra.mxu0 0
        %1299 = vmatprep.subr.bf16.mxu0 0
        %1300 = vmatpush1.bf16.xpose.msra.mxu0 0
        %1301 = vmatprep.subr.bf16.mxu0 0
        %1302 = vmatpush1.bf16.xpose.msra.mxu0 0
        %1303 = vmatprep.subr.bf16.mxu0 0
        %1304 = vmatpush1.bf16.xpose.msra.mxu0 0
        %1305 = vmatprep.subr.bf16.mxu0 0
        %1306 = vmatpush1.bf16.xpose.msra.mxu0 0
        %1307 = vmatprep.subr.bf16.mxu0 0
        %1308 = vmatpush1.bf16.xpose.msra.mxu0 0
        %1309 = vmatprep.subr.bf16.mxu0 0
        %1310 = vmatpush1.bf16.xpose.msra.mxu0 0
        %1311 = vmatprep.subr.bf16.mxu0 0
        %1312 = vmatpush1.bf16.xpose.msra.mxu0 0
        %1313 = vmatprep.subr.bf16.mxu0 0
        %1314 = vmatpush1.bf16.xpose.msra.mxu0 0
        %1315 = vmatprep.subr.bf16.mxu0 0
        %1316 = vmatpush1.bf16.xpose.msra.mxu0 0
        %1317 = vmatprep.subr.bf16.mxu0 0
        %1318 = vmatpush1.bf16.xpose.msra.mxu0 0
        %1319 = vmatprep.subr.bf16.mxu0 0
        %1320 = vmatpush1.bf16.xpose.msra.mxu0 0
        %1321 = vmatprep.mubr.bf16.mxu0 0
        %1322 = vmatmul.mubr.bf16.gmra.mrb[0].mxu0 %v1281
        %v1323 = vpop.f32.mrb[0].mxu0
        %v1324 = vadd.f32 0.0, %v1323
        %v1325 = vpop.f32.mrb[0].mxu0
        %v1326 = vpop.f32.mrb[0].mxu0
        %v1327 = vpop.f32.mrb[0].mxu0
        %1328 = vdwg.mxu0
        %v1329 = vpack.c.bf16 %v1324, %v1324
        %v1330 = vld [vmem:[#allocation14] sm:$0xf]
        %v1331 = vld [vmem:[#allocation14 + $0x4] sm:$0xf]
        %v1332 = vld [vmem:[#allocation14 + $0x8] sm:$0xf]
        %v1333 = vld [vmem:[#allocation14 + $0xc] sm:$0xf]
        %s1334 = scalar_lea.vmem [#allocation8], 16
        %v1335 = vld [vmem:[%s1334] sm:$0xf]
        %v1336 = vld [vmem:[%s1334 + $0x4] sm:$0xf]
        %v1337 = vld [vmem:[%s1334 + $0x8] sm:$0xf]
        %v1338 = vld [vmem:[%s1334 + $0xc] sm:$0xf]
        %s1339 = scalar_lea.vmem [#allocation10], 1
        %v1340 = vld [vmem:[%s1339] sm:$0x1]
        %v1342 = vlaneseq
        %v1343 = vshrl.u32 %v1342, 7
        %v1344 = vsub.s32 0, %v1343
        %v1345 = vrot.slane %v1340, %v1344
        %v1351 = vunpack.c.l.b16 %v1335
        %v1352 = vunpack.c.l.b16 %v1336
        %v1353 = vunpack.c.l.b16 %v1337
        %v1354 = vunpack.c.l.b16 %v1338
        %v1355 = vpack.c.b16 %v1352, %v1351
        %v1356 = vpack.c.b16 %v1354, %v1353
        %1359 = vmatprep.subr.bf16.mxu0 0
        %1360 = vmatpush1.bf16.xpose.msra.mxu0 %v1355
        %1361 = vmatprep.subr.bf16.mxu0 0
        %1362 = vmatpush1.bf16.xpose.msra.mxu0 %v1356
        %1363 = vmatprep.subr.bf16.mxu0 0
        %1364 = vmatpush1.bf16.xpose.msra.mxu0 0
        %1365 = vmatprep.subr.bf16.mxu0 0
        %1366 = vmatpush1.bf16.xpose.msra.mxu0 0
        %1367 = vmatprep.subr.bf16.mxu0 0
        %1368 = vmatpush1.bf16.xpose.msra.mxu0 0
        %1369 = vmatprep.subr.bf16.mxu0 0
        %1370 = vmatpush1.bf16.xpose.msra.mxu0 0
        %1371 = vmatprep.subr.bf16.mxu0 0
        %1372 = vmatpush1.bf16.xpose.msra.mxu0 0
        %1373 = vmatprep.subr.bf16.mxu0 0
        %1374 = vmatpush1.bf16.xpose.msra.mxu0 0
        %1375 = vmatprep.subr.bf16.mxu0 0
        %1376 = vmatpush1.bf16.xpose.msra.mxu0 0
        %1377 = vmatprep.subr.bf16.mxu0 0
        %1378 = vmatpush1.bf16.xpose.msra.mxu0 0
        %1379 = vmatprep.subr.bf16.mxu0 0
        %1380 = vmatpush1.bf16.xpose.msra.mxu0 0
        %1381 = vmatprep.subr.bf16.mxu0 0
        %1382 = vmatpush1.bf16.xpose.msra.mxu0 0
        %1383 = vmatprep.subr.bf16.mxu0 0
        %1384 = vmatpush1.bf16.xpose.msra.mxu0 0
        %1385 = vmatprep.subr.bf16.mxu0 0
        %1386 = vmatpush1.bf16.xpose.msra.mxu0 0
        %1387 = vmatprep.subr.bf16.mxu0 0
        %1388 = vmatpush1.bf16.xpose.msra.mxu0 0
        %1389 = vmatprep.subr.bf16.mxu0 0
        %1390 = vmatpush1.bf16.xpose.msra.mxu0 0
        %1391 = vmatprep.mubr.bf16.mxu0 0
        %1392 = vmatmul.mubr.bf16.gmra.mrb[0].mxu0 %v645
        %v1393 = vpop.f32.mrb[0].mxu0
        %v1394 = vadd.f32 %v1345, %v1393
        %v1395 = vpop.f32.mrb[0].mxu0
        %v1396 = vpop.f32.mrb[0].mxu0
        %v1397 = vpop.f32.mrb[0].mxu0
        %1398 = vdwg.mxu0
        %v1399 = vmul.f32 %v1394, 0.17677669
        %v1400 = vpack.c.bf16 %v1399, %v1399
        %v1402 = vsel %vm1222, %v1400, 0
        %1404 = vmatprep.subr.bf16.mxu0 0
        %1405 = vmatpush1.bf16.msra.mxu0 %v1135
        %1406 = vmatprep.subr.bf16.mxu0 0
        %1407 = vmatpush1.bf16.msra.mxu0 %v1136
        %1408 = vmatprep.subr.bf16.mxu0 0
        %1409 = vmatpush1.bf16.msra.mxu0 0
        %1410 = vmatprep.subr.bf16.mxu0 0
        %1411 = vmatpush1.bf16.msra.mxu0 0
        %1412 = vmatprep.subr.bf16.mxu0 0
        %1413 = vmatpush1.bf16.msra.mxu0 0
        %1414 = vmatprep.subr.bf16.mxu0 0
        %1415 = vmatpush1.bf16.msra.mxu0 0
        %1416 = vmatprep.subr.bf16.mxu0 0
        %1417 = vmatpush1.bf16.msra.mxu0 0
        %1418 = vmatprep.subr.bf16.mxu0 0
        %1419 = vmatpush1.bf16.msra.mxu0 0
        %1420 = vmatprep.subr.bf16.mxu0 0
        %1421 = vmatpush1.bf16.msra.mxu0 0
        %1422 = vmatprep.subr.bf16.mxu0 0
        %1423 = vmatpush1.bf16.msra.mxu0 0
        %1424 = vmatprep.subr.bf16.mxu0 0
        %1425 = vmatpush1.bf16.msra.mxu0 0
        %1426 = vmatprep.subr.bf16.mxu0 0
        %1427 = vmatpush1.bf16.msra.mxu0 0
        %1428 = vmatprep.subr.bf16.mxu0 0
        %1429 = vmatpush1.bf16.msra.mxu0 0
        %1430 = vmatprep.subr.bf16.mxu0 0
        %1431 = vmatpush1.bf16.msra.mxu0 0
        %1432 = vmatprep.subr.bf16.mxu0 0
        %1433 = vmatpush1.bf16.msra.mxu0 0
        %1434 = vmatprep.subr.bf16.mxu0 0
        %1435 = vmatpush1.bf16.msra.mxu0 0
        %1436 = vmatprep.mubr.bf16.mxu0 0
        %1437 = vmatmul.mubr.bf16.gmra.mrb[0].mxu0 %v1402
        %v1438 = vpop.f32.mrb[0].mxu0
        %v1439 = vadd.f32 %v1155, %v1438
        %v1440 = vpop.f32.mrb[0].mxu0
        %v1441 = vpop.f32.mrb[0].mxu0
        %v1442 = vpop.f32.mrb[0].mxu0
        %1443 = vdwg.mxu0
        %v1444 = vsel %vm1266, %v1439, -inf
        %1445 = vmax.xlane.f32.xlu0 %v1444
        %v1446 = vpop.xlane.xlu0 %1445
        %v1447 = vsub.f32 %v1439, %v1446
        %v1448 = vmul.f32 %v1447, 1.442695
        %v1449 = vpow.pop %v1448
        %v1450 = vsel %vm1266, %v1449, 0.0
        %1451 = vadd.xlane.f32.xlu0 %v1450
        %v1452 = vpop.xlane.xlu0 %1451
        %v1453 = vrcp.pop %v1452
        %v1454 = vmul.f32 %v1449, %v1453
        %s1455 = scalar_lea.vmem %s639, 8 [#allocation21]
        %1456 = vst.msk [vmem:[%s1455] sm:$0xff] %vm1266, %v1454
        %v1457 = vpack.c.bf16 %v1454, %v1454
        %v1459 = vsel %vm1266, %v1457, 0
        %v1462 = vsel %vm1266, %v1143, 0
        %v1465 = vsel %vm1266, %v1144, 0
        %1467 = vmatprep.subr.bf16.mxu0 0
        %1468 = vmatpush1.bf16.xpose.msra.mxu0 %v1462
        %1469 = vmatprep.subr.bf16.mxu0 0
        %1470 = vmatpush1.bf16.xpose.msra.mxu0 %v1465
        %1471 = vmatprep.subr.bf16.mxu0 0
        %1472 = vmatpush1.bf16.xpose.msra.mxu0 0
        %1473 = vmatprep.subr.bf16.mxu0 0
        %1474 = vmatpush1.bf16.xpose.msra.mxu0 0
        %1475 = vmatprep.subr.bf16.mxu0 0
        %1476 = vmatpush1.bf16.xpose.msra.mxu0 0
        %1477 = vmatprep.subr.bf16.mxu0 0
        %1478 = vmatpush1.bf16.xpose.msra.mxu0 0
        %1479 = vmatprep.subr.bf16.mxu0 0
        %1480 = vmatpush1.bf16.xpose.msra.mxu0 0
        %1481 = vmatprep.subr.bf16.mxu0 0
        %1482 = vmatpush1.bf16.xpose.msra.mxu0 0
        %1483 = vmatprep.subr.bf16.mxu0 0
        %1484 = vmatpush1.bf16.xpose.msra.mxu0 0
        %1485 = vmatprep.subr.bf16.mxu0 0
        %1486 = vmatpush1.bf16.xpose.msra.mxu0 0
        %1487 = vmatprep.subr.bf16.mxu0 0
        %1488 = vmatpush1.bf16.xpose.msra.mxu0 0
        %1489 = vmatprep.subr.bf16.mxu0 0
        %1490 = vmatpush1.bf16.xpose.msra.mxu0 0
        %1491 = vmatprep.subr.bf16.mxu0 0
        %1492 = vmatpush1.bf16.xpose.msra.mxu0 0
        %1493 = vmatprep.subr.bf16.mxu0 0
        %1494 = vmatpush1.bf16.xpose.msra.mxu0 0
        %1495 = vmatprep.subr.bf16.mxu0 0
        %1496 = vmatpush1.bf16.xpose.msra.mxu0 0
        %1497 = vmatprep.subr.bf16.mxu0 0
        %1498 = vmatpush1.bf16.xpose.msra.mxu0 0
        %1499 = vmatprep.mubr.bf16.mxu0 0
        %1500 = vmatmul.mubr.bf16.gmra.mrb[0].mxu0 %v1459
        %v1501 = vpop.f32.mrb[0].mxu0
        %v1502 = vadd.f32 0.0, %v1501
        %v1503 = vpop.f32.mrb[0].mxu0
        %v1504 = vpop.f32.mrb[0].mxu0
        %v1505 = vpop.f32.mrb[0].mxu0
        %1506 = vdwg.mxu0
        %v1507 = vpack.c.bf16 %v1502, %v1502
        %s1508 = scalar_lea.vmem [#allocation14], 16
        %v1509 = vld [vmem:[%s1508] sm:$0xf]
        %v1510 = vld [vmem:[%s1508 + $0x4] sm:$0xf]
        %v1511 = vld [vmem:[%s1508 + $0x8] sm:$0xf]
        %v1512 = vld [vmem:[%s1508 + $0xc] sm:$0xf]
        %v1517 = vunpack.c.l.b16 %v1509
        %v1518 = vunpack.c.l.b16 %v1510
        %v1519 = vunpack.c.l.b16 %v1511
        %v1520 = vunpack.c.l.b16 %v1512
        %v1521 = vpack.c.b16 %v1518, %v1517
        %v1522 = vpack.c.b16 %v1520, %v1519
        %v1526 = vsel %vm1222, %v1507, 0
        %1528 = vmatprep.subr.bf16.mxu0 0
        %1529 = vmatpush1.bf16.msra.mxu0 %v1521
        %1530 = vmatprep.subr.bf16.mxu0 0
        %1531 = vmatpush1.bf16.msra.mxu0 %v1522
        %1532 = vmatprep.subr.bf16.mxu0 0
        %1533 = vmatpush1.bf16.msra.mxu0 0
        %1534 = vmatprep.subr.bf16.mxu0 0
        %1535 = vmatpush1.bf16.msra.mxu0 0
        %1536 = vmatprep.subr.bf16.mxu0 0
        %1537 = vmatpush1.bf16.msra.mxu0 0
        %1538 = vmatprep.subr.bf16.mxu0 0
        %1539 = vmatpush1.bf16.msra.mxu0 0
        %1540 = vmatprep.subr.bf16.mxu0 0
        %1541 = vmatpush1.bf16.msra.mxu0 0
        %1542 = vmatprep.subr.bf16.mxu0 0
        %1543 = vmatpush1.bf16.msra.mxu0 0
        %1544 = vmatprep.subr.bf16.mxu0 0
        %1545 = vmatpush1.bf16.msra.mxu0 0
        %1546 = vmatprep.subr.bf16.mxu0 0
        %1547 = vmatpush1.bf16.msra.mxu0 0
        %1548 = vmatprep.subr.bf16.mxu0 0
        %1549 = vmatpush1.bf16.msra.mxu0 0
        %1550 = vmatprep.subr.bf16.mxu0 0
        %1551 = vmatpush1.bf16.msra.mxu0 0
        %1552 = vmatprep.subr.bf16.mxu0 0
        %1553 = vmatpush1.bf16.msra.mxu0 0
        %1554 = vmatprep.subr.bf16.mxu0 0
        %1555 = vmatpush1.bf16.msra.mxu0 0
        %1556 = vmatprep.subr.bf16.mxu0 0
        %1557 = vmatpush1.bf16.msra.mxu0 0
        %1558 = vmatprep.subr.bf16.mxu0 0
        %1559 = vmatpush1.bf16.msra.mxu0 0
        %1560 = vmatprep.mubr.bf16.mxu0 0
        %1561 = vmatmul.mubr.bf16.gmra.mrb[0].mxu0 %v1526
        %v1562 = vpop.f32.mrb[0].mxu0
        %v1563 = vadd.f32 0.0, %v1562
        %v1564 = vpop.f32.mrb[0].mxu0
        %v1565 = vpop.f32.mrb[0].mxu0
        %v1566 = vpop.f32.mrb[0].mxu0
        %1567 = vdwg.mxu0
        %v1572 = vunpack.c.l.b16 %v1330
        %v1573 = vunpack.c.l.b16 %v1331
        %v1574 = vunpack.c.l.b16 %v1332
        %v1575 = vunpack.c.l.b16 %v1333
        %v1576 = vpack.c.b16 %v1573, %v1572
        %v1577 = vpack.c.b16 %v1575, %v1574
        %v1581 = vsel %vm1222, %v1329, 0
        %1583 = vmatprep.subr.bf16.mxu0 0
        %1584 = vmatpush1.bf16.msra.mxu0 %v1576
        %1585 = vmatprep.subr.bf16.mxu0 0
        %1586 = vmatpush1.bf16.msra.mxu0 %v1577
        %1587 = vmatprep.subr.bf16.mxu0 0
        %1588 = vmatpush1.bf16.msra.mxu0 0
        %1589 = vmatprep.subr.bf16.mxu0 0
        %1590 = vmatpush1.bf16.msra.mxu0 0
        %1591 = vmatprep.subr.bf16.mxu0 0
        %1592 = vmatpush1.bf16.msra.mxu0 0
        %1593 = vmatprep.subr.bf16.mxu0 0
        %1594 = vmatpush1.bf16.msra.mxu0 0
        %1595 = vmatprep.subr.bf16.mxu0 0
        %1596 = vmatpush1.bf16.msra.mxu0 0
        %1597 = vmatprep.subr.bf16.mxu0 0
        %1598 = vmatpush1.bf16.msra.mxu0 0
        %1599 = vmatprep.subr.bf16.mxu0 0
        %1600 = vmatpush1.bf16.msra.mxu0 0
        %1601 = vmatprep.subr.bf16.mxu0 0
        %1602 = vmatpush1.bf16.msra.mxu0 0
        %1603 = vmatprep.subr.bf16.mxu0 0
        %1604 = vmatpush1.bf16.msra.mxu0 0
        %1605 = vmatprep.subr.bf16.mxu0 0
        %1606 = vmatpush1.bf16.msra.mxu0 0
        %1607 = vmatprep.subr.bf16.mxu0 0
        %1608 = vmatpush1.bf16.msra.mxu0 0
        %1609 = vmatprep.subr.bf16.mxu0 0
        %1610 = vmatpush1.bf16.msra.mxu0 0
        %1611 = vmatprep.subr.bf16.mxu0 0
        %1612 = vmatpush1.bf16.msra.mxu0 0
        %1613 = vmatprep.subr.bf16.mxu0 0
        %1614 = vmatpush1.bf16.msra.mxu0 0
        %1615 = vmatprep.mubr.bf16.mxu0 0
        %1616 = vmatmul.mubr.bf16.gmra.mrb[0].mxu0 %v1581
        %v1617 = vpop.f32.mrb[0].mxu0
        %v1618 = vadd.f32 %v1563, %v1617
        %v1619 = vpop.f32.mrb[0].mxu0
        %v1620 = vpop.f32.mrb[0].mxu0
        %v1621 = vpop.f32.mrb[0].mxu0
        %1622 = vdwg.mxu0
        %s1623 = scalar_lea.vmem [#allocation8], 32
        %v1624 = vld [vmem:[%s1623] sm:$0xf]
        %v1625 = vld [vmem:[%s1623 + $0x4] sm:$0xf]
        %v1626 = vld [vmem:[%s1623 + $0x8] sm:$0xf]
        %v1627 = vld [vmem:[%s1623 + $0xc] sm:$0xf]
        %s1628 = scalar_lea.vmem [#allocation10], 2
        %v1629 = vld [vmem:[%s1628] sm:$0x1]
        %v1631 = vlaneseq
        %v1632 = vshrl.u32 %v1631, 7
        %v1633 = vsub.s32 0, %v1632
        %v1634 = vrot.slane %v1629, %v1633
        %v1640 = vunpack.c.l.b16 %v1624
        %v1641 = vunpack.c.l.b16 %v1625
        %v1642 = vunpack.c.l.b16 %v1626
        %v1643 = vunpack.c.l.b16 %v1627
        %v1644 = vpack.c.b16 %v1641, %v1640
        %v1645 = vpack.c.b16 %v1643, %v1642
        %1648 = vmatprep.subr.bf16.mxu0 0
        %1649 = vmatpush1.bf16.xpose.msra.mxu0 %v1644
        %1650 = vmatprep.subr.bf16.mxu0 0
        %1651 = vmatpush1.bf16.xpose.msra.mxu0 %v1645
        %1652 = vmatprep.subr.bf16.mxu0 0
        %1653 = vmatpush1.bf16.xpose.msra.mxu0 0
        %1654 = vmatprep.subr.bf16.mxu0 0
        %1655 = vmatpush1.bf16.xpose.msra.mxu0 0
        %1656 = vmatprep.subr.bf16.mxu0 0
        %1657 = vmatpush1.bf16.xpose.msra.mxu0 0
        %1658 = vmatprep.subr.bf16.mxu0 0
        %1659 = vmatpush1.bf16.xpose.msra.mxu0 0
        %1660 = vmatprep.subr.bf16.mxu0 0
        %1661 = vmatpush1.bf16.xpose.msra.mxu0 0
        %1662 = vmatprep.subr.bf16.mxu0 0
        %1663 = vmatpush1.bf16.xpose.msra.mxu0 0
        %1664 = vmatprep.subr.bf16.mxu0 0
        %1665 = vmatpush1.bf16.xpose.msra.mxu0 0
        %1666 = vmatprep.subr.bf16.mxu0 0
        %1667 = vmatpush1.bf16.xpose.msra.mxu0 0
        %1668 = vmatprep.subr.bf16.mxu0 0
        %1669 = vmatpush1.bf16.xpose.msra.mxu0 0
        %1670 = vmatprep.subr.bf16.mxu0 0
        %1671 = vmatpush1.bf16.xpose.msra.mxu0 0
        %1672 = vmatprep.subr.bf16.mxu0 0
        %1673 = vmatpush1.bf16.xpose.msra.mxu0 0
        %1674 = vmatprep.subr.bf16.mxu0 0
        %1675 = vmatpush1.bf16.xpose.msra.mxu0 0
        %1676 = vmatprep.subr.bf16.mxu0 0
        %1677 = vmatpush1.bf16.xpose.msra.mxu0 0
        %1678 = vmatprep.subr.bf16.mxu0 0
        %1679 = vmatpush1.bf16.xpose.msra.mxu0 0
        %1680 = vmatprep.mubr.bf16.mxu0 0
        %1681 = vmatmul.mubr.bf16.gmra.mrb[0].mxu0 %v645
        %v1682 = vpop.f32.mrb[0].mxu0
        %v1683 = vadd.f32 %v1634, %v1682
        %v1684 = vpop.f32.mrb[0].mxu0
        %v1685 = vpop.f32.mrb[0].mxu0
        %v1686 = vpop.f32.mrb[0].mxu0
        %1687 = vdwg.mxu0
        %v1688 = vmul.f32 %v1683, 0.17677669
        %v1689 = vpack.c.bf16 %v1688, %v1688
        %v1691 = vsel %vm1222, %v1689, 0
        %1693 = vmatprep.subr.bf16.mxu0 0
        %1694 = vmatpush1.bf16.msra.mxu0 %v1137
        %1695 = vmatprep.subr.bf16.mxu0 0
        %1696 = vmatpush1.bf16.msra.mxu0 %v1138
        %1697 = vmatprep.subr.bf16.mxu0 0
        %1698 = vmatpush1.bf16.msra.mxu0 0
        %1699 = vmatprep.subr.bf16.mxu0 0
        %1700 = vmatpush1.bf16.msra.mxu0 0
        %1701 = vmatprep.subr.bf16.mxu0 0
        %1702 = vmatpush1.bf16.msra.mxu0 0
        %1703 = vmatprep.subr.bf16.mxu0 0
        %1704 = vmatpush1.bf16.msra.mxu0 0
        %1705 = vmatprep.subr.bf16.mxu0 0
        %1706 = vmatpush1.bf16.msra.mxu0 0
        %1707 = vmatprep.subr.bf16.mxu0 0
        %1708 = vmatpush1.bf16.msra.mxu0 0
        %1709 = vmatprep.subr.bf16.mxu0 0
        %1710 = vmatpush1.bf16.msra.mxu0 0
        %1711 = vmatprep.subr.bf16.mxu0 0
        %1712 = vmatpush1.bf16.msra.mxu0 0
        %1713 = vmatprep.subr.bf16.mxu0 0
        %1714 = vmatpush1.bf16.msra.mxu0 0
        %1715 = vmatprep.subr.bf16.mxu0 0
        %1716 = vmatpush1.bf16.msra.mxu0 0
        %1717 = vmatprep.subr.bf16.mxu0 0
        %1718 = vmatpush1.bf16.msra.mxu0 0
        %1719 = vmatprep.subr.bf16.mxu0 0
        %1720 = vmatpush1.bf16.msra.mxu0 0
        %1721 = vmatprep.subr.bf16.mxu0 0
        %1722 = vmatpush1.bf16.msra.mxu0 0
        %1723 = vmatprep.subr.bf16.mxu0 0
        %1724 = vmatpush1.bf16.msra.mxu0 0
        %1725 = vmatprep.mubr.bf16.mxu0 0
        %1726 = vmatmul.mubr.bf16.gmra.mrb[0].mxu0 %v1691
        %v1727 = vpop.f32.mrb[0].mxu0
        %v1728 = vadd.f32 %v1155, %v1727
        %v1729 = vpop.f32.mrb[0].mxu0
        %v1730 = vpop.f32.mrb[0].mxu0
        %v1731 = vpop.f32.mrb[0].mxu0
        %1732 = vdwg.mxu0
        %v1733 = vsel %vm1266, %v1728, -inf
        %1734 = vmax.xlane.f32.xlu0 %v1733
        %v1735 = vpop.xlane.xlu0 %1734
        %v1736 = vsub.f32 %v1728, %v1735
        %v1737 = vmul.f32 %v1736, 1.442695
        %v1738 = vpow.pop %v1737
        %v1739 = vsel %vm1266, %v1738, 0.0
        %1740 = vadd.xlane.f32.xlu0 %v1739
        %v1741 = vpop.xlane.xlu0 %1740
        %v1742 = vrcp.pop %v1741
        %v1743 = vmul.f32 %v1738, %v1742
        %s1744 = scalar_lea.vmem %s639, 16 [#allocation21]
        %1745 = vst.msk [vmem:[%s1744] sm:$0xff] %vm1266, %v1743
        %v1746 = vpack.c.bf16 %v1743, %v1743
        %v1748 = vsel %vm1266, %v1746, 0
        %v1751 = vsel %vm1266, %v1145, 0
        %v1754 = vsel %vm1266, %v1146, 0
        %1756 = vmatprep.subr.bf16.mxu0 0
        %1757 = vmatpush1.bf16.xpose.msra.mxu0 %v1751
        %1758 = vmatprep.subr.bf16.mxu0 0
        %1759 = vmatpush1.bf16.xpose.msra.mxu0 %v1754
        %1760 = vmatprep.subr.bf16.mxu0 0
        %1761 = vmatpush1.bf16.xpose.msra.mxu0 0
        %1762 = vmatprep.subr.bf16.mxu0 0
        %1763 = vmatpush1.bf16.xpose.msra.mxu0 0
        %1764 = vmatprep.subr.bf16.mxu0 0
        %1765 = vmatpush1.bf16.xpose.msra.mxu0 0
        %1766 = vmatprep.subr.bf16.mxu0 0
        %1767 = vmatpush1.bf16.xpose.msra.mxu0 0
        %1768 = vmatprep.subr.bf16.mxu0 0
        %1769 = vmatpush1.bf16.xpose.msra.mxu0 0
        %1770 = vmatprep.subr.bf16.mxu0 0
        %1771 = vmatpush1.bf16.xpose.msra.mxu0 0
        %1772 = vmatprep.subr.bf16.mxu0 0
        %1773 = vmatpush1.bf16.xpose.msra.mxu0 0
        %1774 = vmatprep.subr.bf16.mxu0 0
        %1775 = vmatpush1.bf16.xpose.msra.mxu0 0
        %1776 = vmatprep.subr.bf16.mxu0 0
        %1777 = vmatpush1.bf16.xpose.msra.mxu0 0
        %1778 = vmatprep.subr.bf16.mxu0 0
        %1779 = vmatpush1.bf16.xpose.msra.mxu0 0
        %1780 = vmatprep.subr.bf16.mxu0 0
        %1781 = vmatpush1.bf16.xpose.msra.mxu0 0
        %1782 = vmatprep.subr.bf16.mxu0 0
        %1783 = vmatpush1.bf16.xpose.msra.mxu0 0
        %1784 = vmatprep.subr.bf16.mxu0 0
        %1785 = vmatpush1.bf16.xpose.msra.mxu0 0
        %1786 = vmatprep.subr.bf16.mxu0 0
        %1787 = vmatpush1.bf16.xpose.msra.mxu0 0
        %1788 = vmatprep.mubr.bf16.mxu0 0
        %1789 = vmatmul.mubr.bf16.gmra.mrb[0].mxu0 %v1748
        %v1790 = vpop.f32.mrb[0].mxu0
        %v1791 = vadd.f32 0.0, %v1790
        %v1792 = vpop.f32.mrb[0].mxu0
        %v1793 = vpop.f32.mrb[0].mxu0
        %v1794 = vpop.f32.mrb[0].mxu0
        %1795 = vdwg.mxu0
        %v1796 = vpack.c.bf16 %v1791, %v1791
        %s1797 = scalar_lea.vmem [#allocation14], 32
        %v1798 = vld [vmem:[%s1797] sm:$0xf]
        %v1799 = vld [vmem:[%s1797 + $0x4] sm:$0xf]
        %v1800 = vld [vmem:[%s1797 + $0x8] sm:$0xf]
        %v1801 = vld [vmem:[%s1797 + $0xc] sm:$0xf]
        %v1806 = vunpack.c.l.b16 %v1798
        %v1807 = vunpack.c.l.b16 %v1799
        %v1808 = vunpack.c.l.b16 %v1800
        %v1809 = vunpack.c.l.b16 %v1801
        %v1810 = vpack.c.b16 %v1807, %v1806
        %v1811 = vpack.c.b16 %v1809, %v1808
        %v1815 = vsel %vm1222, %v1796, 0
        %1817 = vmatprep.subr.bf16.mxu0 0
        %1818 = vmatpush1.bf16.msra.mxu0 %v1810
        %1819 = vmatprep.subr.bf16.mxu0 0
        %1820 = vmatpush1.bf16.msra.mxu0 %v1811
        %1821 = vmatprep.subr.bf16.mxu0 0
        %1822 = vmatpush1.bf16.msra.mxu0 0
        %1823 = vmatprep.subr.bf16.mxu0 0
        %1824 = vmatpush1.bf16.msra.mxu0 0
        %1825 = vmatprep.subr.bf16.mxu0 0
        %1826 = vmatpush1.bf16.msra.mxu0 0
        %1827 = vmatprep.subr.bf16.mxu0 0
        %1828 = vmatpush1.bf16.msra.mxu0 0
        %1829 = vmatprep.subr.bf16.mxu0 0
        %1830 = vmatpush1.bf16.msra.mxu0 0
        %1831 = vmatprep.subr.bf16.mxu0 0
        %1832 = vmatpush1.bf16.msra.mxu0 0
        %1833 = vmatprep.subr.bf16.mxu0 0
        %1834 = vmatpush1.bf16.msra.mxu0 0
        %1835 = vmatprep.subr.bf16.mxu0 0
        %1836 = vmatpush1.bf16.msra.mxu0 0
        %1837 = vmatprep.subr.bf16.mxu0 0
        %1838 = vmatpush1.bf16.msra.mxu0 0
        %1839 = vmatprep.subr.bf16.mxu0 0
        %1840 = vmatpush1.bf16.msra.mxu0 0
        %1841 = vmatprep.subr.bf16.mxu0 0
        %1842 = vmatpush1.bf16.msra.mxu0 0
        %1843 = vmatprep.subr.bf16.mxu0 0
        %1844 = vmatpush1.bf16.msra.mxu0 0
        %1845 = vmatprep.subr.bf16.mxu0 0
        %1846 = vmatpush1.bf16.msra.mxu0 0
        %1847 = vmatprep.subr.bf16.mxu0 0
        %1848 = vmatpush1.bf16.msra.mxu0 0
        %1849 = vmatprep.mubr.bf16.mxu0 0
        %1850 = vmatmul.mubr.bf16.gmra.mrb[0].mxu0 %v1815
        %v1851 = vpop.f32.mrb[0].mxu0
        %v1852 = vadd.f32 0.0, %v1851
        %v1853 = vpop.f32.mrb[0].mxu0
        %v1854 = vpop.f32.mrb[0].mxu0
        %v1855 = vpop.f32.mrb[0].mxu0
        %1856 = vdwg.mxu0
        %v1857 = vadd.f32 %v1618, %v1852
        %s1858 = scalar_lea.vmem [#allocation8], 48
        %v1859 = vld [vmem:[%s1858] sm:$0xf]
        %v1860 = vld [vmem:[%s1858 + $0x4] sm:$0xf]
        %v1861 = vld [vmem:[%s1858 + $0x8] sm:$0xf]
        %v1862 = vld [vmem:[%s1858 + $0xc] sm:$0xf]
        %s1863 = scalar_lea.vmem [#allocation10], 3
        %v1864 = vld [vmem:[%s1863] sm:$0x1]
        %v1866 = vlaneseq
        %v1867 = vshrl.u32 %v1866, 7
        %v1868 = vsub.s32 0, %v1867
        %v1869 = vrot.slane %v1864, %v1868
        %v1875 = vunpack.c.l.b16 %v1859
        %v1876 = vunpack.c.l.b16 %v1860
        %v1877 = vunpack.c.l.b16 %v1861
        %v1878 = vunpack.c.l.b16 %v1862
        %v1879 = vpack.c.b16 %v1876, %v1875
        %v1880 = vpack.c.b16 %v1878, %v1877
        %1883 = vmatprep.subr.bf16.mxu0 0
        %1884 = vmatpush1.bf16.xpose.msra.mxu0 %v1879
        %1885 = vmatprep.subr.bf16.mxu0 0
        %1886 = vmatpush1.bf16.xpose.msra.mxu0 %v1880
        %1887 = vmatprep.subr.bf16.mxu0 0
        %1888 = vmatpush1.bf16.xpose.msra.mxu0 0
        %1889 = vmatprep.subr.bf16.mxu0 0
        %1890 = vmatpush1.bf16.xpose.msra.mxu0 0
        %1891 = vmatprep.subr.bf16.mxu0 0
        %1892 = vmatpush1.bf16.xpose.msra.mxu0 0
        %1893 = vmatprep.subr.bf16.mxu0 0
        %1894 = vmatpush1.bf16.xpose.msra.mxu0 0
        %1895 = vmatprep.subr.bf16.mxu0 0
        %1896 = vmatpush1.bf16.xpose.msra.mxu0 0
        %1897 = vmatprep.subr.bf16.mxu0 0
        %1898 = vmatpush1.bf16.xpose.msra.mxu0 0
        %1899 = vmatprep.subr.bf16.mxu0 0
        %1900 = vmatpush1.bf16.xpose.msra.mxu0 0
        %1901 = vmatprep.subr.bf16.mxu0 0
        %1902 = vmatpush1.bf16.xpose.msra.mxu0 0
        %1903 = vmatprep.subr.bf16.mxu0 0
        %1904 = vmatpush1.bf16.xpose.msra.mxu0 0
        %1905 = vmatprep.subr.bf16.mxu0 0
        %1906 = vmatpush1.bf16.xpose.msra.mxu0 0
        %1907 = vmatprep.subr.bf16.mxu0 0
        %1908 = vmatpush1.bf16.xpose.msra.mxu0 0
        %1909 = vmatprep.subr.bf16.mxu0 0
        %1910 = vmatpush1.bf16.xpose.msra.mxu0 0
        %1911 = vmatprep.subr.bf16.mxu0 0
        %1912 = vmatpush1.bf16.xpose.msra.mxu0 0
        %1913 = vmatprep.subr.bf16.mxu0 0
        %1914 = vmatpush1.bf16.xpose.msra.mxu0 0
        %1915 = vmatprep.mubr.bf16.mxu0 0
        %1916 = vmatmul.mubr.bf16.gmra.mrb[0].mxu0 %v645
        %v1917 = vpop.f32.mrb[0].mxu0
        %v1918 = vadd.f32 %v1869, %v1917
        %v1919 = vpop.f32.mrb[0].mxu0
        %v1920 = vpop.f32.mrb[0].mxu0
        %v1921 = vpop.f32.mrb[0].mxu0
        %1922 = vdwg.mxu0
        %v1923 = vmul.f32 %v1918, 0.17677669
        %v1924 = vpack.c.bf16 %v1923, %v1923
        %v1926 = vsel %vm1222, %v1924, 0
        %1928 = vmatprep.subr.bf16.mxu0 0
        %1929 = vmatpush1.bf16.msra.mxu0 %v1139
        %1930 = vmatprep.subr.bf16.mxu0 0
        %1931 = vmatpush1.bf16.msra.mxu0 %v1140
        %1932 = vmatprep.subr.bf16.mxu0 0
        %1933 = vmatpush1.bf16.msra.mxu0 0
        %1934 = vmatprep.subr.bf16.mxu0 0
        %1935 = vmatpush1.bf16.msra.mxu0 0
        %1936 = vmatprep.subr.bf16.mxu0 0
        %1937 = vmatpush1.bf16.msra.mxu0 0
        %1938 = vmatprep.subr.bf16.mxu0 0
        %1939 = vmatpush1.bf16.msra.mxu0 0
        %1940 = vmatprep.subr.bf16.mxu0 0
        %1941 = vmatpush1.bf16.msra.mxu0 0
        %1942 = vmatprep.subr.bf16.mxu0 0
        %1943 = vmatpush1.bf16.msra.mxu0 0
        %1944 = vmatprep.subr.bf16.mxu0 0
        %1945 = vmatpush1.bf16.msra.mxu0 0
        %1946 = vmatprep.subr.bf16.mxu0 0
        %1947 = vmatpush1.bf16.msra.mxu0 0
        %1948 = vmatprep.subr.bf16.mxu0 0
        %1949 = vmatpush1.bf16.msra.mxu0 0
        %1950 = vmatprep.subr.bf16.mxu0 0
        %1951 = vmatpush1.bf16.msra.mxu0 0
        %1952 = vmatprep.subr.bf16.mxu0 0
        %1953 = vmatpush1.bf16.msra.mxu0 0
        %1954 = vmatprep.subr.bf16.mxu0 0
        %1955 = vmatpush1.bf16.msra.mxu0 0
        %1956 = vmatprep.subr.bf16.mxu0 0
        %1957 = vmatpush1.bf16.msra.mxu0 0
        %1958 = vmatprep.subr.bf16.mxu0 0
        %1959 = vmatpush1.bf16.msra.mxu0 0
        %1960 = vmatprep.mubr.bf16.mxu0 0
        %1961 = vmatmul.mubr.bf16.gmra.mrb[0].mxu0 %v1926
        %v1962 = vpop.f32.mrb[0].mxu0
        %v1963 = vadd.f32 %v1155, %v1962
        %v1964 = vpop.f32.mrb[0].mxu0
        %v1965 = vpop.f32.mrb[0].mxu0
        %v1966 = vpop.f32.mrb[0].mxu0
        %1967 = vdwg.mxu0
        %v1968 = vsel %vm1266, %v1963, -inf
        %1969 = vmax.xlane.f32.xlu0 %v1968
        %v1970 = vpop.xlane.xlu0 %1969
        %v1971 = vsub.f32 %v1963, %v1970
        %v1972 = vmul.f32 %v1971, 1.442695
        %v1973 = vpow.pop %v1972
        %v1974 = vsel %vm1266, %v1973, 0.0
        %1975 = vadd.xlane.f32.xlu0 %v1974
        %v1976 = vpop.xlane.xlu0 %1975
        %v1977 = vrcp.pop %v1976
        %v1978 = vmul.f32 %v1973, %v1977
        %s1979 = scalar_lea.vmem %s639, 24 [#allocation21]
        %1980 = vst.msk [vmem:[%s1979] sm:$0xff] %vm1266, %v1978
        %v1981 = vpack.c.bf16 %v1978, %v1978
        %v1983 = vsel %vm1266, %v1981, 0
        %v1986 = vsel %vm1266, %v1147, 0
        %v1989 = vsel %vm1266, %v1148, 0
        %1991 = vmatprep.subr.bf16.mxu0 0
        %1992 = vmatpush1.bf16.xpose.msra.mxu0 %v1986
        %1993 = vmatprep.subr.bf16.mxu0 0
        %1994 = vmatpush1.bf16.xpose.msra.mxu0 %v1989
        %1995 = vmatprep.subr.bf16.mxu0 0
        %1996 = vmatpush1.bf16.xpose.msra.mxu0 0
        %1997 = vmatprep.subr.bf16.mxu0 0
        %1998 = vmatpush1.bf16.xpose.msra.mxu0 0
        %1999 = vmatprep.subr.bf16.mxu0 0
        %2000 = vmatpush1.bf16.xpose.msra.mxu0 0
        %2001 = vmatprep.subr.bf16.mxu0 0
        %2002 = vmatpush1.bf16.xpose.msra.mxu0 0
        %2003 = vmatprep.subr.bf16.mxu0 0
        %2004 = vmatpush1.bf16.xpose.msra.mxu0 0
        %2005 = vmatprep.subr.bf16.mxu0 0
        %2006 = vmatpush1.bf16.xpose.msra.mxu0 0
        %2007 = vmatprep.subr.bf16.mxu0 0
        %2008 = vmatpush1.bf16.xpose.msra.mxu0 0
        %2009 = vmatprep.subr.bf16.mxu0 0
        %2010 = vmatpush1.bf16.xpose.msra.mxu0 0
        %2011 = vmatprep.subr.bf16.mxu0 0
        %2012 = vmatpush1.bf16.xpose.msra.mxu0 0
        %2013 = vmatprep.subr.bf16.mxu0 0
        %2014 = vmatpush1.bf16.xpose.msra.mxu0 0
        %2015 = vmatprep.subr.bf16.mxu0 0
        %2016 = vmatpush1.bf16.xpose.msra.mxu0 0
        %2017 = vmatprep.subr.bf16.mxu0 0
        %2018 = vmatpush1.bf16.xpose.msra.mxu0 0
        %2019 = vmatprep.subr.bf16.mxu0 0
        %2020 = vmatpush1.bf16.xpose.msra.mxu0 0
        %2021 = vmatprep.subr.bf16.mxu0 0
        %2022 = vmatpush1.bf16.xpose.msra.mxu0 0
        %2023 = vmatprep.mubr.bf16.mxu0 0
        %2024 = vmatmul.mubr.bf16.gmra.mrb[0].mxu0 %v1983
        %v2025 = vpop.f32.mrb[0].mxu0
        %v2026 = vadd.f32 0.0, %v2025
        %v2027 = vpop.f32.mrb[0].mxu0
        %v2028 = vpop.f32.mrb[0].mxu0
        %v2029 = vpop.f32.mrb[0].mxu0
        %2030 = vdwg.mxu0
        %v2031 = vpack.c.bf16 %v2026, %v2026
        %s2032 = scalar_lea.vmem [#allocation14], 48
        %v2033 = vld [vmem:[%s2032] sm:$0xf]
        %v2034 = vld [vmem:[%s2032 + $0x4] sm:$0xf]
        %v2035 = vld [vmem:[%s2032 + $0x8] sm:$0xf]
        %v2036 = vld [vmem:[%s2032 + $0xc] sm:$0xf]
        %v2041 = vunpack.c.l.b16 %v2033
        %v2042 = vunpack.c.l.b16 %v2034
        %v2043 = vunpack.c.l.b16 %v2035
        %v2044 = vunpack.c.l.b16 %v2036
        %v2045 = vpack.c.b16 %v2042, %v2041
        %v2046 = vpack.c.b16 %v2044, %v2043
        %v2050 = vsel %vm1222, %v2031, 0
        %2052 = vmatprep.subr.bf16.mxu0 0
        %2053 = vmatpush1.bf16.msra.mxu0 %v2045
        %2054 = vmatprep.subr.bf16.mxu0 0
        %2055 = vmatpush1.bf16.msra.mxu0 %v2046
        %2056 = vmatprep.subr.bf16.mxu0 0
        %2057 = vmatpush1.bf16.msra.mxu0 0
        %2058 = vmatprep.subr.bf16.mxu0 0
        %2059 = vmatpush1.bf16.msra.mxu0 0
        %2060 = vmatprep.subr.bf16.mxu0 0
        %2061 = vmatpush1.bf16.msra.mxu0 0
        %2062 = vmatprep.subr.bf16.mxu0 0
        %2063 = vmatpush1.bf16.msra.mxu0 0
        %2064 = vmatprep.subr.bf16.mxu0 0
        %2065 = vmatpush1.bf16.msra.mxu0 0
        %2066 = vmatprep.subr.bf16.mxu0 0
        %2067 = vmatpush1.bf16.msra.mxu0 0
        %2068 = vmatprep.subr.bf16.mxu0 0
        %2069 = vmatpush1.bf16.msra.mxu0 0
        %2070 = vmatprep.subr.bf16.mxu0 0
        %2071 = vmatpush1.bf16.msra.mxu0 0
        %2072 = vmatprep.subr.bf16.mxu0 0
        %2073 = vmatpush1.bf16.msra.mxu0 0
        %2074 = vmatprep.subr.bf16.mxu0 0
        %2075 = vmatpush1.bf16.msra.mxu0 0
        %2076 = vmatprep.subr.bf16.mxu0 0
        %2077 = vmatpush1.bf16.msra.mxu0 0
        %2078 = vmatprep.subr.bf16.mxu0 0
        %2079 = vmatpush1.bf16.msra.mxu0 0
        %2080 = vmatprep.subr.bf16.mxu0 0
        %2081 = vmatpush1.bf16.msra.mxu0 0
        %2082 = vmatprep.subr.bf16.mxu0 0
        %2083 = vmatpush1.bf16.msra.mxu0 0
        %2084 = vmatprep.mubr.bf16.mxu0 0
        %2085 = vmatmul.mubr.bf16.gmra.mrb[0].mxu0 %v2050
        %v2086 = vpop.f32.mrb[0].mxu0
        %v2087 = vadd.f32 0.0, %v2086
        %v2088 = vpop.f32.mrb[0].mxu0
        %v2089 = vpop.f32.mrb[0].mxu0
        %v2090 = vpop.f32.mrb[0].mxu0
        %2091 = vdwg.mxu0
        %v2092 = vadd.f32 %v1857, %v2087
        %v2093 = vld [vmem:[#allocation16] sm:$0x1]
        %v2095 = vlaneseq
        %v2096 = vshrl.u32 %v2095, 7
        %v2097 = vsub.s32 0, %v2096
        %v2098 = vrot.slane %v2093, %v2097
        %v2100 = vadd.f32 %v2092, %v2098
        %v2101 = vadd.f32 %v2100, %v641
        %2102 = vadd.xlane.f32.xlu0 %v2101
        %v2103 = vpop.xlane.xlu0 %2102
        %v2104 = vrcp.pop 128.0
        %v2105 = vmul.f32 %v2103, %v2104
        %v2106 = vsub.f32 %v2101, %v2105
        %v2107 = vmul.f32 %v2106, %v2106
        %2108 = vadd.xlane.f32.xlu0 %v2107
        %v2109 = vpop.xlane.xlu0 %2108
        %v2110 = vmul.f32 %v2109, %v2104
        %v2111 = vadd.f32 %v2110, 1e-05
        %v2112 = vrsqrt.pop %v2111
        %v2113 = vmul.f32 %v2106, %v2112
        %v2114 = vld [vmem:[#allocation17] sm:$0x1]
        %v2116 = vlaneseq
        %v2117 = vshrl.u32 %v2116, 7
        %v2118 = vsub.s32 0, %v2117
        %v2119 = vrot.slane %v2114, %v2118
        %v2121 = vmul.f32 %v2113, %v2119
        %v2122 = vld [vmem:[#allocation19] sm:$0x1]
        %v2124 = vlaneseq
        %v2125 = vshrl.u32 %v2124, 7
        %v2126 = vsub.s32 0, %v2125
        %v2127 = vrot.slane %v2122, %v2126
        %v2129 = vadd.f32 %v2121, %v2127
        %2130 = vst [vmem:[%s632] sm:$0xff] %v2129
        %s2131 = sand.u32 %s310, 1
        %s2132 = scalar_lea.sflag [#allocation4], %s2131
        %s2133 = sand.u32 %s310, 1
        %s2134 = smul.addr %s2133, 8
        %s2135 = scalar_lea.vmem [#allocation20], %s2134
        %s2136 = sand.u32 %s338, 1
        %s2137 = scalar_lea.sflag [#allocation22], %s2136
        %s2138 = sand.u32 %s338, 1
        %s2139 = smul.addr %s2138, 32
        %s2140 = scalar_lea.vmem [#allocation21], %s2139
        // Predicated region
        $region109: #{tpu_custom_call.1} parent=63 // pred_check
          %p2141 = pneg %p320
        $region110: #{tpu_custom_call.1} parent=63 // pred_check_branch
          %2143 = sbr.rel (%p2141) target = $region112
        $region111: #{tpu_custom_call.1} parent=63 // pred_region
          %s2145 = ssub.s32 128, 128
          %2146 = vsyncadd %s2132, %s2145
          %s2147 = sadd.s32 %s45, %s44
          %s2148 = smul.addr %s2147, 128
          %s2149 = scalar_lea.hbm %s11, %s2148
          %s2151 = sshll.u32 %s2135, 4
          %s2152 = int_to_ptr.vmem [resolvable:$true] %s2151
          %2154 = dma.vmem_to_hbm [thread:$0]  %s2152, 128, %s2149, %s2132
        $region112: #{tpu_custom_call.1} parent=63 // pred_fallthru
          _
        // Predicated region
        $region113: #{tpu_custom_call.1} parent=63 // pred_check
          %p2155 = pneg %p348
        $region114: #{tpu_custom_call.1} parent=63 // pred_check_branch
          %2157 = sbr.rel (%p2155) target = $region116
        $region115: #{tpu_custom_call.1} parent=63 // pred_region
          %s2159 = ssub.s32 512, 512
          %2160 = vsyncadd %s2137, %s2159
          %s2161 = smul.addr %s44, 4
          %s2162 = sadd.s32 %s45, %s2161
          %s2163 = smul.addr %s2162, 128
          %s2164 = scalar_lea.hbm %s12, %s2163
          %s2165 = sshll.u32 %s2140, 4
          %s2166 = int_to_ptr.vmem [resolvable:$true] %s2165
          %2171 = dma.vmem_to_hbm [thread:$0]  %s2166, 512, %s2164, %s2137, 128, 128, 8
        $region116: #{tpu_custom_call.1} parent=63 // pred_fallthru
          _
      $region64: #{tpu_custom_call.1} parent=5 // pred_fallthru
        _
      %p2172 = scmp.le.s32.totalorder 2, %s35
      // Predicated region
      $region117: #{tpu_custom_call.1} parent=5 // pred_check
        %p2173 = pneg %p2172
      $region118: #{tpu_custom_call.1} parent=5 // pred_check_branch
        %2175 = sbr.rel (%p2173) target = $region120
      $region119: #{tpu_custom_call.1} parent=5 // pred_region
        %s2176 = ssub.s32 %s35, 2
        // Predicated region
        $region121: #{tpu_custom_call.1} parent=119 // pred_check
          %p2177 = pneg %p326
        $region122: #{tpu_custom_call.1} parent=119 // pred_check_branch
          %2179 = sbr.rel (%p2177) target = $region124
        $region123: #{tpu_custom_call.1} parent=119 // pred_region
          %s2180 = sand.u32 %s311, 1
          %s2181 = scalar_lea.sflag [#allocation4], %s2180
          %s2182 = sand.u32 %s311, 1
          %s2183 = smul.addr %s2182, 8
          %s2184 = scalar_lea.vmem [#allocation20], %s2183
          %2185 = dma.done %s2181, 128
        $region124: #{tpu_custom_call.1} parent=119 // pred_fallthru
          _
        // Predicated region
        $region125: #{tpu_custom_call.1} parent=119 // pred_check
          %p2186 = pneg %p354
        $region126: #{tpu_custom_call.1} parent=119 // pred_check_branch
          %2188 = sbr.rel (%p2186) target = $region128
        $region127: #{tpu_custom_call.1} parent=119 // pred_region
          %s2189 = sand.u32 %s339, 1
          %s2190 = scalar_lea.sflag [#allocation22], %s2189
          %s2191 = sand.u32 %s339, 1
          %s2192 = smul.addr %s2191, 32
          %s2193 = scalar_lea.vmem [#allocation21], %s2192
          %2194 = dma.done %s2190, 512
        $region128: #{tpu_custom_call.1} parent=119 // pred_fallthru
          _
      $region120: #{tpu_custom_call.1} parent=5 // pred_fallthru
        _
    $region6: #{tpu_custom_call.1} parent=1 // loop_footer
      %s39 = sadd.s32 1, %s35
    $region7: #{tpu_custom_call.1} parent=1 // loop_footer_branch
      %34 = sbr.rel target = $region3
    $region8: #{tpu_custom_call.1} parent=1 // loop_exit
      _
    %2195 = vsyncpa [#allocation3], 1
    %s2196 = scalar_lea.sflag [#allocation3], 1
    %2197 = vsyncpa %s2196, 1
    %2198 = vsyncpa [#allocation6], 1
    %s2199 = scalar_lea.sflag [#allocation6], 1
    %2200 = vsyncpa %s2199, 1
    %2201 = vsyncpa [#allocation9], 1
    %2202 = vsyncpa [#allocation12], 1
    %2203 = vsyncpa [#allocation15], 1
    %2204 = vsyncpa [#allocation18], 1
    %2205 = vsyncpa [#allocation4], 1
    %s2206 = scalar_lea.sflag [#allocation4], 1
    %2207 = vsyncpa %s2206, 1
    %2208 = vsyncpa [#allocation22], 1
    %s2209 = scalar_lea.sflag [#allocation22], 1
    %2210 = vsyncpa %s2209, 1

</llo_original>
